<compile_context>
chip_gen: v6e
topology: v6e:2x2x1
jax: 0.10.0
libtpu: 0.0.40
codegen_flags: <defaults>
</compile_context>

<pallas_src>
import jax
import jax.numpy as jnp
from jax import lax
from jax.experimental import pallas as pl
from jax.experimental.pallas import tpu as pltpu


def _res_blocks_kernel(x_ref, w1_ref, b1_ref, w2_ref, b2_ref, out_ref,
                       act_ref, mid_ref):
    """Fused Res_blocks body. grid = (batch, layer).

    x_ref   : (1, H, W, C)        f32 input tile (one batch element, unpadded)
    w1_ref  : (1, 9C, C)          bf16 conv1 weights of the current layer
    b1_ref  : (1, 1, C)           f32  conv1 bias
    w2_ref  : (1, 9C, C)          bf16 conv2 weights
    b2_ref  : (1, 1, C)           f32  conv2 bias
    out_ref : (1, H, W, C)        f32 output tile
    act_ref : VMEM (H+2, W+2, C)  f32 padded resident activation
    mid_ref : VMEM (H+2, W+2, C)  f32 padded relu(conv1(.)) intermediate
    """
    l = pl.program_id(1)
    H, W, C = out_ref.shape[1], out_ref.shape[2], out_ref.shape[3]

    # Per batch element: (re)initialize the resident padded activation.
    # Done at l == 0 (not at a single global grid step) so it remains correct
    # if the parallel batch axis is split across TensorCores.
    @pl.when(l == 0)
    def _():
        act_ref[...] = jnp.zeros_like(act_ref)
        mid_ref[...] = jnp.zeros_like(mid_ref)
        act_ref[1:H + 1, 1:W + 1, :] = x_ref[0]

    def im2col(src_ref):
        """(H*W, 9C) bf16 patch matrix from a padded (H+2, W+2, C) ref."""
        cols = []
        for dy in range(3):
            for dx in range(3):
                cols.append(
                    src_ref[dy:dy + H, dx:dx + W, :]
                    .reshape(H * W, C).astype(jnp.bfloat16))
        return jnp.concatenate(cols, axis=-1)

    # ---- conv1 + bias + relu: one K = 9C MXU matmul ----------------------
    h = jnp.dot(im2col(act_ref), w1_ref[0], preferred_element_type=jnp.float32)
    h = jnp.maximum(h + b1_ref[0, 0], 0.0)
    mid_ref[1:H + 1, 1:W + 1, :] = h.reshape(H, W, C)   # border stays zero

    # ---- conv2 + bias + residual add -------------------------------------
    y = jnp.dot(im2col(mid_ref), w2_ref[0], preferred_element_type=jnp.float32)
    y = y + b2_ref[0, 0]
    resid = act_ref[1:H + 1, 1:W + 1, :].reshape(H * W, C)
    new_act = (y + resid).reshape(H, W, C)
    act_ref[1:H + 1, 1:W + 1, :] = new_act

    # Last layer: emit the result (output block flushes to HBM once per n).
    @pl.when(l == pl.num_programs(1) - 1)
    def _():
        out_ref[0] = new_act.astype(out_ref.dtype)


def res_blocks_forward(x_nchw, params):
    """Res_blocks forward. x_nchw: (N, C, H, W); params: list of (w1,b1,w2,b2)."""
    x = jnp.transpose(x_nchw, (0, 2, 3, 1)).astype(jnp.float32)  # NCHW -> NHWC
    N, H, W, C = x.shape
    L = len(params)

    # (Cout, Cin, kh, kw) -> (kh, kw, Cin, Cout) -> (9*Cin, Cout); tap-major
    # order matches the im2col concat order (dy outer, dx inner).
    def pack_w(w):
        return jnp.transpose(w, (2, 3, 1, 0)).reshape(9 * C, C)

    w1_all = jnp.stack([pack_w(w1) for (w1, _, _, _) in params]).astype(jnp.bfloat16)
    w2_all = jnp.stack([pack_w(w2) for (_, _, w2, _) in params]).astype(jnp.bfloat16)
    b1_all = jnp.stack([b1 for (_, b1, _, _) in params]).reshape(L, 1, C).astype(jnp.float32)
    b2_all = jnp.stack([b2 for (_, _, _, b2) in params]).reshape(L, 1, C).astype(jnp.float32)

    out = pl.pallas_call(
        _res_blocks_kernel,
        out_shape=jax.ShapeDtypeStruct((N, H, W, C), jnp.float32),
        grid_spec=pltpu.PrefetchScalarGridSpec(
            num_scalar_prefetch=0,
            grid=(N, L),
            in_specs=[
                pl.BlockSpec((1, H, W, C), lambda n, l: (n, 0, 0, 0)),
                pl.BlockSpec((1, 9 * C, C), lambda n, l: (l, 0, 0)),
                pl.BlockSpec((1, 1, C), lambda n, l: (l, 0, 0)),
                pl.BlockSpec((1, 9 * C, C), lambda n, l: (l, 0, 0)),
                pl.BlockSpec((1, 1, C), lambda n, l: (l, 0, 0)),
            ],
            out_specs=pl.BlockSpec((1, H, W, C), lambda n, l: (n, 0, 0, 0)),
            scratch_shapes=[
                pltpu.VMEM((H + 2, W + 2, C), jnp.float32),
                pltpu.VMEM((H + 2, W + 2, C), jnp.float32),
            ],
        ),
        compiler_params=pltpu.CompilerParams(
            dimension_semantics=("parallel", "arbitrary")),
    )(x, w1_all, b1_all, w2_all, b2_all)

    return jnp.transpose(out, (0, 3, 1, 2))  # NHWC -> NCHW


def init_res_blocks_params(key, nFeat, nReslayer):
    params = []
    for _ in range(nReslayer):
        k1, k2, k3, k4, key = jax.random.split(key, 5)
        scale = 1.0 / jnp.sqrt(nFeat * 9.0)
        w1 = jax.random.normal(k1, (nFeat, nFeat, 3, 3), jnp.float32) * scale
        b1 = jax.random.normal(k2, (nFeat,), jnp.float32) * 0.1
        w2 = jax.random.normal(k3, (nFeat, nFeat, 3, 3), jnp.float32) * scale
        b2 = jax.random.normal(k4, (nFeat,), jnp.float32) * 0.1
        params.append((w1, b1, w2, b2))
    return params


def _reference_forward(x_nchw, params):
    """Pure-JAX f32 reference (NCHW, same as PyTorch)."""
    dn = lax.conv_dimension_numbers(x_nchw.shape, params[0][0].shape,
                                    ("NCHW", "OIHW", "NCHW"))
    out = x_nchw
    for (w1, b1, w2, b2) in params:
        h = lax.conv_general_dilated(out, w1, (1, 1), [(1, 1), (1, 1)],
                                     dimension_numbers=dn)
        h = jax.nn.relu(h + b1[None, :, None, None])
        h2 = lax.conv_general_dilated(h, w2, (1, 1), [(1, 1), (1, 1)],
                                      dimension_numbers=dn)
        out = h2 + b2[None, :, None, None] + out
    return out


if __name__ == "__main__":
    nFeat = 32
    nReslayer = 2
    N, H, W = 2, 16, 16

    key = jax.random.PRNGKey(0)
    kx, kp = jax.random.split(key)
    x = jax.random.normal(kx, (N, nFeat, H, W), jnp.float32)
    params = init_res_blocks_params(kp, nFeat, nReslayer)

    out = jax.block_until_ready(res_blocks_forward(x, params))

    ref = _reference_forward(x, params)
    assert out.shape == ref.shape == (N, nFeat, H, W)
    # bf16 MXU feeds -> compare against the f32 reference with loosened tol.
    assert jnp.allclose(out, ref, rtol=5e-2, atol=5e-2), (
        float(jnp.max(jnp.abs(out - ref))))

    print("KERNEL_OK")
</pallas_src>

<mosaic_0001>
module attributes {stable_mosaic.version = 11 : i64} {
  func.func @_res_blocks_kernel(%arg0: i32, %arg1: i32, %arg2: memref<1x16x16x32xf32, #tpu.memory_space<vmem>>, %arg3: memref<1x288x32xbf16, #tpu.memory_space<vmem>>, %arg4: memref<1x1x32xf32, #tpu.memory_space<vmem>>, %arg5: memref<1x288x32xbf16, #tpu.memory_space<vmem>>, %arg6: memref<1x1x32xf32, #tpu.memory_space<vmem>>, %arg7: memref<1x16x16x32xf32, #tpu.memory_space<vmem>>, %arg8: memref<18x18x32xf32, #tpu.memory_space<vmem>>, %arg9: memref<18x18x32xf32, #tpu.memory_space<vmem>>) attributes {dimension_semantics = [#tpu.dimension_semantics<parallel>, #tpu.dimension_semantics<arbitrary>], iteration_bounds = array<i64: 2, 2>, scalar_prefetch = 0 : i64, scratch_operands = 2 : i64, tpu.core_type = #tpu.core_type<tc>, window_params = [{transform_indices = @transform_0, window_bounds = array<i64: 1, 16, 16, 32>}, {transform_indices = @transform_1, window_bounds = array<i64: 1, 288, 32>}, {transform_indices = @transform_2, window_bounds = array<i64: 1, 1, 32>}, {transform_indices = @transform_3, window_bounds = array<i64: 1, 288, 32>}, {transform_indices = @transform_4, window_bounds = array<i64: 1, 1, 32>}, {transform_indices = @transform_5, window_bounds = array<i64: 1, 16, 16, 32>}]} {
    %c0_i32 = arith.constant 0 : i32
    %0 = arith.cmpi eq, %arg1, %c0_i32 : i32
    %1 = arith.extui %0 : i1 to i32
    %c0_i32_0 = arith.constant 0 : i32
    %2 = arith.cmpi ne, %1, %c0_i32_0 : i32
    scf.if %2 {
      %cst_76 = arith.constant 0.000000e+00 : f32
      %87 = vector.broadcast %cst_76 : f32 to vector<18x18x32xf32>
      %c0_77 = arith.constant 0 : index
      %c0_78 = arith.constant 0 : index
      %c0_79 = arith.constant 0 : index
      %88 = vector.load %arg8[%c0_77, %c0_78, %c0_79] : memref<18x18x32xf32, #tpu.memory_space<vmem>>, vector<18x18x32xf32>
      tpu.vector_store %arg8[%c0_77, %c0_78, %c0_79], %87 {strides = array<i32>} : memref<18x18x32xf32, #tpu.memory_space<vmem>>, vector<18x18x32xf32>,
      %cst_80 = arith.constant 0.000000e+00 : f32
      %89 = vector.broadcast %cst_80 : f32 to vector<18x18x32xf32>
      %c0_81 = arith.constant 0 : index
      %c0_82 = arith.constant 0 : index
      %c0_83 = arith.constant 0 : index
      %90 = vector.load %arg9[%c0_81, %c0_82, %c0_83] : memref<18x18x32xf32, #tpu.memory_space<vmem>>, vector<18x18x32xf32>
      tpu.vector_store %arg9[%c0_81, %c0_82, %c0_83], %89 {strides = array<i32>} : memref<18x18x32xf32, #tpu.memory_space<vmem>>, vector<18x18x32xf32>,
      %c0_84 = arith.constant 0 : index
      %c0_85 = arith.constant 0 : index
      %c0_86 = arith.constant 0 : index
      %c0_87 = arith.constant 0 : index
      %91 = vector.load %arg2[%c0_84, %c0_85, %c0_86, %c0_87] : memref<1x16x16x32xf32, #tpu.memory_space<vmem>>, vector<1x16x16x32xf32>
      %92 = vector.shape_cast %91 : vector<1x16x16x32xf32> to vector<16x16x32xf32>
      %c1_88 = arith.constant 1 : index
      %c1_89 = arith.constant 1 : index
      %c0_90 = arith.constant 0 : index
      %93 = vector.load %arg8[%c1_88, %c1_89, %c0_90] : memref<18x18x32xf32, #tpu.memory_space<vmem>>, vector<16x16x32xf32>
      tpu.vector_store %arg8[%c1_88, %c1_89, %c0_90], %92 {strides = array<i32>} : memref<18x18x32xf32, #tpu.memory_space<vmem>>, vector<16x16x32xf32>,
    } else {
    }
    %c0 = arith.constant 0 : index
    %c0_1 = arith.constant 0 : index
    %c0_2 = arith.constant 0 : index
    %3 = vector.load %arg8[%c0, %c0_1, %c0_2] : memref<18x18x32xf32, #tpu.memory_space<vmem>>, vector<16x16x32xf32>
    %4 = vector.shape_cast %3 : vector<16x16x32xf32> to vector<256x32xf32>
    %5 = arith.truncf %4 : vector<256x32xf32> to vector<256x32xbf16>
    %c0_3 = arith.constant 0 : index
    %c1 = arith.constant 1 : index
    %c0_4 = arith.constant 0 : index
    %6 = vector.load %arg8[%c0_3, %c1, %c0_4] : memref<18x18x32xf32, #tpu.memory_space<vmem>>, vector<16x16x32xf32>
    %7 = vector.shape_cast %6 : vector<16x16x32xf32> to vector<256x32xf32>
    %8 = arith.truncf %7 : vector<256x32xf32> to vector<256x32xbf16>
    %c0_5 = arith.constant 0 : index
    %c2 = arith.constant 2 : index
    %c0_6 = arith.constant 0 : index
    %9 = vector.load %arg8[%c0_5, %c2, %c0_6] : memref<18x18x32xf32, #tpu.memory_space<vmem>>, vector<16x16x32xf32>
    %10 = vector.shape_cast %9 : vector<16x16x32xf32> to vector<256x32xf32>
    %11 = arith.truncf %10 : vector<256x32xf32> to vector<256x32xbf16>
    %c1_7 = arith.constant 1 : index
    %c0_8 = arith.constant 0 : index
    %c0_9 = arith.constant 0 : index
    %12 = vector.load %arg8[%c1_7, %c0_8, %c0_9] : memref<18x18x32xf32, #tpu.memory_space<vmem>>, vector<16x16x32xf32>
    %13 = vector.shape_cast %12 : vector<16x16x32xf32> to vector<256x32xf32>
    %14 = arith.truncf %13 : vector<256x32xf32> to vector<256x32xbf16>
    %c1_10 = arith.constant 1 : index
    %c1_11 = arith.constant 1 : index
    %c0_12 = arith.constant 0 : index
    %15 = vector.load %arg8[%c1_10, %c1_11, %c0_12] : memref<18x18x32xf32, #tpu.memory_space<vmem>>, vector<16x16x32xf32>
    %16 = vector.shape_cast %15 : vector<16x16x32xf32> to vector<256x32xf32>
    %17 = arith.truncf %16 : vector<256x32xf32> to vector<256x32xbf16>
    %c1_13 = arith.constant 1 : index
    %c2_14 = arith.constant 2 : index
    %c0_15 = arith.constant 0 : index
    %18 = vector.load %arg8[%c1_13, %c2_14, %c0_15] : memref<18x18x32xf32, #tpu.memory_space<vmem>>, vector<16x16x32xf32>
    %19 = vector.shape_cast %18 : vector<16x16x32xf32> to vector<256x32xf32>
    %20 = arith.truncf %19 : vector<256x32xf32> to vector<256x32xbf16>
    %c2_16 = arith.constant 2 : index
    %c0_17 = arith.constant 0 : index
    %c0_18 = arith.constant 0 : index
    %21 = vector.load %arg8[%c2_16, %c0_17, %c0_18] : memref<18x18x32xf32, #tpu.memory_space<vmem>>, vector<16x16x32xf32>
    %22 = vector.shape_cast %21 : vector<16x16x32xf32> to vector<256x32xf32>
    %23 = arith.truncf %22 : vector<256x32xf32> to vector<256x32xbf16>
    %c2_19 = arith.constant 2 : index
    %c1_20 = arith.constant 1 : index
    %c0_21 = arith.constant 0 : index
    %24 = vector.load %arg8[%c2_19, %c1_20, %c0_21] : memref<18x18x32xf32, #tpu.memory_space<vmem>>, vector<16x16x32xf32>
    %25 = vector.shape_cast %24 : vector<16x16x32xf32> to vector<256x32xf32>
    %26 = arith.truncf %25 : vector<256x32xf32> to vector<256x32xbf16>
    %c2_22 = arith.constant 2 : index
    %c2_23 = arith.constant 2 : index
    %c0_24 = arith.constant 0 : index
    %27 = vector.load %arg8[%c2_22, %c2_23, %c0_24] : memref<18x18x32xf32, #tpu.memory_space<vmem>>, vector<16x16x32xf32>
    %28 = vector.shape_cast %27 : vector<16x16x32xf32> to vector<256x32xf32>
    %29 = arith.truncf %28 : vector<256x32xf32> to vector<256x32xbf16>
    %30 = tpu.concatenate %5, %8, %11, %14, %17, %20, %23, %26, %29 in 1 : vector<256x32xbf16>, vector<256x32xbf16>, vector<256x32xbf16>, vector<256x32xbf16>, vector<256x32xbf16>, vector<256x32xbf16>, vector<256x32xbf16>, vector<256x32xbf16>, vector<256x32xbf16> -> vector<256x288xbf16>
    %c0_25 = arith.constant 0 : index
    %c0_26 = arith.constant 0 : index
    %c0_27 = arith.constant 0 : index
    %31 = vector.load %arg3[%c0_25, %c0_26, %c0_27] : memref<1x288x32xbf16, #tpu.memory_space<vmem>>, vector<1x288x32xbf16>
    %32 = vector.shape_cast %31 : vector<1x288x32xbf16> to vector<288x32xbf16>
    %cst = arith.constant dense<0.000000e+00> : vector<256x32xf32>
    %33 = tpu.matmul %30, %32, %cst {dimension_numbers = #tpu.dot_dimension_numbers<[1], [0], [0], [1], [0, 0, 1, 1], [], []>} : vector<256x288xbf16>, vector<288x32xbf16>, vector<256x32xf32> -> vector<256x32xf32>
    %c0_28 = arith.constant 0 : index
    %c0_29 = arith.constant 0 : index
    %c0_30 = arith.constant 0 : index
    %34 = vector.load %arg4[%c0_28, %c0_29, %c0_30] : memref<1x1x32xf32, #tpu.memory_space<vmem>>, vector<1x1x32xf32>
    %35 = vector.shape_cast %34 : vector<1x1x32xf32> to vector<32xf32>
    %36 = vector.shape_cast %35 : vector<32xf32> to vector<1x32xf32>
    %37 = vector.broadcast %36 : vector<1x32xf32> to vector<256x32xf32>
    %38 = arith.addf %33, %37 : vector<256x32xf32>
    %cst_31 = arith.constant 0.000000e+00 : f32
    %39 = vector.broadcast %cst_31 : f32 to vector<256x32xf32>
    %40 = arith.maximumf %38, %39 : vector<256x32xf32>
    %41 = vector.shape_cast %40 : vector<256x32xf32> to vector<16x16x32xf32>
    %c1_32 = arith.constant 1 : index
    %c1_33 = arith.constant 1 : index
    %c0_34 = arith.constant 0 : index
    %42 = vector.load %arg9[%c1_32, %c1_33, %c0_34] : memref<18x18x32xf32, #tpu.memory_space<vmem>>, vector<16x16x32xf32>
    tpu.vector_store %arg9[%c1_32, %c1_33, %c0_34], %41 {strides = array<i32>} : memref<18x18x32xf32, #tpu.memory_space<vmem>>, vector<16x16x32xf32>,
    %c0_35 = arith.constant 0 : index
    %c0_36 = arith.constant 0 : index
    %c0_37 = arith.constant 0 : index
    %43 = vector.load %arg9[%c0_35, %c0_36, %c0_37] : memref<18x18x32xf32, #tpu.memory_space<vmem>>, vector<16x16x32xf32>
    %44 = vector.shape_cast %43 : vector<16x16x32xf32> to vector<256x32xf32>
    %45 = arith.truncf %44 : vector<256x32xf32> to vector<256x32xbf16>
    %c0_38 = arith.constant 0 : index
    %c1_39 = arith.constant 1 : index
    %c0_40 = arith.constant 0 : index
    %46 = vector.load %arg9[%c0_38, %c1_39, %c0_40] : memref<18x18x32xf32, #tpu.memory_space<vmem>>, vector<16x16x32xf32>
    %47 = vector.shape_cast %46 : vector<16x16x32xf32> to vector<256x32xf32>
    %48 = arith.truncf %47 : vector<256x32xf32> to vector<256x32xbf16>
    %c0_41 = arith.constant 0 : index
    %c2_42 = arith.constant 2 : index
    %c0_43 = arith.constant 0 : index
    %49 = vector.load %arg9[%c0_41, %c2_42, %c0_43] : memref<18x18x32xf32, #tpu.memory_space<vmem>>, vector<16x16x32xf32>
    %50 = vector.shape_cast %49 : vector<16x16x32xf32> to vector<256x32xf32>
    %51 = arith.truncf %50 : vector<256x32xf32> to vector<256x32xbf16>
    %c1_44 = arith.constant 1 : index
    %c0_45 = arith.constant 0 : index
    %c0_46 = arith.constant 0 : index
    %52 = vector.load %arg9[%c1_44, %c0_45, %c0_46] : memref<18x18x32xf32, #tpu.memory_space<vmem>>, vector<16x16x32xf32>
    %53 = vector.shape_cast %52 : vector<16x16x32xf32> to vector<256x32xf32>
    %54 = arith.truncf %53 : vector<256x32xf32> to vector<256x32xbf16>
    %c1_47 = arith.constant 1 : index
    %c1_48 = arith.constant 1 : index
    %c0_49 = arith.constant 0 : index
    %55 = vector.load %arg9[%c1_47, %c1_48, %c0_49] : memref<18x18x32xf32, #tpu.memory_space<vmem>>, vector<16x16x32xf32>
    %56 = vector.shape_cast %55 : vector<16x16x32xf32> to vector<256x32xf32>
    %57 = arith.truncf %56 : vector<256x32xf32> to vector<256x32xbf16>
    %c1_50 = arith.constant 1 : index
    %c2_51 = arith.constant 2 : index
    %c0_52 = arith.constant 0 : index
    %58 = vector.load %arg9[%c1_50, %c2_51, %c0_52] : memref<18x18x32xf32, #tpu.memory_space<vmem>>, vector<16x16x32xf32>
    %59 = vector.shape_cast %58 : vector<16x16x32xf32> to vector<256x32xf32>
    %60 = arith.truncf %59 : vector<256x32xf32> to vector<256x32xbf16>
    %c2_53 = arith.constant 2 : index
    %c0_54 = arith.constant 0 : index
    %c0_55 = arith.constant 0 : index
    %61 = vector.load %arg9[%c2_53, %c0_54, %c0_55] : memref<18x18x32xf32, #tpu.memory_space<vmem>>, vector<16x16x32xf32>
    %62 = vector.shape_cast %61 : vector<16x16x32xf32> to vector<256x32xf32>
    %63 = arith.truncf %62 : vector<256x32xf32> to vector<256x32xbf16>
    %c2_56 = arith.constant 2 : index
    %c1_57 = arith.constant 1 : index
    %c0_58 = arith.constant 0 : index
    %64 = vector.load %arg9[%c2_56, %c1_57, %c0_58] : memref<18x18x32xf32, #tpu.memory_space<vmem>>, vector<16x16x32xf32>
    %65 = vector.shape_cast %64 : vector<16x16x32xf32> to vector<256x32xf32>
    %66 = arith.truncf %65 : vector<256x32xf32> to vector<256x32xbf16>
    %c2_59 = arith.constant 2 : index
    %c2_60 = arith.constant 2 : index
    %c0_61 = arith.constant 0 : index
    %67 = vector.load %arg9[%c2_59, %c2_60, %c0_61] : memref<18x18x32xf32, #tpu.memory_space<vmem>>, vector<16x16x32xf32>
    %68 = vector.shape_cast %67 : vector<16x16x32xf32> to vector<256x32xf32>
    %69 = arith.truncf %68 : vector<256x32xf32> to vector<256x32xbf16>
    %70 = tpu.concatenate %45, %48, %51, %54, %57, %60, %63, %66, %69 in 1 : vector<256x32xbf16>, vector<256x32xbf16>, vector<256x32xbf16>, vector<256x32xbf16>, vector<256x32xbf16>, vector<256x32xbf16>, vector<256x32xbf16>, vector<256x32xbf16>, vector<256x32xbf16> -> vector<256x288xbf16>
    %c0_62 = arith.constant 0 : index
    %c0_63 = arith.constant 0 : index
    %c0_64 = arith.constant 0 : index
    %71 = vector.load %arg5[%c0_62, %c0_63, %c0_64] : memref<1x288x32xbf16, #tpu.memory_space<vmem>>, vector<1x288x32xbf16>
    %72 = vector.shape_cast %71 : vector<1x288x32xbf16> to vector<288x32xbf16>
    %cst_65 = arith.constant dense<0.000000e+00> : vector<256x32xf32>
    %73 = tpu.matmul %70, %72, %cst_65 {dimension_numbers = #tpu.dot_dimension_numbers<[1], [0], [0], [1], [0, 0, 1, 1], [], []>} : vector<256x288xbf16>, vector<288x32xbf16>, vector<256x32xf32> -> vector<256x32xf32>
    %c0_66 = arith.constant 0 : index
    %c0_67 = arith.constant 0 : index
    %c0_68 = arith.constant 0 : index
    %74 = vector.load %arg6[%c0_66, %c0_67, %c0_68] : memref<1x1x32xf32, #tpu.memory_space<vmem>>, vector<1x1x32xf32>
    %75 = vector.shape_cast %74 : vector<1x1x32xf32> to vector<32xf32>
    %76 = vector.shape_cast %75 : vector<32xf32> to vector<1x32xf32>
    %77 = vector.broadcast %76 : vector<1x32xf32> to vector<256x32xf32>
    %78 = arith.addf %73, %77 : vector<256x32xf32>
    %c1_69 = arith.constant 1 : index
    %c1_70 = arith.constant 1 : index
    %c0_71 = arith.constant 0 : index
    %79 = vector.load %arg8[%c1_69, %c1_70, %c0_71] : memref<18x18x32xf32, #tpu.memory_space<vmem>>, vector<16x16x32xf32>
    %80 = vector.shape_cast %79 : vector<16x16x32xf32> to vector<256x32xf32>
    %81 = arith.addf %78, %80 : vector<256x32xf32>
    %82 = vector.shape_cast %81 : vector<256x32xf32> to vector<16x16x32xf32>
    %c1_72 = arith.constant 1 : index
    %c1_73 = arith.constant 1 : index
    %c0_74 = arith.constant 0 : index
    %83 = vector.load %arg8[%c1_72, %c1_73, %c0_74] : memref<18x18x32xf32, #tpu.memory_space<vmem>>, vector<16x16x32xf32>
    tpu.vector_store %arg8[%c1_72, %c1_73, %c0_74], %82 {strides = array<i32>} : memref<18x18x32xf32, #tpu.memory_space<vmem>>, vector<16x16x32xf32>,
    %c1_i32 = arith.constant 1 : i32
    %84 = arith.cmpi eq, %arg1, %c1_i32 : i32
    %85 = arith.extui %84 : i1 to i32
    %c0_i32_75 = arith.constant 0 : i32
    %86 = arith.cmpi ne, %85, %c0_i32_75 : i32
    scf.if %86 {
      %c0_76 = arith.constant 0 : index
      %c0_77 = arith.constant 0 : index
      %c0_78 = arith.constant 0 : index
      %c0_79 = arith.constant 0 : index
      %87 = vector.load %arg7[%c0_76, %c0_77, %c0_78, %c0_79] : memref<1x16x16x32xf32, #tpu.memory_space<vmem>>, vector<1x16x16x32xf32>
      %88 = vector.shape_cast %87 : vector<1x16x16x32xf32> to vector<16x16x32xf32>
      %89 = vector.shape_cast %82 : vector<16x16x32xf32> to vector<1x16x16x32xf32>
      tpu.vector_store %arg7[%c0_76, %c0_77, %c0_78, %c0_79], %89 {strides = array<i32>} : memref<1x16x16x32xf32, #tpu.memory_space<vmem>>, vector<1x16x16x32xf32>,
    } else {
    }
    return
  }
  func.func @transform_0(%arg0: i32, %arg1: i32) -> (i32, i32, i32, i32) {
    %c0_i32 = arith.constant 0 : i32
    %c0_i32_0 = arith.constant 0 : i32
    %c0_i32_1 = arith.constant 0 : i32
    %c0_i32_2 = arith.constant 0 : i32
    return %arg0, %c0_i32, %c0_i32_0, %c0_i32_1 : i32, i32, i32, i32
  }
  func.func @transform_1(%arg0: i32, %arg1: i32) -> (i32, i32, i32) {
    %c0_i32 = arith.constant 0 : i32
    %c0_i32_0 = arith.constant 0 : i32
    %c0_i32_1 = arith.constant 0 : i32
    return %arg1, %c0_i32, %c0_i32_0 : i32, i32, i32
  }
  func.func @transform_2(%arg0: i32, %arg1: i32) -> (i32, i32, i32) {
    %c0_i32 = arith.constant 0 : i32
    %c0_i32_0 = arith.constant 0 : i32
    %c0_i32_1 = arith.constant 0 : i32
    return %arg1, %c0_i32, %c0_i32_0 : i32, i32, i32
  }
  func.func @transform_3(%arg0: i32, %arg1: i32) -> (i32, i32, i32) {
    %c0_i32 = arith.constant 0 : i32
    %c0_i32_0 = arith.constant 0 : i32
    %c0_i32_1 = arith.constant 0 : i32
    return %arg1, %c0_i32, %c0_i32_0 : i32, i32, i32
  }
  func.func @transform_4(%arg0: i32, %arg1: i32) -> (i32, i32, i32) {
    %c0_i32 = arith.constant 0 : i32
    %c0_i32_0 = arith.constant 0 : i32
    %c0_i32_1 = arith.constant 0 : i32
    return %arg1, %c0_i32, %c0_i32_0 : i32, i32, i32
  }
  func.func @transform_5(%arg0: i32, %arg1: i32) -> (i32, i32, i32, i32) {
    %c0_i32 = arith.constant 0 : i32
    %c0_i32_0 = arith.constant 0 : i32
    %c0_i32_1 = arith.constant 0 : i32
    %c0_i32_2 = arith.constant 0 : i32
    return %arg0, %c0_i32, %c0_i32_0, %c0_i32_1 : i32, i32, i32, i32
  }
}

</mosaic_0001>

<llo_original>
// kernel: tpu_custom_call.1
$region0: #{tpu_custom_call.1}
  #allocation0 [shape = 'u32[]', space=smem, size = 0x4, offset = 0x4, fixed_abs, tag = 'smem constant byte address 0x4 - core index']
  #allocation1 [shape = 'u32[144,128]{1,0:T(1,128)}', space=vmem, size = 0x12000, scoped, tag = 'internal scratch']
  #allocation2 [shape = 'f32[18,18,32]{2,1,0:T(8,128)}', space=vmem, size = 0x36000, scoped, tag = 'scratch operand']
  #allocation3 [shape = 'f32[18,18,32]{2,1,0:T(8,128)}', space=vmem, size = 0x36000, scoped, tag = 'scratch operand']
  %s0 = inlined_call_operand.vmem [shape: f32[2,16,16,32], index: 0, kind: input, shape index: {}]
  %s1 = inlined_call_operand.vmem [shape: bf16[2,288,32], index: 1, kind: input, shape index: {}]
  %s2 = inlined_call_operand.vmem [shape: f32[2,1,32], index: 2, kind: input, shape index: {}]
  %s3 = inlined_call_operand.vmem [shape: bf16[2,288,32], index: 3, kind: input, shape index: {}]
  %s4 = inlined_call_operand.vmem [shape: f32[2,1,32], index: 4, kind: input, shape index: {}]
  %s5 = inlined_call_operand.hbm [shape: f32[2,16,16,32], index: 5, kind: output, shape index: {}]
  %s6 = sld [smem:[#allocation0]]
  $region61: #{tpu_custom_call.1} parent=0
    _
  %s8 = ssub.s32 1, %s6
  %s9 = scalar_select 0, %s8, %s6
  $region1: #{tpu_custom_call.1} parent=0
    #allocation4 [shape = 'u8[262144]{0}', space=vmem, size = 0x40000, scoped, tag = 'output window, operand 0']
    #allocation5 [shape = 's32[2]{0}', space=sflag, size = 0x8, scoped, tag = 'scoped memory for tpu_custom_call.1']
    %10 = vsyncpa [#allocation5], 0
    %s11 = scalar_lea.sflag [#allocation5], 1
    %12 = vsyncpa %s11, 0
    loop: start=0, step=1, limit=6
    $region2: #{tpu_custom_call.1} parent=1 // loop_pre_header
      _
    $region3: #{tpu_custom_call.1} parent=1 // loop_header
      %s14 = sphi 0, %s18
      %p15 = scmp.ge.s32.totalorder %s14, 6
      %s21 = sphi 0, %s33
      %s22 = sphi 0, %s29
      %s23 = sphi 0, %s21
      %s24 = sphi 0, %s22
      %s25 = sphi 0, %s23
      %s26 = sphi 0, %s24
      %s36 = sphi 0, %s38
      %s39 = sphi 0, %s36
      %s40 = sphi 0, %s39
      %s56 = sphi 0, %s40
      %s62 = sphi 0, %s64
      %s65 = sphi 0, %s62
      %s66 = sphi 0, %s65
      %s82 = sphi 0, %s66
      %s88 = sphi 0, %s90
      %s91 = sphi 0, %s88
      %s92 = sphi 0, %s91
      %s108 = sphi 0, %s92
      %s114 = sphi 0, %s116
      %s117 = sphi 0, %s114
      %s118 = sphi 0, %s117
      %s134 = sphi 0, %s118
      %s140 = sphi 0, %s142
      %s143 = sphi 0, %s140
      %s144 = sphi 0, %s143
      %s160 = sphi 0, %s144
      %s166 = sphi 0, %s168
      %s169 = sphi 0, %s166
      %s170 = sphi 0, %s169
      %s186 = sphi 0, %s170
    $region4: #{tpu_custom_call.1} parent=1 // loop_header_branch
      %17 = sbr.rel (%p15) target = $region8
    $region5: #{tpu_custom_call.1} parent=1 // loop_body
      %s19 = ssub.s32 %s14, 1
      %s20 = ssub.s32 %s14, 2
      %s27 = sadd.s32 1, %s22
      %p28 = scmp.ge.s32.totalorder %s27, 2
      %s29 = scalar_select %p28, 0, %s27
      %s30 = sadd.s32 1, %s21
      %s31 = scalar_select %p28, %s30, %s21
      %p32 = scmp.ge.s32.totalorder %s31, 2
      %s33 = scalar_select %p32, 0, %s31
      %s34 = ssub.s32 %s21, %s33
      %p35 = scmp.eq.s32.totalorder %s34, 0
      %s37 = sadd.s32 %s36, 1
      %s38 = scalar_select %p35, %s36, %s37
      %p41 = pneg %p35
      %p42 = scmp.eq.s32.totalorder %s14, 3
      %p43 = por %p41, %p42
      %p44 = scmp.ne.s32.totalorder %s36, %s39
      %p45 = scmp.eq.s32.totalorder %s14, 0
      %p46 = por %p44, %p45
      %p47 = scmp.ne.s32.totalorder %s36, %s39
      %p48 = scmp.eq.s32.totalorder %s19, 3
      %p49 = por %p47, %p48
      %p50 = scmp.ne.s32.totalorder %s39, %s40
      %p51 = scmp.eq.s32.totalorder %s19, 0
      %p52 = por %p50, %p51
      %p53 = scmp.ne.s32.totalorder %s39, %s40
      %p54 = scmp.eq.s32.totalorder %s20, 3
      %p55 = por %p53, %p54
      %p57 = scmp.ne.s32.totalorder %s40, %s56
      %p58 = scmp.eq.s32.totalorder %s20, 0
      %p59 = por %p57, %p58
      %s60 = ssub.s32 %s22, %s29
      %p61 = scmp.eq.s32.totalorder %s60, 0
      %s63 = sadd.s32 %s62, 1
      %s64 = scalar_select %p61, %s62, %s63
      %p67 = pneg %p61
      %p68 = scmp.eq.s32.totalorder %s14, 3
      %p69 = por %p67, %p68
      %p70 = scmp.ne.s32.totalorder %s62, %s65
      %p71 = scmp.eq.s32.totalorder %s14, 0
      %p72 = por %p70, %p71
      %p73 = scmp.ne.s32.totalorder %s62, %s65
      %p74 = scmp.eq.s32.totalorder %s19, 3
      %p75 = por %p73, %p74
      %p76 = scmp.ne.s32.totalorder %s65, %s66
      %p77 = scmp.eq.s32.totalorder %s19, 0
      %p78 = por %p76, %p77
      %p79 = scmp.ne.s32.totalorder %s65, %s66
      %p80 = scmp.eq.s32.totalorder %s20, 3
      %p81 = por %p79, %p80
      %p83 = scmp.ne.s32.totalorder %s66, %s82
      %p84 = scmp.eq.s32.totalorder %s20, 0
      %p85 = por %p83, %p84
      %s86 = ssub.s32 %s22, %s29
      %p87 = scmp.eq.s32.totalorder %s86, 0
      %s89 = sadd.s32 %s88, 1
      %s90 = scalar_select %p87, %s88, %s89
      %p93 = pneg %p87
      %p94 = scmp.eq.s32.totalorder %s14, 3
      %p95 = por %p93, %p94
      %p96 = scmp.ne.s32.totalorder %s88, %s91
      %p97 = scmp.eq.s32.totalorder %s14, 0
      %p98 = por %p96, %p97
      %p99 = scmp.ne.s32.totalorder %s88, %s91
      %p100 = scmp.eq.s32.totalorder %s19, 3
      %p101 = por %p99, %p100
      %p102 = scmp.ne.s32.totalorder %s91, %s92
      %p103 = scmp.eq.s32.totalorder %s19, 0
      %p104 = por %p102, %p103
      %p105 = scmp.ne.s32.totalorder %s91, %s92
      %p106 = scmp.eq.s32.totalorder %s20, 3
      %p107 = por %p105, %p106
      %p109 = scmp.ne.s32.totalorder %s92, %s108
      %p110 = scmp.eq.s32.totalorder %s20, 0
      %p111 = por %p109, %p110
      %s112 = ssub.s32 %s22, %s29
      %p113 = scmp.eq.s32.totalorder %s112, 0
      %s115 = sadd.s32 %s114, 1
      %s116 = scalar_select %p113, %s114, %s115
      %p119 = pneg %p113
      %p120 = scmp.eq.s32.totalorder %s14, 3
      %p121 = por %p119, %p120
      %p122 = scmp.ne.s32.totalorder %s114, %s117
      %p123 = scmp.eq.s32.totalorder %s14, 0
      %p124 = por %p122, %p123
      %p125 = scmp.ne.s32.totalorder %s114, %s117
      %p126 = scmp.eq.s32.totalorder %s19, 3
      %p127 = por %p125, %p126
      %p128 = scmp.ne.s32.totalorder %s117, %s118
      %p129 = scmp.eq.s32.totalorder %s19, 0
      %p130 = por %p128, %p129
      %p131 = scmp.ne.s32.totalorder %s117, %s118
      %p132 = scmp.eq.s32.totalorder %s20, 3
      %p133 = por %p131, %p132
      %p135 = scmp.ne.s32.totalorder %s118, %s134
      %p136 = scmp.eq.s32.totalorder %s20, 0
      %p137 = por %p135, %p136
      %s138 = ssub.s32 %s22, %s29
      %p139 = scmp.eq.s32.totalorder %s138, 0
      %s141 = sadd.s32 %s140, 1
      %s142 = scalar_select %p139, %s140, %s141
      %p145 = pneg %p139
      %p146 = scmp.eq.s32.totalorder %s14, 3
      %p147 = por %p145, %p146
      %p148 = scmp.ne.s32.totalorder %s140, %s143
      %p149 = scmp.eq.s32.totalorder %s14, 0
      %p150 = por %p148, %p149
      %p151 = scmp.ne.s32.totalorder %s140, %s143
      %p152 = scmp.eq.s32.totalorder %s19, 3
      %p153 = por %p151, %p152
      %p154 = scmp.ne.s32.totalorder %s143, %s144
      %p155 = scmp.eq.s32.totalorder %s19, 0
      %p156 = por %p154, %p155
      %p157 = scmp.ne.s32.totalorder %s143, %s144
      %p158 = scmp.eq.s32.totalorder %s20, 3
      %p159 = por %p157, %p158
      %p161 = scmp.ne.s32.totalorder %s144, %s160
      %p162 = scmp.eq.s32.totalorder %s20, 0
      %p163 = por %p161, %p162
      %s164 = ssub.s32 %s21, %s33
      %p165 = scmp.eq.s32.totalorder %s164, 0
      %s167 = sadd.s32 %s166, 1
      %s168 = scalar_select %p165, %s166, %s167
      %p171 = pneg %p165
      %p172 = scmp.eq.s32.totalorder %s14, 3
      %p173 = por %p171, %p172
      %p174 = scmp.ne.s32.totalorder %s166, %s169
      %p175 = scmp.eq.s32.totalorder %s14, 0
      %p176 = por %p174, %p175
      %p177 = scmp.ne.s32.totalorder %s166, %s169
      %p178 = scmp.eq.s32.totalorder %s19, 3
      %p179 = por %p177, %p178
      %p180 = scmp.ne.s32.totalorder %s169, %s170
      %p181 = scmp.eq.s32.totalorder %s19, 0
      %p182 = por %p180, %p181
      %p183 = scmp.ne.s32.totalorder %s169, %s170
      %p184 = scmp.eq.s32.totalorder %s20, 3
      %p185 = por %p183, %p184
      %p187 = scmp.ne.s32.totalorder %s170, %s186
      %p188 = scmp.eq.s32.totalorder %s20, 0
      %p189 = por %p187, %p188
      %p190 = scmp.le.s32.totalorder 1, %s14
      %p191 = scmp.lt.s32.totalorder %s14, 5
      %p192 = pnand %p190, %p191
      %p193 = pneg %p192
      // Predicated region
      $region9: #{tpu_custom_call.1} parent=5 // pred_check
        _
      $region10: #{tpu_custom_call.1} parent=5 // pred_check_branch
        %195 = sbr.rel (%p192) target = $region12
      $region11: #{tpu_custom_call.1} parent=5 // pred_region
        %s196 = ssub.s32 %s14, 1
      $region12: #{tpu_custom_call.1} parent=5 // pred_fallthru
        _
      %p197 = scmp.lt.s32.totalorder %s14, 4
      // Predicated region
      $region13: #{tpu_custom_call.1} parent=5 // pred_check
        %p198 = pneg %p197
      $region14: #{tpu_custom_call.1} parent=5 // pred_check_branch
        %200 = sbr.rel (%p198) target = $region16
      $region15: #{tpu_custom_call.1} parent=5 // pred_region
        // Predicated region
        $region17: #{tpu_custom_call.1} parent=15 // pred_check
          %p201 = pneg %p46
        $region18: #{tpu_custom_call.1} parent=15 // pred_check_branch
          %203 = sbr.rel (%p201) target = $region20
        $region19: #{tpu_custom_call.1} parent=15 // pred_region
          %p204 = scmp.lt.s32.totalorder %s21, 1
          %s205 = scalar_select %p204, %s21, 1
          %s206 = smul.addr %s205, 32
          %s207 = smul.addr %s206, 8
          %s208 = scalar_lea.vmem %s0, %s207
        $region20: #{tpu_custom_call.1} parent=15 // pred_fallthru
          _
        // Predicated region
        $region21: #{tpu_custom_call.1} parent=15 // pred_check
          %p209 = pneg %p72
        $region22: #{tpu_custom_call.1} parent=15 // pred_check_branch
          %211 = sbr.rel (%p209) target = $region24
        $region23: #{tpu_custom_call.1} parent=15 // pred_region
          %p212 = scmp.lt.s32.totalorder %s22, 1
          %s213 = scalar_select %p212, %s22, 1
          %s214 = smul.addr %s213, 36
          %s215 = smul.addr %s214, 4
          %s216 = scalar_lea.vmem %s1, %s215
        $region24: #{tpu_custom_call.1} parent=15 // pred_fallthru
          _
        // Predicated region
        $region25: #{tpu_custom_call.1} parent=15 // pred_check
          %p217 = pneg %p98
        $region26: #{tpu_custom_call.1} parent=15 // pred_check_branch
          %219 = sbr.rel (%p217) target = $region28
        $region27: #{tpu_custom_call.1} parent=15 // pred_region
          %p220 = scmp.lt.s32.totalorder %s22, 1
          %s221 = scalar_select %p220, %s22, 1
          %s222 = scalar_lea.vmem %s2, %s221
        $region28: #{tpu_custom_call.1} parent=15 // pred_fallthru
          _
        // Predicated region
        $region29: #{tpu_custom_call.1} parent=15 // pred_check
          %p223 = pneg %p124
        $region30: #{tpu_custom_call.1} parent=15 // pred_check_branch
          %225 = sbr.rel (%p223) target = $region32
        $region31: #{tpu_custom_call.1} parent=15 // pred_region
          %p226 = scmp.lt.s32.totalorder %s22, 1
          %s227 = scalar_select %p226, %s22, 1
          %s228 = smul.addr %s227, 36
          %s229 = smul.addr %s228, 4
          %s230 = scalar_lea.vmem %s3, %s229
        $region32: #{tpu_custom_call.1} parent=15 // pred_fallthru
          _
        // Predicated region
        $region33: #{tpu_custom_call.1} parent=15 // pred_check
          %p231 = pneg %p150
        $region34: #{tpu_custom_call.1} parent=15 // pred_check_branch
          %233 = sbr.rel (%p231) target = $region36
        $region35: #{tpu_custom_call.1} parent=15 // pred_region
          %p234 = scmp.lt.s32.totalorder %s22, 1
          %s235 = scalar_select %p234, %s22, 1
          %s236 = scalar_lea.vmem %s4, %s235
        $region36: #{tpu_custom_call.1} parent=15 // pred_fallthru
          _
      $region16: #{tpu_custom_call.1} parent=5 // pred_fallthru
        _
      %p237 = scmp.le.s32.totalorder 1, %s14
      %p238 = scmp.lt.s32.totalorder %s14, 5
      %p239 = pnand %p237, %p238
      %p240 = pneg %p239
      // Predicated region
      $region37: #{tpu_custom_call.1} parent=5 // pred_check
        _
      $region38: #{tpu_custom_call.1} parent=5 // pred_check_branch
        %242 = sbr.rel (%p239) target = $region40
      $region39: #{tpu_custom_call.1} parent=5 // pred_region
        %s243 = ssub.s32 %s14, 1
        %p244 = scmp.lt.s32.totalorder %s23, 1
        %s245 = scalar_select %p244, %s23, 1
        %s246 = smul.addr %s245, 32
        %s247 = smul.addr %s246, 8
        %s248 = scalar_lea.vmem %s0, %s247
        %p249 = pneg %p52
        %p250 = pneg %p49
        %p251 = scmp.lt.s32.totalorder %s24, 1
        %s252 = scalar_select %p251, %s24, 1
        %s253 = smul.addr %s252, 36
        %s254 = smul.addr %s253, 4
        %s255 = scalar_lea.vmem %s1, %s254
        %p256 = pneg %p78
        %p257 = pneg %p75
        %p258 = scmp.lt.s32.totalorder %s24, 1
        %s259 = scalar_select %p258, %s24, 1
        %s260 = scalar_lea.vmem %s2, %s259
        %p261 = pneg %p104
        %p262 = pneg %p101
        %p263 = scmp.lt.s32.totalorder %s24, 1
        %s264 = scalar_select %p263, %s24, 1
        %s265 = smul.addr %s264, 36
        %s266 = smul.addr %s265, 4
        %s267 = scalar_lea.vmem %s3, %s266
        %p268 = pneg %p130
        %p269 = pneg %p127
        %p270 = scmp.lt.s32.totalorder %s24, 1
        %s271 = scalar_select %p270, %s24, 1
        %s272 = scalar_lea.vmem %s4, %s271
        %p273 = pneg %p156
        %p274 = pneg %p153
        %p275 = pneg %p182
        %p276 = pneg %p179
        %s277 = sand.u32 %s169, 1
        %s278 = scalar_lea.sflag [#allocation5], %s277
        %s279 = sand.u32 %s169, 1
        %s280 = smul.addr %s279, 256
        %s281 = scalar_lea.vmem [#allocation4], %s280
        %p282 = scmp.lt.s32.totalorder %s23, 1
        %s283 = scalar_select %p282, %s23, 1
        %s284 = smul.addr %s283, 32
        %s285 = smul.addr %s284, 8
        %s286 = scalar_lea.vmem %s0, %s285
        %p287 = scmp.lt.s32.totalorder %s24, 1
        %s288 = scalar_select %p287, %s24, 1
        %s289 = smul.addr %s288, 36
        %s290 = smul.addr %s289, 4
        %s291 = scalar_lea.vmem %s1, %s290
        %p292 = scmp.lt.s32.totalorder %s24, 1
        %s293 = scalar_select %p292, %s24, 1
        %s294 = scalar_lea.vmem %s2, %s293
        %p295 = scmp.lt.s32.totalorder %s24, 1
        %s296 = scalar_select %p295, %s24, 1
        %s297 = smul.addr %s296, 36
        %s298 = smul.addr %s297, 4
        %s299 = scalar_lea.vmem %s3, %s298
        %p300 = scmp.lt.s32.totalorder %s24, 1
        %s301 = scalar_select %p300, %s24, 1
        %s302 = scalar_lea.vmem %s4, %s301
        %p304 = scmp.eq.s32.totalorder %s24, 0
        // Predicated region
        $region41: #{tpu_custom_call.1} parent=39 // pred_check
          %p305 = pneg %p304
        $region42: #{tpu_custom_call.1} parent=39 // pred_check_branch
          %307 = sbr.rel (%p305) target = $region44
        $region43: #{tpu_custom_call.1} parent=39 // pred_region
          %vm308 = vcmask 261120
          %309 = vst.msk [vmem:[#allocation2] sm:$0xff] %vm308, 0.0
          %310 = vst.msk [vmem:[#allocation2 + $0x8] sm:$0xff] %vm308, 0.0
          %vm311 = vcmask 254976
          %312 = vst.msk [vmem:[#allocation2 + $0x10] sm:$0x3] %vm311, 0.0
          %313 = vst.msk [vmem:[#allocation2 + $0x18] sm:$0xff] %vm308, 0.0
          %314 = vst.msk [vmem:[#allocation2 + $0x20] sm:$0xff] %vm308, 0.0
          %315 = vst.msk [vmem:[#allocation2 + $0x28] sm:$0x3] %vm311, 0.0
          %316 = vst.msk [vmem:[#allocation2 + $0x30] sm:$0xff] %vm308, 0.0
          %317 = vst.msk [vmem:[#allocation2 + $0x38] sm:$0xff] %vm308, 0.0
          %318 = vst.msk [vmem:[#allocation2 + $0x40] sm:$0x3] %vm311, 0.0
          %319 = vst.msk [vmem:[#allocation2 + $0x48] sm:$0xff] %vm308, 0.0
          %320 = vst.msk [vmem:[#allocation2 + $0x50] sm:$0xff] %vm308, 0.0
          %321 = vst.msk [vmem:[#allocation2 + $0x58] sm:$0x3] %vm311, 0.0
          %322 = vst.msk [vmem:[#allocation2 + $0x60] sm:$0xff] %vm308, 0.0
          %323 = vst.msk [vmem:[#allocation2 + $0x68] sm:$0xff] %vm308, 0.0
          %324 = vst.msk [vmem:[#allocation2 + $0x70] sm:$0x3] %vm311, 0.0
          %325 = vst.msk [vmem:[#allocation2 + $0x78] sm:$0xff] %vm308, 0.0
          %326 = vst.msk [vmem:[#allocation2 + $0x80] sm:$0xff] %vm308, 0.0
          %327 = vst.msk [vmem:[#allocation2 + $0x88] sm:$0x3] %vm311, 0.0
          %328 = vst.msk [vmem:[#allocation2 + $0x90] sm:$0xff] %vm308, 0.0
          %329 = vst.msk [vmem:[#allocation2 + $0x98] sm:$0xff] %vm308, 0.0
          %330 = vst.msk [vmem:[#allocation2 + $0xa0] sm:$0x3] %vm311, 0.0
          %331 = vst.msk [vmem:[#allocation2 + $0xa8] sm:$0xff] %vm308, 0.0
          %332 = vst.msk [vmem:[#allocation2 + $0xb0] sm:$0xff] %vm308, 0.0
          %333 = vst.msk [vmem:[#allocation2 + $0xb8] sm:$0x3] %vm311, 0.0
          %334 = vst.msk [vmem:[#allocation2 + $0xc0] sm:$0xff] %vm308, 0.0
          %335 = vst.msk [vmem:[#allocation2 + $0xc8] sm:$0xff] %vm308, 0.0
          %336 = vst.msk [vmem:[#allocation2 + $0xd0] sm:$0x3] %vm311, 0.0
          %337 = vst.msk [vmem:[#allocation2 + $0xd8] sm:$0xff] %vm308, 0.0
          %338 = vst.msk [vmem:[#allocation2 + $0xe0] sm:$0xff] %vm308, 0.0
          %339 = vst.msk [vmem:[#allocation2 + $0xe8] sm:$0x3] %vm311, 0.0
          %340 = vst.msk [vmem:[#allocation2 + $0xf0] sm:$0xff] %vm308, 0.0
          %341 = vst.msk [vmem:[#allocation2 + $0xf8] sm:$0xff] %vm308, 0.0
          %342 = vst.msk [vmem:[#allocation2 + $0x100] sm:$0x3] %vm311, 0.0
          %343 = vst.msk [vmem:[#allocation2 + $0x108] sm:$0xff] %vm308, 0.0
          %344 = vst.msk [vmem:[#allocation2 + $0x110] sm:$0xff] %vm308, 0.0
          %345 = vst.msk [vmem:[#allocation2 + $0x118] sm:$0x3] %vm311, 0.0
          %346 = vst.msk [vmem:[#allocation2 + $0x120] sm:$0xff] %vm308, 0.0
          %347 = vst.msk [vmem:[#allocation2 + $0x128] sm:$0xff] %vm308, 0.0
          %348 = vst.msk [vmem:[#allocation2 + $0x130] sm:$0x3] %vm311, 0.0
          %349 = vst.msk [vmem:[#allocation2 + $0x138] sm:$0xff] %vm308, 0.0
          %350 = vst.msk [vmem:[#allocation2 + $0x140] sm:$0xff] %vm308, 0.0
          %351 = vst.msk [vmem:[#allocation2 + $0x148] sm:$0x3] %vm311, 0.0
          %352 = vst.msk [vmem:[#allocation2 + $0x150] sm:$0xff] %vm308, 0.0
          %353 = vst.msk [vmem:[#allocation2 + $0x158] sm:$0xff] %vm308, 0.0
          %354 = vst.msk [vmem:[#allocation2 + $0x160] sm:$0x3] %vm311, 0.0
          %355 = vst.msk [vmem:[#allocation2 + $0x168] sm:$0xff] %vm308, 0.0
          %356 = vst.msk [vmem:[#allocation2 + $0x170] sm:$0xff] %vm308, 0.0
          %357 = vst.msk [vmem:[#allocation2 + $0x178] sm:$0x3] %vm311, 0.0
          %358 = vst.msk [vmem:[#allocation2 + $0x180] sm:$0xff] %vm308, 0.0
          %359 = vst.msk [vmem:[#allocation2 + $0x188] sm:$0xff] %vm308, 0.0
          %360 = vst.msk [vmem:[#allocation2 + $0x190] sm:$0x3] %vm311, 0.0
          %361 = vst.msk [vmem:[#allocation2 + $0x198] sm:$0xff] %vm308, 0.0
          %362 = vst.msk [vmem:[#allocation2 + $0x1a0] sm:$0xff] %vm308, 0.0
          %363 = vst.msk [vmem:[#allocation2 + $0x1a8] sm:$0x3] %vm311, 0.0
          %364 = vst.msk [vmem:[#allocation3] sm:$0xff] %vm308, 0.0
          %365 = vst.msk [vmem:[#allocation3 + $0x8] sm:$0xff] %vm308, 0.0
          %366 = vst.msk [vmem:[#allocation3 + $0x10] sm:$0x3] %vm311, 0.0
          %367 = vst.msk [vmem:[#allocation3 + $0x18] sm:$0xff] %vm308, 0.0
          %368 = vst.msk [vmem:[#allocation3 + $0x20] sm:$0xff] %vm308, 0.0
          %369 = vst.msk [vmem:[#allocation3 + $0x28] sm:$0x3] %vm311, 0.0
          %370 = vst.msk [vmem:[#allocation3 + $0x30] sm:$0xff] %vm308, 0.0
          %371 = vst.msk [vmem:[#allocation3 + $0x38] sm:$0xff] %vm308, 0.0
          %372 = vst.msk [vmem:[#allocation3 + $0x40] sm:$0x3] %vm311, 0.0
          %373 = vst.msk [vmem:[#allocation3 + $0x48] sm:$0xff] %vm308, 0.0
          %374 = vst.msk [vmem:[#allocation3 + $0x50] sm:$0xff] %vm308, 0.0
          %375 = vst.msk [vmem:[#allocation3 + $0x58] sm:$0x3] %vm311, 0.0
          %376 = vst.msk [vmem:[#allocation3 + $0x60] sm:$0xff] %vm308, 0.0
          %377 = vst.msk [vmem:[#allocation3 + $0x68] sm:$0xff] %vm308, 0.0
          %378 = vst.msk [vmem:[#allocation3 + $0x70] sm:$0x3] %vm311, 0.0
          %379 = vst.msk [vmem:[#allocation3 + $0x78] sm:$0xff] %vm308, 0.0
          %380 = vst.msk [vmem:[#allocation3 + $0x80] sm:$0xff] %vm308, 0.0
          %381 = vst.msk [vmem:[#allocation3 + $0x88] sm:$0x3] %vm311, 0.0
          %382 = vst.msk [vmem:[#allocation3 + $0x90] sm:$0xff] %vm308, 0.0
          %383 = vst.msk [vmem:[#allocation3 + $0x98] sm:$0xff] %vm308, 0.0
          %384 = vst.msk [vmem:[#allocation3 + $0xa0] sm:$0x3] %vm311, 0.0
          %385 = vst.msk [vmem:[#allocation3 + $0xa8] sm:$0xff] %vm308, 0.0
          %386 = vst.msk [vmem:[#allocation3 + $0xb0] sm:$0xff] %vm308, 0.0
          %387 = vst.msk [vmem:[#allocation3 + $0xb8] sm:$0x3] %vm311, 0.0
          %388 = vst.msk [vmem:[#allocation3 + $0xc0] sm:$0xff] %vm308, 0.0
          %389 = vst.msk [vmem:[#allocation3 + $0xc8] sm:$0xff] %vm308, 0.0
          %390 = vst.msk [vmem:[#allocation3 + $0xd0] sm:$0x3] %vm311, 0.0
          %391 = vst.msk [vmem:[#allocation3 + $0xd8] sm:$0xff] %vm308, 0.0
          %392 = vst.msk [vmem:[#allocation3 + $0xe0] sm:$0xff] %vm308, 0.0
          %393 = vst.msk [vmem:[#allocation3 + $0xe8] sm:$0x3] %vm311, 0.0
          %394 = vst.msk [vmem:[#allocation3 + $0xf0] sm:$0xff] %vm308, 0.0
          %395 = vst.msk [vmem:[#allocation3 + $0xf8] sm:$0xff] %vm308, 0.0
          %396 = vst.msk [vmem:[#allocation3 + $0x100] sm:$0x3] %vm311, 0.0
          %397 = vst.msk [vmem:[#allocation3 + $0x108] sm:$0xff] %vm308, 0.0
          %398 = vst.msk [vmem:[#allocation3 + $0x110] sm:$0xff] %vm308, 0.0
          %399 = vst.msk [vmem:[#allocation3 + $0x118] sm:$0x3] %vm311, 0.0
          %400 = vst.msk [vmem:[#allocation3 + $0x120] sm:$0xff] %vm308, 0.0
          %401 = vst.msk [vmem:[#allocation3 + $0x128] sm:$0xff] %vm308, 0.0
          %402 = vst.msk [vmem:[#allocation3 + $0x130] sm:$0x3] %vm311, 0.0
          %403 = vst.msk [vmem:[#allocation3 + $0x138] sm:$0xff] %vm308, 0.0
          %404 = vst.msk [vmem:[#allocation3 + $0x140] sm:$0xff] %vm308, 0.0
          %405 = vst.msk [vmem:[#allocation3 + $0x148] sm:$0x3] %vm311, 0.0
          %406 = vst.msk [vmem:[#allocation3 + $0x150] sm:$0xff] %vm308, 0.0
          %407 = vst.msk [vmem:[#allocation3 + $0x158] sm:$0xff] %vm308, 0.0
          %408 = vst.msk [vmem:[#allocation3 + $0x160] sm:$0x3] %vm311, 0.0
          %409 = vst.msk [vmem:[#allocation3 + $0x168] sm:$0xff] %vm308, 0.0
          %410 = vst.msk [vmem:[#allocation3 + $0x170] sm:$0xff] %vm308, 0.0
          %411 = vst.msk [vmem:[#allocation3 + $0x178] sm:$0x3] %vm311, 0.0
          %412 = vst.msk [vmem:[#allocation3 + $0x180] sm:$0xff] %vm308, 0.0
          %413 = vst.msk [vmem:[#allocation3 + $0x188] sm:$0xff] %vm308, 0.0
          %414 = vst.msk [vmem:[#allocation3 + $0x190] sm:$0x3] %vm311, 0.0
          %415 = vst.msk [vmem:[#allocation3 + $0x198] sm:$0xff] %vm308, 0.0
          %416 = vst.msk [vmem:[#allocation3 + $0x1a0] sm:$0xff] %vm308, 0.0
          %417 = vst.msk [vmem:[#allocation3 + $0x1a8] sm:$0x3] %vm311, 0.0
          %v418 = vld [vmem:[%s286] sm:$0xff]
          %v419 = vld [vmem:[%s286 + $0x8] sm:$0xff]
          %v420 = vld [vmem:[%s286 + $0x10] sm:$0xff]
          %v421 = vld [vmem:[%s286 + $0x18] sm:$0xff]
          %v422 = vld [vmem:[%s286 + $0x20] sm:$0xff]
          %v423 = vld [vmem:[%s286 + $0x28] sm:$0xff]
          %v424 = vld [vmem:[%s286 + $0x30] sm:$0xff]
          %v425 = vld [vmem:[%s286 + $0x38] sm:$0xff]
          %v426 = vld [vmem:[%s286 + $0x40] sm:$0xff]
          %v427 = vld [vmem:[%s286 + $0x48] sm:$0xff]
          %v428 = vld [vmem:[%s286 + $0x50] sm:$0xff]
          %v429 = vld [vmem:[%s286 + $0x58] sm:$0xff]
          %v430 = vld [vmem:[%s286 + $0x60] sm:$0xff]
          %v431 = vld [vmem:[%s286 + $0x68] sm:$0xff]
          %v432 = vld [vmem:[%s286 + $0x70] sm:$0xff]
          %v433 = vld [vmem:[%s286 + $0x78] sm:$0xff]
          %v434 = vld [vmem:[%s286 + $0x80] sm:$0xff]
          %v435 = vld [vmem:[%s286 + $0x88] sm:$0xff]
          %v436 = vld [vmem:[%s286 + $0x90] sm:$0xff]
          %v437 = vld [vmem:[%s286 + $0x98] sm:$0xff]
          %v438 = vld [vmem:[%s286 + $0xa0] sm:$0xff]
          %v439 = vld [vmem:[%s286 + $0xa8] sm:$0xff]
          %v440 = vld [vmem:[%s286 + $0xb0] sm:$0xff]
          %v441 = vld [vmem:[%s286 + $0xb8] sm:$0xff]
          %v442 = vld [vmem:[%s286 + $0xc0] sm:$0xff]
          %v443 = vld [vmem:[%s286 + $0xc8] sm:$0xff]
          %v444 = vld [vmem:[%s286 + $0xd0] sm:$0xff]
          %v445 = vld [vmem:[%s286 + $0xd8] sm:$0xff]
          %v446 = vld [vmem:[%s286 + $0xe0] sm:$0xff]
          %v447 = vld [vmem:[%s286 + $0xe8] sm:$0xff]
          %v448 = vld [vmem:[%s286 + $0xf0] sm:$0xff]
          %v449 = vld [vmem:[%s286 + $0xf8] sm:$0xff]
          %s450 = scalar_lea.vmem [#allocation2], 24
          %451 = vst.msk [vmem:[%s450 + $0x1] sm:$0xff] %vm308, %v418
          %452 = vst.msk [vmem:[%s450 + $0x9] sm:$0xff] %vm308, %v419
          %453 = vst.msk [vmem:[%s450 + $0x19] sm:$0xff] %vm308, %v420
          %454 = vst.msk [vmem:[%s450 + $0x21] sm:$0xff] %vm308, %v421
          %455 = vst.msk [vmem:[%s450 + $0x31] sm:$0xff] %vm308, %v422
          %456 = vst.msk [vmem:[%s450 + $0x39] sm:$0xff] %vm308, %v423
          %457 = vst.msk [vmem:[%s450 + $0x49] sm:$0xff] %vm308, %v424
          %458 = vst.msk [vmem:[%s450 + $0x51] sm:$0xff] %vm308, %v425
          %459 = vst.msk [vmem:[%s450 + $0x61] sm:$0xff] %vm308, %v426
          %460 = vst.msk [vmem:[%s450 + $0x69] sm:$0xff] %vm308, %v427
          %461 = vst.msk [vmem:[%s450 + $0x79] sm:$0xff] %vm308, %v428
          %462 = vst.msk [vmem:[%s450 + $0x81] sm:$0xff] %vm308, %v429
          %463 = vst.msk [vmem:[%s450 + $0x91] sm:$0xff] %vm308, %v430
          %464 = vst.msk [vmem:[%s450 + $0x99] sm:$0xff] %vm308, %v431
          %465 = vst.msk [vmem:[%s450 + $0xa9] sm:$0xff] %vm308, %v432
          %466 = vst.msk [vmem:[%s450 + $0xb1] sm:$0xff] %vm308, %v433
          %467 = vst.msk [vmem:[%s450 + $0xc1] sm:$0xff] %vm308, %v434
          %468 = vst.msk [vmem:[%s450 + $0xc9] sm:$0xff] %vm308, %v435
          %469 = vst.msk [vmem:[%s450 + $0xd9] sm:$0xff] %vm308, %v436
          %470 = vst.msk [vmem:[%s450 + $0xe1] sm:$0xff] %vm308, %v437
          %471 = vst.msk [vmem:[%s450 + $0xf1] sm:$0xff] %vm308, %v438
          %472 = vst.msk [vmem:[%s450 + $0xf9] sm:$0xff] %vm308, %v439
          %473 = vst.msk [vmem:[%s450 + $0x109] sm:$0xff] %vm308, %v440
          %474 = vst.msk [vmem:[%s450 + $0x111] sm:$0xff] %vm308, %v441
          %475 = vst.msk [vmem:[%s450 + $0x121] sm:$0xff] %vm308, %v442
          %476 = vst.msk [vmem:[%s450 + $0x129] sm:$0xff] %vm308, %v443
          %477 = vst.msk [vmem:[%s450 + $0x139] sm:$0xff] %vm308, %v444
          %478 = vst.msk [vmem:[%s450 + $0x141] sm:$0xff] %vm308, %v445
          %479 = vst.msk [vmem:[%s450 + $0x151] sm:$0xff] %vm308, %v446
          %480 = vst.msk [vmem:[%s450 + $0x159] sm:$0xff] %vm308, %v447
          %481 = vst.msk [vmem:[%s450 + $0x169] sm:$0xff] %vm308, %v448
          %482 = vst.msk [vmem:[%s450 + $0x171] sm:$0xff] %vm308, %v449
        $region44: #{tpu_custom_call.1} parent=39 // pred_fallthru
          _
        %v483 = vld [vmem:[#allocation2] sm:$0xff]
        %v484 = vld [vmem:[#allocation2 + $0x8] sm:$0xff]
        %v485 = vld [vmem:[#allocation2 + $0x18] sm:$0xff]
        %v486 = vld [vmem:[#allocation2 + $0x20] sm:$0xff]
        %v487 = vld [vmem:[#allocation2 + $0x30] sm:$0xff]
        %v488 = vld [vmem:[#allocation2 + $0x38] sm:$0xff]
        %v489 = vld [vmem:[#allocation2 + $0x48] sm:$0xff]
        %v490 = vld [vmem:[#allocation2 + $0x50] sm:$0xff]
        %v491 = vld [vmem:[#allocation2 + $0x60] sm:$0xff]
        %v492 = vld [vmem:[#allocation2 + $0x68] sm:$0xff]
        %v493 = vld [vmem:[#allocation2 + $0x78] sm:$0xff]
        %v494 = vld [vmem:[#allocation2 + $0x80] sm:$0xff]
        %v495 = vld [vmem:[#allocation2 + $0x90] sm:$0xff]
        %v496 = vld [vmem:[#allocation2 + $0x98] sm:$0xff]
        %v497 = vld [vmem:[#allocation2 + $0xa8] sm:$0xff]
        %v498 = vld [vmem:[#allocation2 + $0xb0] sm:$0xff]
        %v499 = vld [vmem:[#allocation2 + $0xc0] sm:$0xff]
        %v500 = vld [vmem:[#allocation2 + $0xc8] sm:$0xff]
        %v501 = vld [vmem:[#allocation2 + $0xd8] sm:$0xff]
        %v502 = vld [vmem:[#allocation2 + $0xe0] sm:$0xff]
        %v503 = vld [vmem:[#allocation2 + $0xf0] sm:$0xff]
        %v504 = vld [vmem:[#allocation2 + $0xf8] sm:$0xff]
        %v505 = vld [vmem:[#allocation2 + $0x108] sm:$0xff]
        %v506 = vld [vmem:[#allocation2 + $0x110] sm:$0xff]
        %v507 = vld [vmem:[#allocation2 + $0x120] sm:$0xff]
        %v508 = vld [vmem:[#allocation2 + $0x128] sm:$0xff]
        %v509 = vld [vmem:[#allocation2 + $0x138] sm:$0xff]
        %v510 = vld [vmem:[#allocation2 + $0x140] sm:$0xff]
        %v511 = vld [vmem:[#allocation2 + $0x150] sm:$0xff]
        %v512 = vld [vmem:[#allocation2 + $0x158] sm:$0xff]
        %v513 = vld [vmem:[#allocation2 + $0x168] sm:$0xff]
        %v514 = vld [vmem:[#allocation2 + $0x170] sm:$0xff]
        %v515 = vpack.c.bf16 %v484, %v483
        %v516 = vpack.c.bf16 %v486, %v485
        %v517 = vpack.c.bf16 %v488, %v487
        %v518 = vpack.c.bf16 %v490, %v489
        %v519 = vpack.c.bf16 %v492, %v491
        %v520 = vpack.c.bf16 %v494, %v493
        %v521 = vpack.c.bf16 %v496, %v495
        %v522 = vpack.c.bf16 %v498, %v497
        %v523 = vpack.c.bf16 %v500, %v499
        %v524 = vpack.c.bf16 %v502, %v501
        %v525 = vpack.c.bf16 %v504, %v503
        %v526 = vpack.c.bf16 %v506, %v505
        %v527 = vpack.c.bf16 %v508, %v507
        %v528 = vpack.c.bf16 %v510, %v509
        %v529 = vpack.c.bf16 %v512, %v511
        %v530 = vpack.c.bf16 %v514, %v513
        %v531 = vld [vmem:[#allocation2 + $0x1] sm:$0xff]
        %v532 = vld [vmem:[#allocation2 + $0x9] sm:$0xff]
        %v533 = vld [vmem:[#allocation2 + $0x19] sm:$0xff]
        %v534 = vld [vmem:[#allocation2 + $0x21] sm:$0xff]
        %v535 = vld [vmem:[#allocation2 + $0x31] sm:$0xff]
        %v536 = vld [vmem:[#allocation2 + $0x39] sm:$0xff]
        %v537 = vld [vmem:[#allocation2 + $0x49] sm:$0xff]
        %v538 = vld [vmem:[#allocation2 + $0x51] sm:$0xff]
        %v539 = vld [vmem:[#allocation2 + $0x61] sm:$0xff]
        %v540 = vld [vmem:[#allocation2 + $0x69] sm:$0xff]
        %v541 = vld [vmem:[#allocation2 + $0x79] sm:$0xff]
        %v542 = vld [vmem:[#allocation2 + $0x81] sm:$0xff]
        %v543 = vld [vmem:[#allocation2 + $0x91] sm:$0xff]
        %v544 = vld [vmem:[#allocation2 + $0x99] sm:$0xff]
        %v545 = vld [vmem:[#allocation2 + $0xa9] sm:$0xff]
        %v546 = vld [vmem:[#allocation2 + $0xb1] sm:$0xff]
        %v547 = vld [vmem:[#allocation2 + $0xc1] sm:$0xff]
        %v548 = vld [vmem:[#allocation2 + $0xc9] sm:$0xff]
        %v549 = vld [vmem:[#allocation2 + $0xd9] sm:$0xff]
        %v550 = vld [vmem:[#allocation2 + $0xe1] sm:$0xff]
        %v551 = vld [vmem:[#allocation2 + $0xf1] sm:$0xff]
        %v552 = vld [vmem:[#allocation2 + $0xf9] sm:$0xff]
        %v553 = vld [vmem:[#allocation2 + $0x109] sm:$0xff]
        %v554 = vld [vmem:[#allocation2 + $0x111] sm:$0xff]
        %v555 = vld [vmem:[#allocation2 + $0x121] sm:$0xff]
        %v556 = vld [vmem:[#allocation2 + $0x129] sm:$0xff]
        %v557 = vld [vmem:[#allocation2 + $0x139] sm:$0xff]
        %v558 = vld [vmem:[#allocation2 + $0x141] sm:$0xff]
        %v559 = vld [vmem:[#allocation2 + $0x151] sm:$0xff]
        %v560 = vld [vmem:[#allocation2 + $0x159] sm:$0xff]
        %v561 = vld [vmem:[#allocation2 + $0x169] sm:$0xff]
        %v562 = vld [vmem:[#allocation2 + $0x171] sm:$0xff]
        %v563 = vpack.c.bf16 %v532, %v531
        %v564 = vpack.c.bf16 %v534, %v533
        %v565 = vpack.c.bf16 %v536, %v535
        %v566 = vpack.c.bf16 %v538, %v537
        %v567 = vpack.c.bf16 %v540, %v539
        %v568 = vpack.c.bf16 %v542, %v541
        %v569 = vpack.c.bf16 %v544, %v543
        %v570 = vpack.c.bf16 %v546, %v545
        %v571 = vpack.c.bf16 %v548, %v547
        %v572 = vpack.c.bf16 %v550, %v549
        %v573 = vpack.c.bf16 %v552, %v551
        %v574 = vpack.c.bf16 %v554, %v553
        %v575 = vpack.c.bf16 %v556, %v555
        %v576 = vpack.c.bf16 %v558, %v557
        %v577 = vpack.c.bf16 %v560, %v559
        %v578 = vpack.c.bf16 %v562, %v561
        %v579 = vld [vmem:[#allocation2 + $0x2] sm:$0xff]
        %v580 = vld [vmem:[#allocation2 + $0xa] sm:$0xff]
        %v581 = vld [vmem:[#allocation2 + $0x1a] sm:$0xff]
        %v582 = vld [vmem:[#allocation2 + $0x22] sm:$0xff]
        %v583 = vld [vmem:[#allocation2 + $0x32] sm:$0xff]
        %v584 = vld [vmem:[#allocation2 + $0x3a] sm:$0xff]
        %v585 = vld [vmem:[#allocation2 + $0x4a] sm:$0xff]
        %v586 = vld [vmem:[#allocation2 + $0x52] sm:$0xff]
        %v587 = vld [vmem:[#allocation2 + $0x62] sm:$0xff]
        %v588 = vld [vmem:[#allocation2 + $0x6a] sm:$0xff]
        %v589 = vld [vmem:[#allocation2 + $0x7a] sm:$0xff]
        %v590 = vld [vmem:[#allocation2 + $0x82] sm:$0xff]
        %v591 = vld [vmem:[#allocation2 + $0x92] sm:$0xff]
        %v592 = vld [vmem:[#allocation2 + $0x9a] sm:$0xff]
        %v593 = vld [vmem:[#allocation2 + $0xaa] sm:$0xff]
        %v594 = vld [vmem:[#allocation2 + $0xb2] sm:$0xff]
        %v595 = vld [vmem:[#allocation2 + $0xc2] sm:$0xff]
        %v596 = vld [vmem:[#allocation2 + $0xca] sm:$0xff]
        %v597 = vld [vmem:[#allocation2 + $0xda] sm:$0xff]
        %v598 = vld [vmem:[#allocation2 + $0xe2] sm:$0xff]
        %v599 = vld [vmem:[#allocation2 + $0xf2] sm:$0xff]
        %v600 = vld [vmem:[#allocation2 + $0xfa] sm:$0xff]
        %v601 = vld [vmem:[#allocation2 + $0x10a] sm:$0xff]
        %v602 = vld [vmem:[#allocation2 + $0x112] sm:$0xff]
        %v603 = vld [vmem:[#allocation2 + $0x122] sm:$0xff]
        %v604 = vld [vmem:[#allocation2 + $0x12a] sm:$0xff]
        %v605 = vld [vmem:[#allocation2 + $0x13a] sm:$0xff]
        %v606 = vld [vmem:[#allocation2 + $0x142] sm:$0xff]
        %v607 = vld [vmem:[#allocation2 + $0x152] sm:$0xff]
        %v608 = vld [vmem:[#allocation2 + $0x15a] sm:$0xff]
        %v609 = vld [vmem:[#allocation2 + $0x16a] sm:$0xff]
        %v610 = vld [vmem:[#allocation2 + $0x172] sm:$0xff]
        %v611 = vpack.c.bf16 %v580, %v579
        %v612 = vpack.c.bf16 %v582, %v581
        %v613 = vpack.c.bf16 %v584, %v583
        %v614 = vpack.c.bf16 %v586, %v585
        %v615 = vpack.c.bf16 %v588, %v587
        %v616 = vpack.c.bf16 %v590, %v589
        %v617 = vpack.c.bf16 %v592, %v591
        %v618 = vpack.c.bf16 %v594, %v593
        %v619 = vpack.c.bf16 %v596, %v595
        %v620 = vpack.c.bf16 %v598, %v597
        %v621 = vpack.c.bf16 %v600, %v599
        %v622 = vpack.c.bf16 %v602, %v601
        %v623 = vpack.c.bf16 %v604, %v603
        %v624 = vpack.c.bf16 %v606, %v605
        %v625 = vpack.c.bf16 %v608, %v607
        %v626 = vpack.c.bf16 %v610, %v609
        %s627 = scalar_lea.vmem [#allocation2], 24
        %v628 = vld [vmem:[%s627] sm:$0xff]
        %v629 = vld [vmem:[%s627 + $0x8] sm:$0xff]
        %v630 = vld [vmem:[%s627 + $0x18] sm:$0xff]
        %v631 = vld [vmem:[%s627 + $0x20] sm:$0xff]
        %v632 = vld [vmem:[%s627 + $0x30] sm:$0xff]
        %v633 = vld [vmem:[%s627 + $0x38] sm:$0xff]
        %v634 = vld [vmem:[%s627 + $0x48] sm:$0xff]
        %v635 = vld [vmem:[%s627 + $0x50] sm:$0xff]
        %v636 = vld [vmem:[%s627 + $0x60] sm:$0xff]
        %v637 = vld [vmem:[%s627 + $0x68] sm:$0xff]
        %v638 = vld [vmem:[%s627 + $0x78] sm:$0xff]
        %v639 = vld [vmem:[%s627 + $0x80] sm:$0xff]
        %v640 = vld [vmem:[%s627 + $0x90] sm:$0xff]
        %v641 = vld [vmem:[%s627 + $0x98] sm:$0xff]
        %v642 = vld [vmem:[%s627 + $0xa8] sm:$0xff]
        %v643 = vld [vmem:[%s627 + $0xb0] sm:$0xff]
        %v644 = vld [vmem:[%s627 + $0xc0] sm:$0xff]
        %v645 = vld [vmem:[%s627 + $0xc8] sm:$0xff]
        %v646 = vld [vmem:[%s627 + $0xd8] sm:$0xff]
        %v647 = vld [vmem:[%s627 + $0xe0] sm:$0xff]
        %v648 = vld [vmem:[%s627 + $0xf0] sm:$0xff]
        %v649 = vld [vmem:[%s627 + $0xf8] sm:$0xff]
        %v650 = vld [vmem:[%s627 + $0x108] sm:$0xff]
        %v651 = vld [vmem:[%s627 + $0x110] sm:$0xff]
        %v652 = vld [vmem:[%s627 + $0x120] sm:$0xff]
        %v653 = vld [vmem:[%s627 + $0x128] sm:$0xff]
        %v654 = vld [vmem:[%s627 + $0x138] sm:$0xff]
        %v655 = vld [vmem:[%s627 + $0x140] sm:$0xff]
        %v656 = vld [vmem:[%s627 + $0x150] sm:$0xff]
        %v657 = vld [vmem:[%s627 + $0x158] sm:$0xff]
        %v658 = vld [vmem:[%s627 + $0x168] sm:$0xff]
        %v659 = vld [vmem:[%s627 + $0x170] sm:$0xff]
        %v660 = vpack.c.bf16 %v629, %v628
        %v661 = vpack.c.bf16 %v631, %v630
        %v662 = vpack.c.bf16 %v633, %v632
        %v663 = vpack.c.bf16 %v635, %v634
        %v664 = vpack.c.bf16 %v637, %v636
        %v665 = vpack.c.bf16 %v639, %v638
        %v666 = vpack.c.bf16 %v641, %v640
        %v667 = vpack.c.bf16 %v643, %v642
        %v668 = vpack.c.bf16 %v645, %v644
        %v669 = vpack.c.bf16 %v647, %v646
        %v670 = vpack.c.bf16 %v649, %v648
        %v671 = vpack.c.bf16 %v651, %v650
        %v672 = vpack.c.bf16 %v653, %v652
        %v673 = vpack.c.bf16 %v655, %v654
        %v674 = vpack.c.bf16 %v657, %v656
        %v675 = vpack.c.bf16 %v659, %v658
        %v676 = vld [vmem:[%s627 + $0x1] sm:$0xff]
        %v677 = vld [vmem:[%s627 + $0x9] sm:$0xff]
        %v678 = vld [vmem:[%s627 + $0x19] sm:$0xff]
        %v679 = vld [vmem:[%s627 + $0x21] sm:$0xff]
        %v680 = vld [vmem:[%s627 + $0x31] sm:$0xff]
        %v681 = vld [vmem:[%s627 + $0x39] sm:$0xff]
        %v682 = vld [vmem:[%s627 + $0x49] sm:$0xff]
        %v683 = vld [vmem:[%s627 + $0x51] sm:$0xff]
        %v684 = vld [vmem:[%s627 + $0x61] sm:$0xff]
        %v685 = vld [vmem:[%s627 + $0x69] sm:$0xff]
        %v686 = vld [vmem:[%s627 + $0x79] sm:$0xff]
        %v687 = vld [vmem:[%s627 + $0x81] sm:$0xff]
        %v688 = vld [vmem:[%s627 + $0x91] sm:$0xff]
        %v689 = vld [vmem:[%s627 + $0x99] sm:$0xff]
        %v690 = vld [vmem:[%s627 + $0xa9] sm:$0xff]
        %v691 = vld [vmem:[%s627 + $0xb1] sm:$0xff]
        %v692 = vld [vmem:[%s627 + $0xc1] sm:$0xff]
        %v693 = vld [vmem:[%s627 + $0xc9] sm:$0xff]
        %v694 = vld [vmem:[%s627 + $0xd9] sm:$0xff]
        %v695 = vld [vmem:[%s627 + $0xe1] sm:$0xff]
        %v696 = vld [vmem:[%s627 + $0xf1] sm:$0xff]
        %v697 = vld [vmem:[%s627 + $0xf9] sm:$0xff]
        %v698 = vld [vmem:[%s627 + $0x109] sm:$0xff]
        %v699 = vld [vmem:[%s627 + $0x111] sm:$0xff]
        %v700 = vld [vmem:[%s627 + $0x121] sm:$0xff]
        %v701 = vld [vmem:[%s627 + $0x129] sm:$0xff]
        %v702 = vld [vmem:[%s627 + $0x139] sm:$0xff]
        %v703 = vld [vmem:[%s627 + $0x141] sm:$0xff]
        %v704 = vld [vmem:[%s627 + $0x151] sm:$0xff]
        %v705 = vld [vmem:[%s627 + $0x159] sm:$0xff]
        %v706 = vld [vmem:[%s627 + $0x169] sm:$0xff]
        %v707 = vld [vmem:[%s627 + $0x171] sm:$0xff]
        %v708 = vpack.c.bf16 %v677, %v676
        %v709 = vpack.c.bf16 %v679, %v678
        %v710 = vpack.c.bf16 %v681, %v680
        %v711 = vpack.c.bf16 %v683, %v682
        %v712 = vpack.c.bf16 %v685, %v684
        %v713 = vpack.c.bf16 %v687, %v686
        %v714 = vpack.c.bf16 %v689, %v688
        %v715 = vpack.c.bf16 %v691, %v690
        %v716 = vpack.c.bf16 %v693, %v692
        %v717 = vpack.c.bf16 %v695, %v694
        %v718 = vpack.c.bf16 %v697, %v696
        %v719 = vpack.c.bf16 %v699, %v698
        %v720 = vpack.c.bf16 %v701, %v700
        %v721 = vpack.c.bf16 %v703, %v702
        %v722 = vpack.c.bf16 %v705, %v704
        %v723 = vpack.c.bf16 %v707, %v706
        %v724 = vld [vmem:[%s627 + $0x2] sm:$0xff]
        %v725 = vld [vmem:[%s627 + $0xa] sm:$0xff]
        %v726 = vld [vmem:[%s627 + $0x1a] sm:$0xff]
        %v727 = vld [vmem:[%s627 + $0x22] sm:$0xff]
        %v728 = vld [vmem:[%s627 + $0x32] sm:$0xff]
        %v729 = vld [vmem:[%s627 + $0x3a] sm:$0xff]
        %v730 = vld [vmem:[%s627 + $0x4a] sm:$0xff]
        %v731 = vld [vmem:[%s627 + $0x52] sm:$0xff]
        %v732 = vld [vmem:[%s627 + $0x62] sm:$0xff]
        %v733 = vld [vmem:[%s627 + $0x6a] sm:$0xff]
        %v734 = vld [vmem:[%s627 + $0x7a] sm:$0xff]
        %v735 = vld [vmem:[%s627 + $0x82] sm:$0xff]
        %v736 = vld [vmem:[%s627 + $0x92] sm:$0xff]
        %v737 = vld [vmem:[%s627 + $0x9a] sm:$0xff]
        %v738 = vld [vmem:[%s627 + $0xaa] sm:$0xff]
        %v739 = vld [vmem:[%s627 + $0xb2] sm:$0xff]
        %v740 = vld [vmem:[%s627 + $0xc2] sm:$0xff]
        %v741 = vld [vmem:[%s627 + $0xca] sm:$0xff]
        %v742 = vld [vmem:[%s627 + $0xda] sm:$0xff]
        %v743 = vld [vmem:[%s627 + $0xe2] sm:$0xff]
        %v744 = vld [vmem:[%s627 + $0xf2] sm:$0xff]
        %v745 = vld [vmem:[%s627 + $0xfa] sm:$0xff]
        %v746 = vld [vmem:[%s627 + $0x10a] sm:$0xff]
        %v747 = vld [vmem:[%s627 + $0x112] sm:$0xff]
        %v748 = vld [vmem:[%s627 + $0x122] sm:$0xff]
        %v749 = vld [vmem:[%s627 + $0x12a] sm:$0xff]
        %v750 = vld [vmem:[%s627 + $0x13a] sm:$0xff]
        %v751 = vld [vmem:[%s627 + $0x142] sm:$0xff]
        %v752 = vld [vmem:[%s627 + $0x152] sm:$0xff]
        %v753 = vld [vmem:[%s627 + $0x15a] sm:$0xff]
        %v754 = vld [vmem:[%s627 + $0x16a] sm:$0xff]
        %v755 = vld [vmem:[%s627 + $0x172] sm:$0xff]
        %v756 = vpack.c.bf16 %v725, %v724
        %v757 = vpack.c.bf16 %v727, %v726
        %v758 = vpack.c.bf16 %v729, %v728
        %v759 = vpack.c.bf16 %v731, %v730
        %v760 = vpack.c.bf16 %v733, %v732
        %v761 = vpack.c.bf16 %v735, %v734
        %v762 = vpack.c.bf16 %v737, %v736
        %v763 = vpack.c.bf16 %v739, %v738
        %v764 = vpack.c.bf16 %v741, %v740
        %v765 = vpack.c.bf16 %v743, %v742
        %v766 = vpack.c.bf16 %v745, %v744
        %v767 = vpack.c.bf16 %v747, %v746
        %v768 = vpack.c.bf16 %v749, %v748
        %v769 = vpack.c.bf16 %v751, %v750
        %v770 = vpack.c.bf16 %v753, %v752
        %v771 = vpack.c.bf16 %v755, %v754
        %s772 = scalar_lea.vmem [#allocation2], 48
        %v773 = vld [vmem:[%s772] sm:$0xff]
        %v774 = vld [vmem:[%s772 + $0x8] sm:$0xff]
        %v775 = vld [vmem:[%s772 + $0x18] sm:$0xff]
        %v776 = vld [vmem:[%s772 + $0x20] sm:$0xff]
        %v777 = vld [vmem:[%s772 + $0x30] sm:$0xff]
        %v778 = vld [vmem:[%s772 + $0x38] sm:$0xff]
        %v779 = vld [vmem:[%s772 + $0x48] sm:$0xff]
        %v780 = vld [vmem:[%s772 + $0x50] sm:$0xff]
        %v781 = vld [vmem:[%s772 + $0x60] sm:$0xff]
        %v782 = vld [vmem:[%s772 + $0x68] sm:$0xff]
        %v783 = vld [vmem:[%s772 + $0x78] sm:$0xff]
        %v784 = vld [vmem:[%s772 + $0x80] sm:$0xff]
        %v785 = vld [vmem:[%s772 + $0x90] sm:$0xff]
        %v786 = vld [vmem:[%s772 + $0x98] sm:$0xff]
        %v787 = vld [vmem:[%s772 + $0xa8] sm:$0xff]
        %v788 = vld [vmem:[%s772 + $0xb0] sm:$0xff]
        %v789 = vld [vmem:[%s772 + $0xc0] sm:$0xff]
        %v790 = vld [vmem:[%s772 + $0xc8] sm:$0xff]
        %v791 = vld [vmem:[%s772 + $0xd8] sm:$0xff]
        %v792 = vld [vmem:[%s772 + $0xe0] sm:$0xff]
        %v793 = vld [vmem:[%s772 + $0xf0] sm:$0xff]
        %v794 = vld [vmem:[%s772 + $0xf8] sm:$0xff]
        %v795 = vld [vmem:[%s772 + $0x108] sm:$0xff]
        %v796 = vld [vmem:[%s772 + $0x110] sm:$0xff]
        %v797 = vld [vmem:[%s772 + $0x120] sm:$0xff]
        %v798 = vld [vmem:[%s772 + $0x128] sm:$0xff]
        %v799 = vld [vmem:[%s772 + $0x138] sm:$0xff]
        %v800 = vld [vmem:[%s772 + $0x140] sm:$0xff]
        %v801 = vld [vmem:[%s772 + $0x150] sm:$0xff]
        %v802 = vld [vmem:[%s772 + $0x158] sm:$0xff]
        %v803 = vld [vmem:[%s772 + $0x168] sm:$0xff]
        %v804 = vld [vmem:[%s772 + $0x170] sm:$0xff]
        %v805 = vpack.c.bf16 %v774, %v773
        %v806 = vpack.c.bf16 %v776, %v775
        %v807 = vpack.c.bf16 %v778, %v777
        %v808 = vpack.c.bf16 %v780, %v779
        %v809 = vpack.c.bf16 %v782, %v781
        %v810 = vpack.c.bf16 %v784, %v783
        %v811 = vpack.c.bf16 %v786, %v785
        %v812 = vpack.c.bf16 %v788, %v787
        %v813 = vpack.c.bf16 %v790, %v789
        %v814 = vpack.c.bf16 %v792, %v791
        %v815 = vpack.c.bf16 %v794, %v793
        %v816 = vpack.c.bf16 %v796, %v795
        %v817 = vpack.c.bf16 %v798, %v797
        %v818 = vpack.c.bf16 %v800, %v799
        %v819 = vpack.c.bf16 %v802, %v801
        %v820 = vpack.c.bf16 %v804, %v803
        %v821 = vld [vmem:[%s772 + $0x1] sm:$0xff]
        %v822 = vld [vmem:[%s772 + $0x9] sm:$0xff]
        %v823 = vld [vmem:[%s772 + $0x19] sm:$0xff]
        %v824 = vld [vmem:[%s772 + $0x21] sm:$0xff]
        %v825 = vld [vmem:[%s772 + $0x31] sm:$0xff]
        %v826 = vld [vmem:[%s772 + $0x39] sm:$0xff]
        %v827 = vld [vmem:[%s772 + $0x49] sm:$0xff]
        %v828 = vld [vmem:[%s772 + $0x51] sm:$0xff]
        %v829 = vld [vmem:[%s772 + $0x61] sm:$0xff]
        %v830 = vld [vmem:[%s772 + $0x69] sm:$0xff]
        %v831 = vld [vmem:[%s772 + $0x79] sm:$0xff]
        %v832 = vld [vmem:[%s772 + $0x81] sm:$0xff]
        %v833 = vld [vmem:[%s772 + $0x91] sm:$0xff]
        %v834 = vld [vmem:[%s772 + $0x99] sm:$0xff]
        %v835 = vld [vmem:[%s772 + $0xa9] sm:$0xff]
        %v836 = vld [vmem:[%s772 + $0xb1] sm:$0xff]
        %v837 = vld [vmem:[%s772 + $0xc1] sm:$0xff]
        %v838 = vld [vmem:[%s772 + $0xc9] sm:$0xff]
        %v839 = vld [vmem:[%s772 + $0xd9] sm:$0xff]
        %v840 = vld [vmem:[%s772 + $0xe1] sm:$0xff]
        %v841 = vld [vmem:[%s772 + $0xf1] sm:$0xff]
        %v842 = vld [vmem:[%s772 + $0xf9] sm:$0xff]
        %v843 = vld [vmem:[%s772 + $0x109] sm:$0xff]
        %v844 = vld [vmem:[%s772 + $0x111] sm:$0xff]
        %v845 = vld [vmem:[%s772 + $0x121] sm:$0xff]
        %v846 = vld [vmem:[%s772 + $0x129] sm:$0xff]
        %v847 = vld [vmem:[%s772 + $0x139] sm:$0xff]
        %v848 = vld [vmem:[%s772 + $0x141] sm:$0xff]
        %v849 = vld [vmem:[%s772 + $0x151] sm:$0xff]
        %v850 = vld [vmem:[%s772 + $0x159] sm:$0xff]
        %v851 = vld [vmem:[%s772 + $0x169] sm:$0xff]
        %v852 = vld [vmem:[%s772 + $0x171] sm:$0xff]
        %v853 = vpack.c.bf16 %v822, %v821
        %v854 = vpack.c.bf16 %v824, %v823
        %v855 = vpack.c.bf16 %v826, %v825
        %v856 = vpack.c.bf16 %v828, %v827
        %v857 = vpack.c.bf16 %v830, %v829
        %v858 = vpack.c.bf16 %v832, %v831
        %v859 = vpack.c.bf16 %v834, %v833
        %v860 = vpack.c.bf16 %v836, %v835
        %v861 = vpack.c.bf16 %v838, %v837
        %v862 = vpack.c.bf16 %v840, %v839
        %v863 = vpack.c.bf16 %v842, %v841
        %v864 = vpack.c.bf16 %v844, %v843
        %v865 = vpack.c.bf16 %v846, %v845
        %v866 = vpack.c.bf16 %v848, %v847
        %v867 = vpack.c.bf16 %v850, %v849
        %v868 = vpack.c.bf16 %v852, %v851
        %v869 = vld [vmem:[%s772 + $0x2] sm:$0xff]
        %v870 = vld [vmem:[%s772 + $0xa] sm:$0xff]
        %v871 = vld [vmem:[%s772 + $0x1a] sm:$0xff]
        %v872 = vld [vmem:[%s772 + $0x22] sm:$0xff]
        %v873 = vld [vmem:[%s772 + $0x32] sm:$0xff]
        %v874 = vld [vmem:[%s772 + $0x3a] sm:$0xff]
        %v875 = vld [vmem:[%s772 + $0x4a] sm:$0xff]
        %v876 = vld [vmem:[%s772 + $0x52] sm:$0xff]
        %v877 = vld [vmem:[%s772 + $0x62] sm:$0xff]
        %v878 = vld [vmem:[%s772 + $0x6a] sm:$0xff]
        %v879 = vld [vmem:[%s772 + $0x7a] sm:$0xff]
        %v880 = vld [vmem:[%s772 + $0x82] sm:$0xff]
        %v881 = vld [vmem:[%s772 + $0x92] sm:$0xff]
        %v882 = vld [vmem:[%s772 + $0x9a] sm:$0xff]
        %v883 = vld [vmem:[%s772 + $0xaa] sm:$0xff]
        %v884 = vld [vmem:[%s772 + $0xb2] sm:$0xff]
        %v885 = vld [vmem:[%s772 + $0xc2] sm:$0xff]
        %v886 = vld [vmem:[%s772 + $0xca] sm:$0xff]
        %v887 = vld [vmem:[%s772 + $0xda] sm:$0xff]
        %v888 = vld [vmem:[%s772 + $0xe2] sm:$0xff]
        %v889 = vld [vmem:[%s772 + $0xf2] sm:$0xff]
        %v890 = vld [vmem:[%s772 + $0xfa] sm:$0xff]
        %v891 = vld [vmem:[%s772 + $0x10a] sm:$0xff]
        %v892 = vld [vmem:[%s772 + $0x112] sm:$0xff]
        %v893 = vld [vmem:[%s772 + $0x122] sm:$0xff]
        %v894 = vld [vmem:[%s772 + $0x12a] sm:$0xff]
        %v895 = vld [vmem:[%s772 + $0x13a] sm:$0xff]
        %v896 = vld [vmem:[%s772 + $0x142] sm:$0xff]
        %v897 = vld [vmem:[%s772 + $0x152] sm:$0xff]
        %v898 = vld [vmem:[%s772 + $0x15a] sm:$0xff]
        %v899 = vld [vmem:[%s772 + $0x16a] sm:$0xff]
        %v900 = vld [vmem:[%s772 + $0x172] sm:$0xff]
        %v901 = vpack.c.bf16 %v870, %v869
        %v902 = vpack.c.bf16 %v872, %v871
        %v903 = vpack.c.bf16 %v874, %v873
        %v904 = vpack.c.bf16 %v876, %v875
        %v905 = vpack.c.bf16 %v878, %v877
        %v906 = vpack.c.bf16 %v880, %v879
        %v907 = vpack.c.bf16 %v882, %v881
        %v908 = vpack.c.bf16 %v884, %v883
        %v909 = vpack.c.bf16 %v886, %v885
        %v910 = vpack.c.bf16 %v888, %v887
        %v911 = vpack.c.bf16 %v890, %v889
        %v912 = vpack.c.bf16 %v892, %v891
        %v913 = vpack.c.bf16 %v894, %v893
        %v914 = vpack.c.bf16 %v896, %v895
        %v915 = vpack.c.bf16 %v898, %v897
        %v916 = vpack.c.bf16 %v900, %v899
        %933 = vrot.lane.b32.xlu0 %v563, 32
        %v934 = vpop.permute.xlu0 %933
        %935 = vrot.lane.b32.xlu0 %v564, 32
        %v936 = vpop.permute.xlu0 %935
        %937 = vrot.lane.b32.xlu0 %v565, 32
        %v938 = vpop.permute.xlu0 %937
        %939 = vrot.lane.b32.xlu0 %v566, 32
        %v940 = vpop.permute.xlu0 %939
        %941 = vrot.lane.b32.xlu0 %v567, 32
        %v942 = vpop.permute.xlu0 %941
        %943 = vrot.lane.b32.xlu0 %v568, 32
        %v944 = vpop.permute.xlu0 %943
        %945 = vrot.lane.b32.xlu0 %v569, 32
        %v946 = vpop.permute.xlu0 %945
        %947 = vrot.lane.b32.xlu0 %v570, 32
        %v948 = vpop.permute.xlu0 %947
        %949 = vrot.lane.b32.xlu0 %v571, 32
        %v950 = vpop.permute.xlu0 %949
        %951 = vrot.lane.b32.xlu0 %v572, 32
        %v952 = vpop.permute.xlu0 %951
        %953 = vrot.lane.b32.xlu0 %v573, 32
        %v954 = vpop.permute.xlu0 %953
        %955 = vrot.lane.b32.xlu0 %v574, 32
        %v956 = vpop.permute.xlu0 %955
        %957 = vrot.lane.b32.xlu0 %v575, 32
        %v958 = vpop.permute.xlu0 %957
        %959 = vrot.lane.b32.xlu0 %v576, 32
        %v960 = vpop.permute.xlu0 %959
        %961 = vrot.lane.b32.xlu0 %v577, 32
        %v962 = vpop.permute.xlu0 %961
        %963 = vrot.lane.b32.xlu0 %v578, 32
        %v964 = vpop.permute.xlu0 %963
        %981 = vrot.lane.b32.xlu0 %v611, 64
        %v982 = vpop.permute.xlu0 %981
        %983 = vrot.lane.b32.xlu0 %v612, 64
        %v984 = vpop.permute.xlu0 %983
        %985 = vrot.lane.b32.xlu0 %v613, 64
        %v986 = vpop.permute.xlu0 %985
        %987 = vrot.lane.b32.xlu0 %v614, 64
        %v988 = vpop.permute.xlu0 %987
        %989 = vrot.lane.b32.xlu0 %v615, 64
        %v990 = vpop.permute.xlu0 %989
        %991 = vrot.lane.b32.xlu0 %v616, 64
        %v992 = vpop.permute.xlu0 %991
        %993 = vrot.lane.b32.xlu0 %v617, 64
        %v994 = vpop.permute.xlu0 %993
        %995 = vrot.lane.b32.xlu0 %v618, 64
        %v996 = vpop.permute.xlu0 %995
        %997 = vrot.lane.b32.xlu0 %v619, 64
        %v998 = vpop.permute.xlu0 %997
        %999 = vrot.lane.b32.xlu0 %v620, 64
        %v1000 = vpop.permute.xlu0 %999
        %1001 = vrot.lane.b32.xlu0 %v621, 64
        %v1002 = vpop.permute.xlu0 %1001
        %1003 = vrot.lane.b32.xlu0 %v622, 64
        %v1004 = vpop.permute.xlu0 %1003
        %1005 = vrot.lane.b32.xlu0 %v623, 64
        %v1006 = vpop.permute.xlu0 %1005
        %1007 = vrot.lane.b32.xlu0 %v624, 64
        %v1008 = vpop.permute.xlu0 %1007
        %1009 = vrot.lane.b32.xlu0 %v625, 64
        %v1010 = vpop.permute.xlu0 %1009
        %1011 = vrot.lane.b32.xlu0 %v626, 64
        %v1012 = vpop.permute.xlu0 %1011
        %1029 = vrot.lane.b32.xlu0 %v660, 96
        %v1030 = vpop.permute.xlu0 %1029
        %1031 = vrot.lane.b32.xlu0 %v661, 96
        %v1032 = vpop.permute.xlu0 %1031
        %1033 = vrot.lane.b32.xlu0 %v662, 96
        %v1034 = vpop.permute.xlu0 %1033
        %1035 = vrot.lane.b32.xlu0 %v663, 96
        %v1036 = vpop.permute.xlu0 %1035
        %1037 = vrot.lane.b32.xlu0 %v664, 96
        %v1038 = vpop.permute.xlu0 %1037
        %1039 = vrot.lane.b32.xlu0 %v665, 96
        %v1040 = vpop.permute.xlu0 %1039
        %1041 = vrot.lane.b32.xlu0 %v666, 96
        %v1042 = vpop.permute.xlu0 %1041
        %1043 = vrot.lane.b32.xlu0 %v667, 96
        %v1044 = vpop.permute.xlu0 %1043
        %1045 = vrot.lane.b32.xlu0 %v668, 96
        %v1046 = vpop.permute.xlu0 %1045
        %1047 = vrot.lane.b32.xlu0 %v669, 96
        %v1048 = vpop.permute.xlu0 %1047
        %1049 = vrot.lane.b32.xlu0 %v670, 96
        %v1050 = vpop.permute.xlu0 %1049
        %1051 = vrot.lane.b32.xlu0 %v671, 96
        %v1052 = vpop.permute.xlu0 %1051
        %1053 = vrot.lane.b32.xlu0 %v672, 96
        %v1054 = vpop.permute.xlu0 %1053
        %1055 = vrot.lane.b32.xlu0 %v673, 96
        %v1056 = vpop.permute.xlu0 %1055
        %1057 = vrot.lane.b32.xlu0 %v674, 96
        %v1058 = vpop.permute.xlu0 %1057
        %1059 = vrot.lane.b32.xlu0 %v675, 96
        %v1060 = vpop.permute.xlu0 %1059
        %1077 = vrot.lane.b32.xlu0 %v756, 32
        %v1078 = vpop.permute.xlu0 %1077
        %1079 = vrot.lane.b32.xlu0 %v757, 32
        %v1080 = vpop.permute.xlu0 %1079
        %1081 = vrot.lane.b32.xlu0 %v758, 32
        %v1082 = vpop.permute.xlu0 %1081
        %1083 = vrot.lane.b32.xlu0 %v759, 32
        %v1084 = vpop.permute.xlu0 %1083
        %1085 = vrot.lane.b32.xlu0 %v760, 32
        %v1086 = vpop.permute.xlu0 %1085
        %1087 = vrot.lane.b32.xlu0 %v761, 32
        %v1088 = vpop.permute.xlu0 %1087
        %1089 = vrot.lane.b32.xlu0 %v762, 32
        %v1090 = vpop.permute.xlu0 %1089
        %1091 = vrot.lane.b32.xlu0 %v763, 32
        %v1092 = vpop.permute.xlu0 %1091
        %1093 = vrot.lane.b32.xlu0 %v764, 32
        %v1094 = vpop.permute.xlu0 %1093
        %1095 = vrot.lane.b32.xlu0 %v765, 32
        %v1096 = vpop.permute.xlu0 %1095
        %1097 = vrot.lane.b32.xlu0 %v766, 32
        %v1098 = vpop.permute.xlu0 %1097
        %1099 = vrot.lane.b32.xlu0 %v767, 32
        %v1100 = vpop.permute.xlu0 %1099
        %1101 = vrot.lane.b32.xlu0 %v768, 32
        %v1102 = vpop.permute.xlu0 %1101
        %1103 = vrot.lane.b32.xlu0 %v769, 32
        %v1104 = vpop.permute.xlu0 %1103
        %1105 = vrot.lane.b32.xlu0 %v770, 32
        %v1106 = vpop.permute.xlu0 %1105
        %1107 = vrot.lane.b32.xlu0 %v771, 32
        %v1108 = vpop.permute.xlu0 %1107
        %1125 = vrot.lane.b32.xlu0 %v805, 64
        %v1126 = vpop.permute.xlu0 %1125
        %1127 = vrot.lane.b32.xlu0 %v806, 64
        %v1128 = vpop.permute.xlu0 %1127
        %1129 = vrot.lane.b32.xlu0 %v807, 64
        %v1130 = vpop.permute.xlu0 %1129
        %1131 = vrot.lane.b32.xlu0 %v808, 64
        %v1132 = vpop.permute.xlu0 %1131
        %1133 = vrot.lane.b32.xlu0 %v809, 64
        %v1134 = vpop.permute.xlu0 %1133
        %1135 = vrot.lane.b32.xlu0 %v810, 64
        %v1136 = vpop.permute.xlu0 %1135
        %1137 = vrot.lane.b32.xlu0 %v811, 64
        %v1138 = vpop.permute.xlu0 %1137
        %1139 = vrot.lane.b32.xlu0 %v812, 64
        %v1140 = vpop.permute.xlu0 %1139
        %1141 = vrot.lane.b32.xlu0 %v813, 64
        %v1142 = vpop.permute.xlu0 %1141
        %1143 = vrot.lane.b32.xlu0 %v814, 64
        %v1144 = vpop.permute.xlu0 %1143
        %1145 = vrot.lane.b32.xlu0 %v815, 64
        %v1146 = vpop.permute.xlu0 %1145
        %1147 = vrot.lane.b32.xlu0 %v816, 64
        %v1148 = vpop.permute.xlu0 %1147
        %1149 = vrot.lane.b32.xlu0 %v817, 64
        %v1150 = vpop.permute.xlu0 %1149
        %1151 = vrot.lane.b32.xlu0 %v818, 64
        %v1152 = vpop.permute.xlu0 %1151
        %1153 = vrot.lane.b32.xlu0 %v819, 64
        %v1154 = vpop.permute.xlu0 %1153
        %1155 = vrot.lane.b32.xlu0 %v820, 64
        %v1156 = vpop.permute.xlu0 %1155
        %1173 = vrot.lane.b32.xlu0 %v853, 96
        %v1174 = vpop.permute.xlu0 %1173
        %1175 = vrot.lane.b32.xlu0 %v854, 96
        %v1176 = vpop.permute.xlu0 %1175
        %1177 = vrot.lane.b32.xlu0 %v855, 96
        %v1178 = vpop.permute.xlu0 %1177
        %1179 = vrot.lane.b32.xlu0 %v856, 96
        %v1180 = vpop.permute.xlu0 %1179
        %1181 = vrot.lane.b32.xlu0 %v857, 96
        %v1182 = vpop.permute.xlu0 %1181
        %1183 = vrot.lane.b32.xlu0 %v858, 96
        %v1184 = vpop.permute.xlu0 %1183
        %1185 = vrot.lane.b32.xlu0 %v859, 96
        %v1186 = vpop.permute.xlu0 %1185
        %1187 = vrot.lane.b32.xlu0 %v860, 96
        %v1188 = vpop.permute.xlu0 %1187
        %1189 = vrot.lane.b32.xlu0 %v861, 96
        %v1190 = vpop.permute.xlu0 %1189
        %1191 = vrot.lane.b32.xlu0 %v862, 96
        %v1192 = vpop.permute.xlu0 %1191
        %1193 = vrot.lane.b32.xlu0 %v863, 96
        %v1194 = vpop.permute.xlu0 %1193
        %1195 = vrot.lane.b32.xlu0 %v864, 96
        %v1196 = vpop.permute.xlu0 %1195
        %1197 = vrot.lane.b32.xlu0 %v865, 96
        %v1198 = vpop.permute.xlu0 %1197
        %1199 = vrot.lane.b32.xlu0 %v866, 96
        %v1200 = vpop.permute.xlu0 %1199
        %1201 = vrot.lane.b32.xlu0 %v867, 96
        %v1202 = vpop.permute.xlu0 %1201
        %1203 = vrot.lane.b32.xlu0 %v868, 96
        %v1204 = vpop.permute.xlu0 %1203
        %vm1205 = vcmask 261120
        %v1208 = vsel %vm1205, %v515, %v934
        %v1211 = vsel %vm1205, %v516, %v936
        %v1214 = vsel %vm1205, %v517, %v938
        %v1217 = vsel %vm1205, %v518, %v940
        %v1220 = vsel %vm1205, %v519, %v942
        %v1223 = vsel %vm1205, %v520, %v944
        %v1226 = vsel %vm1205, %v521, %v946
        %v1229 = vsel %vm1205, %v522, %v948
        %v1232 = vsel %vm1205, %v523, %v950
        %v1235 = vsel %vm1205, %v524, %v952
        %v1238 = vsel %vm1205, %v525, %v954
        %v1241 = vsel %vm1205, %v526, %v956
        %v1244 = vsel %vm1205, %v527, %v958
        %v1247 = vsel %vm1205, %v528, %v960
        %v1250 = vsel %vm1205, %v529, %v962
        %v1253 = vsel %vm1205, %v530, %v964
        %vm1254 = vcmask 523264
        %v1256 = vsel %vm1254, %v1208, %v982
        %v1258 = vsel %vm1254, %v1211, %v984
        %v1260 = vsel %vm1254, %v1214, %v986
        %v1262 = vsel %vm1254, %v1217, %v988
        %v1264 = vsel %vm1254, %v1220, %v990
        %v1266 = vsel %vm1254, %v1223, %v992
        %v1268 = vsel %vm1254, %v1226, %v994
        %v1270 = vsel %vm1254, %v1229, %v996
        %v1272 = vsel %vm1254, %v1232, %v998
        %v1274 = vsel %vm1254, %v1235, %v1000
        %v1276 = vsel %vm1254, %v1238, %v1002
        %v1278 = vsel %vm1254, %v1241, %v1004
        %v1280 = vsel %vm1254, %v1244, %v1006
        %v1282 = vsel %vm1254, %v1247, %v1008
        %v1284 = vsel %vm1254, %v1250, %v1010
        %v1286 = vsel %vm1254, %v1253, %v1012
        %vm1287 = vcmask 785408
        %v1289 = vsel %vm1287, %v1256, %v1030
        %v1292 = vsel %vm1287, %v1258, %v1032
        %v1295 = vsel %vm1287, %v1260, %v1034
        %v1298 = vsel %vm1287, %v1262, %v1036
        %v1301 = vsel %vm1287, %v1264, %v1038
        %v1304 = vsel %vm1287, %v1266, %v1040
        %v1307 = vsel %vm1287, %v1268, %v1042
        %v1310 = vsel %vm1287, %v1270, %v1044
        %v1313 = vsel %vm1287, %v1272, %v1046
        %v1316 = vsel %vm1287, %v1274, %v1048
        %v1319 = vsel %vm1287, %v1276, %v1050
        %v1322 = vsel %vm1287, %v1278, %v1052
        %v1325 = vsel %vm1287, %v1280, %v1054
        %v1328 = vsel %vm1287, %v1282, %v1056
        %v1331 = vsel %vm1287, %v1284, %v1058
        %v1334 = vsel %vm1287, %v1286, %v1060
        %v1338 = vsel %vm1205, %v708, %v1078
        %v1341 = vsel %vm1205, %v709, %v1080
        %v1344 = vsel %vm1205, %v710, %v1082
        %v1347 = vsel %vm1205, %v711, %v1084
        %v1350 = vsel %vm1205, %v712, %v1086
        %v1353 = vsel %vm1205, %v713, %v1088
        %v1356 = vsel %vm1205, %v714, %v1090
        %v1359 = vsel %vm1205, %v715, %v1092
        %v1362 = vsel %vm1205, %v716, %v1094
        %v1365 = vsel %vm1205, %v717, %v1096
        %v1368 = vsel %vm1205, %v718, %v1098
        %v1371 = vsel %vm1205, %v719, %v1100
        %v1374 = vsel %vm1205, %v720, %v1102
        %v1377 = vsel %vm1205, %v721, %v1104
        %v1380 = vsel %vm1205, %v722, %v1106
        %v1383 = vsel %vm1205, %v723, %v1108
        %v1385 = vsel %vm1254, %v1338, %v1126
        %v1387 = vsel %vm1254, %v1341, %v1128
        %v1389 = vsel %vm1254, %v1344, %v1130
        %v1391 = vsel %vm1254, %v1347, %v1132
        %v1393 = vsel %vm1254, %v1350, %v1134
        %v1395 = vsel %vm1254, %v1353, %v1136
        %v1397 = vsel %vm1254, %v1356, %v1138
        %v1399 = vsel %vm1254, %v1359, %v1140
        %v1401 = vsel %vm1254, %v1362, %v1142
        %v1403 = vsel %vm1254, %v1365, %v1144
        %v1405 = vsel %vm1254, %v1368, %v1146
        %v1407 = vsel %vm1254, %v1371, %v1148
        %v1409 = vsel %vm1254, %v1374, %v1150
        %v1411 = vsel %vm1254, %v1377, %v1152
        %v1413 = vsel %vm1254, %v1380, %v1154
        %v1415 = vsel %vm1254, %v1383, %v1156
        %v1417 = vsel %vm1287, %v1385, %v1174
        %v1420 = vsel %vm1287, %v1387, %v1176
        %v1423 = vsel %vm1287, %v1389, %v1178
        %v1426 = vsel %vm1287, %v1391, %v1180
        %v1429 = vsel %vm1287, %v1393, %v1182
        %v1432 = vsel %vm1287, %v1395, %v1184
        %v1435 = vsel %vm1287, %v1397, %v1186
        %v1438 = vsel %vm1287, %v1399, %v1188
        %v1441 = vsel %vm1287, %v1401, %v1190
        %v1444 = vsel %vm1287, %v1403, %v1192
        %v1447 = vsel %vm1287, %v1405, %v1194
        %v1450 = vsel %vm1287, %v1407, %v1196
        %v1453 = vsel %vm1287, %v1409, %v1198
        %v1456 = vsel %vm1287, %v1411, %v1200
        %v1459 = vsel %vm1287, %v1413, %v1202
        %v1462 = vsel %vm1287, %v1415, %v1204
        %v1464 = vld [vmem:[%s291] sm:$0xf]
        %v1465 = vld [vmem:[%s291 + $0x4] sm:$0xf]
        %v1466 = vld [vmem:[%s291 + $0x8] sm:$0xf]
        %v1467 = vld [vmem:[%s291 + $0xc] sm:$0xf]
        %v1468 = vld [vmem:[%s291 + $0x10] sm:$0xf]
        %v1469 = vld [vmem:[%s291 + $0x14] sm:$0xf]
        %v1470 = vld [vmem:[%s291 + $0x18] sm:$0xf]
        %v1471 = vld [vmem:[%s291 + $0x1c] sm:$0xf]
        %v1472 = vld [vmem:[%s291 + $0x20] sm:$0xf]
        %v1473 = vld [vmem:[%s291 + $0x24] sm:$0xf]
        %v1474 = vld [vmem:[%s291 + $0x28] sm:$0xf]
        %v1475 = vld [vmem:[%s291 + $0x2c] sm:$0xf]
        %v1476 = vld [vmem:[%s291 + $0x30] sm:$0xf]
        %v1477 = vld [vmem:[%s291 + $0x34] sm:$0xf]
        %v1478 = vld [vmem:[%s291 + $0x38] sm:$0xf]
        %v1479 = vld [vmem:[%s291 + $0x3c] sm:$0xf]
        %v1480 = vld [vmem:[%s291 + $0x40] sm:$0xf]
        %v1481 = vld [vmem:[%s291 + $0x44] sm:$0xf]
        %v1482 = vld [vmem:[%s291 + $0x48] sm:$0xf]
        %v1483 = vld [vmem:[%s291 + $0x4c] sm:$0xf]
        %v1484 = vld [vmem:[%s291 + $0x50] sm:$0xf]
        %v1485 = vld [vmem:[%s291 + $0x54] sm:$0xf]
        %v1486 = vld [vmem:[%s291 + $0x58] sm:$0xf]
        %v1487 = vld [vmem:[%s291 + $0x5c] sm:$0xf]
        %v1488 = vld [vmem:[%s291 + $0x60] sm:$0xf]
        %v1489 = vld [vmem:[%s291 + $0x64] sm:$0xf]
        %v1490 = vld [vmem:[%s291 + $0x68] sm:$0xf]
        %v1491 = vld [vmem:[%s291 + $0x6c] sm:$0xf]
        %v1492 = vld [vmem:[%s291 + $0x70] sm:$0xf]
        %v1493 = vld [vmem:[%s291 + $0x74] sm:$0xf]
        %v1494 = vld [vmem:[%s291 + $0x78] sm:$0xf]
        %v1495 = vld [vmem:[%s291 + $0x7c] sm:$0xf]
        %v1496 = vld [vmem:[%s291 + $0x80] sm:$0xf]
        %v1497 = vld [vmem:[%s291 + $0x84] sm:$0xf]
        %v1498 = vld [vmem:[%s291 + $0x88] sm:$0xf]
        %v1499 = vld [vmem:[%s291 + $0x8c] sm:$0xf]
        %v1500 = vld [vmem:[%s294] sm:$0x1]
        %v1502 = vlaneseq
        %v1503 = vshrl.u32 %v1502, 7
        %v1504 = vsub.s32 0, %v1503
        %v1505 = vrot.slane %v1500, %v1504
        %v1543 = vunpack.c.l.b16 %v1464
        %v1544 = vunpack.c.l.b16 %v1465
        %v1545 = vunpack.c.l.b16 %v1466
        %v1546 = vunpack.c.l.b16 %v1467
        %v1547 = vunpack.c.l.b16 %v1468
        %v1548 = vunpack.c.l.b16 %v1469
        %v1549 = vunpack.c.l.b16 %v1470
        %v1550 = vunpack.c.l.b16 %v1471
        %v1551 = vunpack.c.l.b16 %v1472
        %v1552 = vunpack.c.l.b16 %v1473
        %v1553 = vunpack.c.l.b16 %v1474
        %v1554 = vunpack.c.l.b16 %v1475
        %v1555 = vunpack.c.l.b16 %v1476
        %v1556 = vunpack.c.l.b16 %v1477
        %v1557 = vunpack.c.l.b16 %v1478
        %v1558 = vunpack.c.l.b16 %v1479
        %v1559 = vunpack.c.l.b16 %v1480
        %v1560 = vunpack.c.l.b16 %v1481
        %v1561 = vunpack.c.l.b16 %v1482
        %v1562 = vunpack.c.l.b16 %v1483
        %v1563 = vunpack.c.l.b16 %v1484
        %v1564 = vunpack.c.l.b16 %v1485
        %v1565 = vunpack.c.l.b16 %v1486
        %v1566 = vunpack.c.l.b16 %v1487
        %v1567 = vunpack.c.l.b16 %v1488
        %v1568 = vunpack.c.l.b16 %v1489
        %v1569 = vunpack.c.l.b16 %v1490
        %v1570 = vunpack.c.l.b16 %v1491
        %v1571 = vunpack.c.l.b16 %v1492
        %v1572 = vunpack.c.l.b16 %v1493
        %v1573 = vunpack.c.l.b16 %v1494
        %v1574 = vunpack.c.l.b16 %v1495
        %v1575 = vunpack.c.l.b16 %v1496
        %v1576 = vunpack.c.l.b16 %v1497
        %v1577 = vunpack.c.l.b16 %v1498
        %v1578 = vunpack.c.l.b16 %v1499
        %v1579 = vpack.c.b16 %v1544, %v1543
        %v1580 = vpack.c.b16 %v1546, %v1545
        %v1581 = vpack.c.b16 %v1548, %v1547
        %v1582 = vpack.c.b16 %v1550, %v1549
        %v1583 = vpack.c.b16 %v1552, %v1551
        %v1584 = vpack.c.b16 %v1554, %v1553
        %v1585 = vpack.c.b16 %v1556, %v1555
        %v1586 = vpack.c.b16 %v1558, %v1557
        %v1587 = vpack.c.b16 %v1560, %v1559
        %v1588 = vpack.c.b16 %v1562, %v1561
        %v1589 = vpack.c.b16 %v1564, %v1563
        %v1590 = vpack.c.b16 %v1566, %v1565
        %v1591 = vpack.c.b16 %v1568, %v1567
        %v1592 = vpack.c.b16 %v1570, %v1569
        %v1593 = vpack.c.b16 %v1572, %v1571
        %v1594 = vpack.c.b16 %v1574, %v1573
        %v1595 = vpack.c.b16 %v1576, %v1575
        %v1596 = vpack.c.b16 %v1578, %v1577
        %v1616 = vsel %vm1205, %v901, 0
        %v1619 = vsel %vm1205, %v902, 0
        %v1622 = vsel %vm1205, %v903, 0
        %v1625 = vsel %vm1205, %v904, 0
        %v1628 = vsel %vm1205, %v905, 0
        %v1631 = vsel %vm1205, %v906, 0
        %v1634 = vsel %vm1205, %v907, 0
        %v1637 = vsel %vm1205, %v908, 0
        %v1640 = vsel %vm1205, %v909, 0
        %v1643 = vsel %vm1205, %v910, 0
        %v1646 = vsel %vm1205, %v911, 0
        %v1649 = vsel %vm1205, %v912, 0
        %v1652 = vsel %vm1205, %v913, 0
        %v1655 = vsel %vm1205, %v914, 0
        %v1658 = vsel %vm1205, %v915, 0
        %v1661 = vsel %vm1205, %v916, 0
        %1663 = vmatprep.subr.bf16.mxu0 0
        %1664 = vmatpush1.bf16.msra.mxu0 %v1586
        %1665 = vmatprep.subr.bf16.mxu0 0
        %1666 = vmatpush1.bf16.msra.mxu0 %v1585
        %1667 = vmatprep.subr.bf16.mxu0 0
        %1668 = vmatpush1.bf16.msra.mxu0 %v1584
        %1669 = vmatprep.subr.bf16.mxu0 0
        %1670 = vmatpush1.bf16.msra.mxu0 %v1583
        %1671 = vmatprep.subr.bf16.mxu0 0
        %1672 = vmatpush1.bf16.msra.mxu0 %v1582
        %1673 = vmatprep.subr.bf16.mxu0 0
        %1674 = vmatpush1.bf16.msra.mxu0 %v1581
        %1675 = vmatprep.subr.bf16.mxu0 0
        %1676 = vmatpush1.bf16.msra.mxu0 %v1580
        %1677 = vmatprep.subr.bf16.mxu0 0
        %1678 = vmatpush1.bf16.msra.mxu0 %v1579
        %1679 = vmatprep.subr.bf16.mxu0 0
        %1680 = vmatpush2.bf16.msra.mxu0 %v1594
        %1681 = vmatprep.subr.bf16.mxu0 0
        %1682 = vmatpush2.bf16.msra.mxu0 %v1593
        %1683 = vmatprep.subr.bf16.mxu0 0
        %1684 = vmatpush2.bf16.msra.mxu0 %v1592
        %1685 = vmatprep.subr.bf16.mxu0 0
        %1686 = vmatpush2.bf16.msra.mxu0 %v1591
        %1687 = vmatprep.subr.bf16.mxu0 0
        %1688 = vmatpush2.bf16.msra.mxu0 %v1590
        %1689 = vmatprep.subr.bf16.mxu0 0
        %1690 = vmatpush2.bf16.msra.mxu0 %v1589
        %1691 = vmatprep.subr.bf16.mxu0 0
        %1692 = vmatpush2.bf16.msra.mxu0 %v1588
        %1693 = vmatprep.subr.bf16.mxu0 0
        %1694 = vmatpush2.bf16.msra.mxu0 %v1587
        %1695 = vmatprep.mubr.bf16.mxu0 %v1417
        %1696 = vmatmul.mubr.bf16.gmra.mxu0 %v1289
        %v1697 = vpop.f32.mrf.mxu0
        %v1698 = vadd.f32 %v1505, %v1697
        %v1699 = vpop.f32.mrf.mxu0
        %v1700 = vpop.f32.mrf.mxu0
        %v1701 = vadd.f32 %v1505, %v1700
        %v1702 = vpop.f32.mrf.mxu0
        %1703 = vmatprep.mubr.bf16.mxu0 %v1420
        %1704 = vmatmul.mubr.bf16.gmra.mxu0 %v1292
        %v1705 = vpop.f32.mrf.mxu0
        %v1706 = vadd.f32 %v1505, %v1705
        %v1707 = vpop.f32.mrf.mxu0
        %v1708 = vpop.f32.mrf.mxu0
        %v1709 = vadd.f32 %v1505, %v1708
        %v1710 = vpop.f32.mrf.mxu0
        %1711 = vmatprep.mubr.bf16.mxu0 %v1423
        %1712 = vmatmul.mubr.bf16.gmra.mxu0 %v1295
        %v1713 = vpop.f32.mrf.mxu0
        %v1714 = vadd.f32 %v1505, %v1713
        %v1715 = vpop.f32.mrf.mxu0
        %v1716 = vpop.f32.mrf.mxu0
        %v1717 = vadd.f32 %v1505, %v1716
        %v1718 = vpop.f32.mrf.mxu0
        %1719 = vmatprep.mubr.bf16.mxu0 %v1426
        %1720 = vmatmul.mubr.bf16.gmra.mxu0 %v1298
        %v1721 = vpop.f32.mrf.mxu0
        %v1722 = vadd.f32 %v1505, %v1721
        %v1723 = vpop.f32.mrf.mxu0
        %v1724 = vpop.f32.mrf.mxu0
        %v1725 = vadd.f32 %v1505, %v1724
        %v1726 = vpop.f32.mrf.mxu0
        %1727 = vmatprep.mubr.bf16.mxu0 %v1429
        %1728 = vmatmul.mubr.bf16.gmra.mxu0 %v1301
        %v1729 = vpop.f32.mrf.mxu0
        %v1730 = vadd.f32 %v1505, %v1729
        %v1731 = vpop.f32.mrf.mxu0
        %v1732 = vpop.f32.mrf.mxu0
        %v1733 = vadd.f32 %v1505, %v1732
        %v1734 = vpop.f32.mrf.mxu0
        %1735 = vmatprep.mubr.bf16.mxu0 %v1432
        %1736 = vmatmul.mubr.bf16.gmra.mxu0 %v1304
        %v1737 = vpop.f32.mrf.mxu0
        %v1738 = vadd.f32 %v1505, %v1737
        %v1739 = vpop.f32.mrf.mxu0
        %v1740 = vpop.f32.mrf.mxu0
        %v1741 = vadd.f32 %v1505, %v1740
        %v1742 = vpop.f32.mrf.mxu0
        %1743 = vmatprep.mubr.bf16.mxu0 %v1435
        %1744 = vmatmul.mubr.bf16.gmra.mxu0 %v1307
        %v1745 = vpop.f32.mrf.mxu0
        %v1746 = vadd.f32 %v1505, %v1745
        %v1747 = vpop.f32.mrf.mxu0
        %v1748 = vpop.f32.mrf.mxu0
        %v1749 = vadd.f32 %v1505, %v1748
        %v1750 = vpop.f32.mrf.mxu0
        %1751 = vmatprep.mubr.bf16.mxu0 %v1438
        %1752 = vmatmul.mubr.bf16.gmra.mxu0 %v1310
        %v1753 = vpop.f32.mrf.mxu0
        %v1754 = vadd.f32 %v1505, %v1753
        %v1755 = vpop.f32.mrf.mxu0
        %v1756 = vpop.f32.mrf.mxu0
        %v1757 = vadd.f32 %v1505, %v1756
        %v1758 = vpop.f32.mrf.mxu0
        %1759 = vmatprep.mubr.bf16.mxu0 %v1441
        %1760 = vmatmul.mubr.bf16.gmra.mxu0 %v1313
        %v1761 = vpop.f32.mrf.mxu0
        %v1762 = vadd.f32 %v1505, %v1761
        %v1763 = vpop.f32.mrf.mxu0
        %v1764 = vpop.f32.mrf.mxu0
        %v1765 = vadd.f32 %v1505, %v1764
        %v1766 = vpop.f32.mrf.mxu0
        %1767 = vmatprep.mubr.bf16.mxu0 %v1444
        %1768 = vmatmul.mubr.bf16.gmra.mxu0 %v1316
        %v1769 = vpop.f32.mrf.mxu0
        %v1770 = vadd.f32 %v1505, %v1769
        %v1771 = vpop.f32.mrf.mxu0
        %v1772 = vpop.f32.mrf.mxu0
        %v1773 = vadd.f32 %v1505, %v1772
        %v1774 = vpop.f32.mrf.mxu0
        %1775 = vmatprep.mubr.bf16.mxu0 %v1447
        %1776 = vmatmul.mubr.bf16.gmra.mxu0 %v1319
        %v1777 = vpop.f32.mrf.mxu0
        %v1778 = vadd.f32 %v1505, %v1777
        %v1779 = vpop.f32.mrf.mxu0
        %v1780 = vpop.f32.mrf.mxu0
        %v1781 = vadd.f32 %v1505, %v1780
        %v1782 = vpop.f32.mrf.mxu0
        %1783 = vmatprep.mubr.bf16.mxu0 %v1450
        %1784 = vmatmul.mubr.bf16.gmra.mxu0 %v1322
        %v1785 = vpop.f32.mrf.mxu0
        %v1786 = vadd.f32 %v1505, %v1785
        %v1787 = vpop.f32.mrf.mxu0
        %v1788 = vpop.f32.mrf.mxu0
        %v1789 = vadd.f32 %v1505, %v1788
        %v1790 = vpop.f32.mrf.mxu0
        %1791 = vmatprep.mubr.bf16.mxu0 %v1453
        %1792 = vmatmul.mubr.bf16.gmra.mxu0 %v1325
        %v1793 = vpop.f32.mrf.mxu0
        %v1794 = vadd.f32 %v1505, %v1793
        %v1795 = vpop.f32.mrf.mxu0
        %v1796 = vpop.f32.mrf.mxu0
        %v1797 = vadd.f32 %v1505, %v1796
        %v1798 = vpop.f32.mrf.mxu0
        %1799 = vmatprep.mubr.bf16.mxu0 %v1456
        %1800 = vmatmul.mubr.bf16.gmra.mxu0 %v1328
        %v1801 = vpop.f32.mrf.mxu0
        %v1802 = vadd.f32 %v1505, %v1801
        %v1803 = vpop.f32.mrf.mxu0
        %v1804 = vpop.f32.mrf.mxu0
        %v1805 = vadd.f32 %v1505, %v1804
        %v1806 = vpop.f32.mrf.mxu0
        %1807 = vmatprep.mubr.bf16.mxu0 %v1459
        %1808 = vmatmul.mubr.bf16.gmra.mxu0 %v1331
        %v1809 = vpop.f32.mrf.mxu0
        %v1810 = vadd.f32 %v1505, %v1809
        %v1811 = vpop.f32.mrf.mxu0
        %v1812 = vpop.f32.mrf.mxu0
        %v1813 = vadd.f32 %v1505, %v1812
        %v1814 = vpop.f32.mrf.mxu0
        %1815 = vmatprep.mubr.bf16.mxu0 %v1462
        %1816 = vmatmul.mubr.bf16.gmra.mxu0 %v1334
        %v1817 = vpop.f32.mrf.mxu0
        %v1818 = vadd.f32 %v1505, %v1817
        %v1819 = vpop.f32.mrf.mxu0
        %v1820 = vpop.f32.mrf.mxu0
        %v1821 = vadd.f32 %v1505, %v1820
        %v1822 = vpop.f32.mrf.mxu0
        %1823 = vdwg.mxu0
        %1824 = vmatprep.subr.bf16.mxu0 0
        %1825 = vmatpush1.bf16.msra.mxu0 0
        %1826 = vmatprep.subr.bf16.mxu0 0
        %1827 = vmatpush1.bf16.msra.mxu0 0
        %1828 = vmatprep.subr.bf16.mxu0 0
        %1829 = vmatpush1.bf16.msra.mxu0 0
        %1830 = vmatprep.subr.bf16.mxu0 0
        %1831 = vmatpush1.bf16.msra.mxu0 0
        %1832 = vmatprep.subr.bf16.mxu0 0
        %1833 = vmatpush1.bf16.msra.mxu0 0
        %1834 = vmatprep.subr.bf16.mxu0 0
        %1835 = vmatpush1.bf16.msra.mxu0 0
        %1836 = vmatprep.subr.bf16.mxu0 0
        %1837 = vmatpush1.bf16.msra.mxu0 %v1596
        %1838 = vmatprep.subr.bf16.mxu0 0
        %1839 = vmatpush1.bf16.msra.mxu0 %v1595
        %1840 = vmatprep.subr.bf16.mxu0 0
        %1841 = vmatpush2.bf16.msra.mxu0 0
        %1842 = vmatprep.subr.bf16.mxu0 0
        %1843 = vmatpush2.bf16.msra.mxu0 0
        %1844 = vmatprep.subr.bf16.mxu0 0
        %1845 = vmatpush2.bf16.msra.mxu0 0
        %1846 = vmatprep.subr.bf16.mxu0 0
        %1847 = vmatpush2.bf16.msra.mxu0 0
        %1848 = vmatprep.subr.bf16.mxu0 0
        %1849 = vmatpush2.bf16.msra.mxu0 0
        %1850 = vmatprep.subr.bf16.mxu0 0
        %1851 = vmatpush2.bf16.msra.mxu0 0
        %1852 = vmatprep.subr.bf16.mxu0 0
        %1853 = vmatpush2.bf16.msra.mxu0 0
        %1854 = vmatprep.subr.bf16.mxu0 0
        %1855 = vmatpush2.bf16.msra.mxu0 0
        %1856 = vmatprep.mubr.bf16.mxu0 0
        %1857 = vmatmul.mubr.bf16.gmra.mxu0 %v1616
        %v1858 = vpop.f32.mrf.mxu0
        %v1859 = vadd.f32 %v1698, %v1858
        %v1860 = vpop.f32.mrf.mxu0
        %v1861 = vpop.f32.mrf.mxu0
        %v1862 = vadd.f32 %v1701, %v1861
        %v1863 = vpop.f32.mrf.mxu0
        %1864 = vmatprep.mubr.bf16.mxu0 0
        %1865 = vmatmul.mubr.bf16.gmra.mxu0 %v1619
        %v1866 = vpop.f32.mrf.mxu0
        %v1867 = vadd.f32 %v1706, %v1866
        %v1868 = vpop.f32.mrf.mxu0
        %v1869 = vpop.f32.mrf.mxu0
        %v1870 = vadd.f32 %v1709, %v1869
        %v1871 = vpop.f32.mrf.mxu0
        %1872 = vmatprep.mubr.bf16.mxu0 0
        %1873 = vmatmul.mubr.bf16.gmra.mxu0 %v1622
        %v1874 = vpop.f32.mrf.mxu0
        %v1875 = vadd.f32 %v1714, %v1874
        %v1876 = vpop.f32.mrf.mxu0
        %v1877 = vpop.f32.mrf.mxu0
        %v1878 = vadd.f32 %v1717, %v1877
        %v1879 = vpop.f32.mrf.mxu0
        %1880 = vmatprep.mubr.bf16.mxu0 0
        %1881 = vmatmul.mubr.bf16.gmra.mxu0 %v1625
        %v1882 = vpop.f32.mrf.mxu0
        %v1883 = vadd.f32 %v1722, %v1882
        %v1884 = vpop.f32.mrf.mxu0
        %v1885 = vpop.f32.mrf.mxu0
        %v1886 = vadd.f32 %v1725, %v1885
        %v1887 = vpop.f32.mrf.mxu0
        %1888 = vmatprep.mubr.bf16.mxu0 0
        %1889 = vmatmul.mubr.bf16.gmra.mxu0 %v1628
        %v1890 = vpop.f32.mrf.mxu0
        %v1891 = vadd.f32 %v1730, %v1890
        %v1892 = vpop.f32.mrf.mxu0
        %v1893 = vpop.f32.mrf.mxu0
        %v1894 = vadd.f32 %v1733, %v1893
        %v1895 = vpop.f32.mrf.mxu0
        %1896 = vmatprep.mubr.bf16.mxu0 0
        %1897 = vmatmul.mubr.bf16.gmra.mxu0 %v1631
        %v1898 = vpop.f32.mrf.mxu0
        %v1899 = vadd.f32 %v1738, %v1898
        %v1900 = vpop.f32.mrf.mxu0
        %v1901 = vpop.f32.mrf.mxu0
        %v1902 = vadd.f32 %v1741, %v1901
        %v1903 = vpop.f32.mrf.mxu0
        %1904 = vmatprep.mubr.bf16.mxu0 0
        %1905 = vmatmul.mubr.bf16.gmra.mxu0 %v1634
        %v1906 = vpop.f32.mrf.mxu0
        %v1907 = vadd.f32 %v1746, %v1906
        %v1908 = vpop.f32.mrf.mxu0
        %v1909 = vpop.f32.mrf.mxu0
        %v1910 = vadd.f32 %v1749, %v1909
        %v1911 = vpop.f32.mrf.mxu0
        %1912 = vmatprep.mubr.bf16.mxu0 0
        %1913 = vmatmul.mubr.bf16.gmra.mxu0 %v1637
        %v1914 = vpop.f32.mrf.mxu0
        %v1915 = vadd.f32 %v1754, %v1914
        %v1916 = vpop.f32.mrf.mxu0
        %v1917 = vpop.f32.mrf.mxu0
        %v1918 = vadd.f32 %v1757, %v1917
        %v1919 = vpop.f32.mrf.mxu0
        %1920 = vmatprep.mubr.bf16.mxu0 0
        %1921 = vmatmul.mubr.bf16.gmra.mxu0 %v1640
        %v1922 = vpop.f32.mrf.mxu0
        %v1923 = vadd.f32 %v1762, %v1922
        %v1924 = vpop.f32.mrf.mxu0
        %v1925 = vpop.f32.mrf.mxu0
        %v1926 = vadd.f32 %v1765, %v1925
        %v1927 = vpop.f32.mrf.mxu0
        %1928 = vmatprep.mubr.bf16.mxu0 0
        %1929 = vmatmul.mubr.bf16.gmra.mxu0 %v1643
        %v1930 = vpop.f32.mrf.mxu0
        %v1931 = vadd.f32 %v1770, %v1930
        %v1932 = vpop.f32.mrf.mxu0
        %v1933 = vpop.f32.mrf.mxu0
        %v1934 = vadd.f32 %v1773, %v1933
        %v1935 = vpop.f32.mrf.mxu0
        %1936 = vmatprep.mubr.bf16.mxu0 0
        %1937 = vmatmul.mubr.bf16.gmra.mxu0 %v1646
        %v1938 = vpop.f32.mrf.mxu0
        %v1939 = vadd.f32 %v1778, %v1938
        %v1940 = vpop.f32.mrf.mxu0
        %v1941 = vpop.f32.mrf.mxu0
        %v1942 = vadd.f32 %v1781, %v1941
        %v1943 = vpop.f32.mrf.mxu0
        %1944 = vmatprep.mubr.bf16.mxu0 0
        %1945 = vmatmul.mubr.bf16.gmra.mxu0 %v1649
        %v1946 = vpop.f32.mrf.mxu0
        %v1947 = vadd.f32 %v1786, %v1946
        %v1948 = vpop.f32.mrf.mxu0
        %v1949 = vpop.f32.mrf.mxu0
        %v1950 = vadd.f32 %v1789, %v1949
        %v1951 = vpop.f32.mrf.mxu0
        %1952 = vmatprep.mubr.bf16.mxu0 0
        %1953 = vmatmul.mubr.bf16.gmra.mxu0 %v1652
        %v1954 = vpop.f32.mrf.mxu0
        %v1955 = vadd.f32 %v1794, %v1954
        %v1956 = vpop.f32.mrf.mxu0
        %v1957 = vpop.f32.mrf.mxu0
        %v1958 = vadd.f32 %v1797, %v1957
        %v1959 = vpop.f32.mrf.mxu0
        %1960 = vmatprep.mubr.bf16.mxu0 0
        %1961 = vmatmul.mubr.bf16.gmra.mxu0 %v1655
        %v1962 = vpop.f32.mrf.mxu0
        %v1963 = vadd.f32 %v1802, %v1962
        %v1964 = vpop.f32.mrf.mxu0
        %v1965 = vpop.f32.mrf.mxu0
        %v1966 = vadd.f32 %v1805, %v1965
        %v1967 = vpop.f32.mrf.mxu0
        %1968 = vmatprep.mubr.bf16.mxu0 0
        %1969 = vmatmul.mubr.bf16.gmra.mxu0 %v1658
        %v1970 = vpop.f32.mrf.mxu0
        %v1971 = vadd.f32 %v1810, %v1970
        %v1972 = vpop.f32.mrf.mxu0
        %v1973 = vpop.f32.mrf.mxu0
        %v1974 = vadd.f32 %v1813, %v1973
        %v1975 = vpop.f32.mrf.mxu0
        %1976 = vmatprep.mubr.bf16.mxu0 0
        %1977 = vmatmul.mubr.bf16.gmra.mxu0 %v1661
        %v1978 = vpop.f32.mrf.mxu0
        %v1979 = vadd.f32 %v1818, %v1978
        %v1980 = vpop.f32.mrf.mxu0
        %v1981 = vpop.f32.mrf.mxu0
        %v1982 = vadd.f32 %v1821, %v1981
        %v1983 = vpop.f32.mrf.mxu0
        %1984 = vdwg.mxu0
        %v1985 = vmax.f32 %v1859, 0.0
        %v1986 = vmax.f32 %v1862, 0.0
        %v1987 = vmax.f32 %v1867, 0.0
        %v1988 = vmax.f32 %v1870, 0.0
        %v1989 = vmax.f32 %v1875, 0.0
        %v1990 = vmax.f32 %v1878, 0.0
        %v1991 = vmax.f32 %v1883, 0.0
        %v1992 = vmax.f32 %v1886, 0.0
        %v1993 = vmax.f32 %v1891, 0.0
        %v1994 = vmax.f32 %v1894, 0.0
        %v1995 = vmax.f32 %v1899, 0.0
        %v1996 = vmax.f32 %v1902, 0.0
        %v1997 = vmax.f32 %v1907, 0.0
        %v1998 = vmax.f32 %v1910, 0.0
        %v1999 = vmax.f32 %v1915, 0.0
        %v2000 = vmax.f32 %v1918, 0.0
        %v2001 = vmax.f32 %v1923, 0.0
        %v2002 = vmax.f32 %v1926, 0.0
        %v2003 = vmax.f32 %v1931, 0.0
        %v2004 = vmax.f32 %v1934, 0.0
        %v2005 = vmax.f32 %v1939, 0.0
        %v2006 = vmax.f32 %v1942, 0.0
        %v2007 = vmax.f32 %v1947, 0.0
        %v2008 = vmax.f32 %v1950, 0.0
        %v2009 = vmax.f32 %v1955, 0.0
        %v2010 = vmax.f32 %v1958, 0.0
        %v2011 = vmax.f32 %v1963, 0.0
        %v2012 = vmax.f32 %v1966, 0.0
        %v2013 = vmax.f32 %v1971, 0.0
        %v2014 = vmax.f32 %v1974, 0.0
        %v2015 = vmax.f32 %v1979, 0.0
        %v2016 = vmax.f32 %v1982, 0.0
        %s2017 = scalar_lea.vmem [#allocation3], 24
        %2018 = vst.msk [vmem:[%s2017 + $0x1] sm:$0xff] %vm1205, %v1985
        %2019 = vst.msk [vmem:[%s2017 + $0x9] sm:$0xff] %vm1205, %v1986
        %2020 = vst.msk [vmem:[%s2017 + $0x19] sm:$0xff] %vm1205, %v1987
        %2021 = vst.msk [vmem:[%s2017 + $0x21] sm:$0xff] %vm1205, %v1988
        %2022 = vst.msk [vmem:[%s2017 + $0x31] sm:$0xff] %vm1205, %v1989
        %2023 = vst.msk [vmem:[%s2017 + $0x39] sm:$0xff] %vm1205, %v1990
        %2024 = vst.msk [vmem:[%s2017 + $0x49] sm:$0xff] %vm1205, %v1991
        %2025 = vst.msk [vmem:[%s2017 + $0x51] sm:$0xff] %vm1205, %v1992
        %2026 = vst.msk [vmem:[%s2017 + $0x61] sm:$0xff] %vm1205, %v1993
        %2027 = vst.msk [vmem:[%s2017 + $0x69] sm:$0xff] %vm1205, %v1994
        %2028 = vst.msk [vmem:[%s2017 + $0x79] sm:$0xff] %vm1205, %v1995
        %2029 = vst.msk [vmem:[%s2017 + $0x81] sm:$0xff] %vm1205, %v1996
        %2030 = vst.msk [vmem:[%s2017 + $0x91] sm:$0xff] %vm1205, %v1997
        %2031 = vst.msk [vmem:[%s2017 + $0x99] sm:$0xff] %vm1205, %v1998
        %2032 = vst.msk [vmem:[%s2017 + $0xa9] sm:$0xff] %vm1205, %v1999
        %2033 = vst.msk [vmem:[%s2017 + $0xb1] sm:$0xff] %vm1205, %v2000
        %2034 = vst.msk [vmem:[%s2017 + $0xc1] sm:$0xff] %vm1205, %v2001
        %2035 = vst.msk [vmem:[%s2017 + $0xc9] sm:$0xff] %vm1205, %v2002
        %2036 = vst.msk [vmem:[%s2017 + $0xd9] sm:$0xff] %vm1205, %v2003
        %2037 = vst.msk [vmem:[%s2017 + $0xe1] sm:$0xff] %vm1205, %v2004
        %2038 = vst.msk [vmem:[%s2017 + $0xf1] sm:$0xff] %vm1205, %v2005
        %2039 = vst.msk [vmem:[%s2017 + $0xf9] sm:$0xff] %vm1205, %v2006
        %2040 = vst.msk [vmem:[%s2017 + $0x109] sm:$0xff] %vm1205, %v2007
        %2041 = vst.msk [vmem:[%s2017 + $0x111] sm:$0xff] %vm1205, %v2008
        %2042 = vst.msk [vmem:[%s2017 + $0x121] sm:$0xff] %vm1205, %v2009
        %2043 = vst.msk [vmem:[%s2017 + $0x129] sm:$0xff] %vm1205, %v2010
        %2044 = vst.msk [vmem:[%s2017 + $0x139] sm:$0xff] %vm1205, %v2011
        %2045 = vst.msk [vmem:[%s2017 + $0x141] sm:$0xff] %vm1205, %v2012
        %2046 = vst.msk [vmem:[%s2017 + $0x151] sm:$0xff] %vm1205, %v2013
        %2047 = vst.msk [vmem:[%s2017 + $0x159] sm:$0xff] %vm1205, %v2014
        %2048 = vst.msk [vmem:[%s2017 + $0x169] sm:$0xff] %vm1205, %v2015
        %2049 = vst.msk [vmem:[%s2017 + $0x171] sm:$0xff] %vm1205, %v2016
        %v2050 = vld [vmem:[#allocation3] sm:$0xff]
        %v2051 = vld [vmem:[#allocation3 + $0x8] sm:$0xff]
        %v2052 = vld [vmem:[#allocation3 + $0x18] sm:$0xff]
        %v2053 = vld [vmem:[#allocation3 + $0x20] sm:$0xff]
        %v2054 = vld [vmem:[#allocation3 + $0x30] sm:$0xff]
        %v2055 = vld [vmem:[#allocation3 + $0x38] sm:$0xff]
        %v2056 = vld [vmem:[#allocation3 + $0x48] sm:$0xff]
        %v2057 = vld [vmem:[#allocation3 + $0x50] sm:$0xff]
        %v2058 = vld [vmem:[#allocation3 + $0x60] sm:$0xff]
        %v2059 = vld [vmem:[#allocation3 + $0x68] sm:$0xff]
        %v2060 = vld [vmem:[#allocation3 + $0x78] sm:$0xff]
        %v2061 = vld [vmem:[#allocation3 + $0x80] sm:$0xff]
        %v2062 = vld [vmem:[#allocation3 + $0x90] sm:$0xff]
        %v2063 = vld [vmem:[#allocation3 + $0x98] sm:$0xff]
        %v2064 = vld [vmem:[#allocation3 + $0xa8] sm:$0xff]
        %v2065 = vld [vmem:[#allocation3 + $0xb0] sm:$0xff]
        %v2066 = vld [vmem:[#allocation3 + $0xc0] sm:$0xff]
        %v2067 = vld [vmem:[#allocation3 + $0xc8] sm:$0xff]
        %v2068 = vld [vmem:[#allocation3 + $0xd8] sm:$0xff]
        %v2069 = vld [vmem:[#allocation3 + $0xe0] sm:$0xff]
        %v2070 = vld [vmem:[#allocation3 + $0xf0] sm:$0xff]
        %v2071 = vld [vmem:[#allocation3 + $0xf8] sm:$0xff]
        %v2072 = vld [vmem:[#allocation3 + $0x108] sm:$0xff]
        %v2073 = vld [vmem:[#allocation3 + $0x110] sm:$0xff]
        %v2074 = vld [vmem:[#allocation3 + $0x120] sm:$0xff]
        %v2075 = vld [vmem:[#allocation3 + $0x128] sm:$0xff]
        %v2076 = vld [vmem:[#allocation3 + $0x138] sm:$0xff]
        %v2077 = vld [vmem:[#allocation3 + $0x140] sm:$0xff]
        %v2078 = vld [vmem:[#allocation3 + $0x150] sm:$0xff]
        %v2079 = vld [vmem:[#allocation3 + $0x158] sm:$0xff]
        %v2080 = vld [vmem:[#allocation3 + $0x168] sm:$0xff]
        %v2081 = vld [vmem:[#allocation3 + $0x170] sm:$0xff]
        %v2082 = vpack.c.bf16 %v2051, %v2050
        %v2083 = vpack.c.bf16 %v2053, %v2052
        %v2084 = vpack.c.bf16 %v2055, %v2054
        %v2085 = vpack.c.bf16 %v2057, %v2056
        %v2086 = vpack.c.bf16 %v2059, %v2058
        %v2087 = vpack.c.bf16 %v2061, %v2060
        %v2088 = vpack.c.bf16 %v2063, %v2062
        %v2089 = vpack.c.bf16 %v2065, %v2064
        %v2090 = vpack.c.bf16 %v2067, %v2066
        %v2091 = vpack.c.bf16 %v2069, %v2068
        %v2092 = vpack.c.bf16 %v2071, %v2070
        %v2093 = vpack.c.bf16 %v2073, %v2072
        %v2094 = vpack.c.bf16 %v2075, %v2074
        %v2095 = vpack.c.bf16 %v2077, %v2076
        %v2096 = vpack.c.bf16 %v2079, %v2078
        %v2097 = vpack.c.bf16 %v2081, %v2080
        %v2098 = vld [vmem:[#allocation3 + $0x1] sm:$0xff]
        %v2099 = vld [vmem:[#allocation3 + $0x9] sm:$0xff]
        %v2100 = vld [vmem:[#allocation3 + $0x19] sm:$0xff]
        %v2101 = vld [vmem:[#allocation3 + $0x21] sm:$0xff]
        %v2102 = vld [vmem:[#allocation3 + $0x31] sm:$0xff]
        %v2103 = vld [vmem:[#allocation3 + $0x39] sm:$0xff]
        %v2104 = vld [vmem:[#allocation3 + $0x49] sm:$0xff]
        %v2105 = vld [vmem:[#allocation3 + $0x51] sm:$0xff]
        %v2106 = vld [vmem:[#allocation3 + $0x61] sm:$0xff]
        %v2107 = vld [vmem:[#allocation3 + $0x69] sm:$0xff]
        %v2108 = vld [vmem:[#allocation3 + $0x79] sm:$0xff]
        %v2109 = vld [vmem:[#allocation3 + $0x81] sm:$0xff]
        %v2110 = vld [vmem:[#allocation3 + $0x91] sm:$0xff]
        %v2111 = vld [vmem:[#allocation3 + $0x99] sm:$0xff]
        %v2112 = vld [vmem:[#allocation3 + $0xa9] sm:$0xff]
        %v2113 = vld [vmem:[#allocation3 + $0xb1] sm:$0xff]
        %v2114 = vld [vmem:[#allocation3 + $0xc1] sm:$0xff]
        %v2115 = vld [vmem:[#allocation3 + $0xc9] sm:$0xff]
        %v2116 = vld [vmem:[#allocation3 + $0xd9] sm:$0xff]
        %v2117 = vld [vmem:[#allocation3 + $0xe1] sm:$0xff]
        %v2118 = vld [vmem:[#allocation3 + $0xf1] sm:$0xff]
        %v2119 = vld [vmem:[#allocation3 + $0xf9] sm:$0xff]
        %v2120 = vld [vmem:[#allocation3 + $0x109] sm:$0xff]
        %v2121 = vld [vmem:[#allocation3 + $0x111] sm:$0xff]
        %v2122 = vld [vmem:[#allocation3 + $0x121] sm:$0xff]
        %v2123 = vld [vmem:[#allocation3 + $0x129] sm:$0xff]
        %v2124 = vld [vmem:[#allocation3 + $0x139] sm:$0xff]
        %v2125 = vld [vmem:[#allocation3 + $0x141] sm:$0xff]
        %v2126 = vld [vmem:[#allocation3 + $0x151] sm:$0xff]
        %v2127 = vld [vmem:[#allocation3 + $0x159] sm:$0xff]
        %v2128 = vld [vmem:[#allocation3 + $0x169] sm:$0xff]
        %v2129 = vld [vmem:[#allocation3 + $0x171] sm:$0xff]
        %v2130 = vpack.c.bf16 %v2099, %v2098
        %v2131 = vpack.c.bf16 %v2101, %v2100
        %v2132 = vpack.c.bf16 %v2103, %v2102
        %v2133 = vpack.c.bf16 %v2105, %v2104
        %v2134 = vpack.c.bf16 %v2107, %v2106
        %v2135 = vpack.c.bf16 %v2109, %v2108
        %v2136 = vpack.c.bf16 %v2111, %v2110
        %v2137 = vpack.c.bf16 %v2113, %v2112
        %v2138 = vpack.c.bf16 %v2115, %v2114
        %v2139 = vpack.c.bf16 %v2117, %v2116
        %v2140 = vpack.c.bf16 %v2119, %v2118
        %v2141 = vpack.c.bf16 %v2121, %v2120
        %v2142 = vpack.c.bf16 %v2123, %v2122
        %v2143 = vpack.c.bf16 %v2125, %v2124
        %v2144 = vpack.c.bf16 %v2127, %v2126
        %v2145 = vpack.c.bf16 %v2129, %v2128
        %v2146 = vld [vmem:[#allocation3 + $0x2] sm:$0xff]
        %v2147 = vld [vmem:[#allocation3 + $0xa] sm:$0xff]
        %v2148 = vld [vmem:[#allocation3 + $0x1a] sm:$0xff]
        %v2149 = vld [vmem:[#allocation3 + $0x22] sm:$0xff]
        %v2150 = vld [vmem:[#allocation3 + $0x32] sm:$0xff]
        %v2151 = vld [vmem:[#allocation3 + $0x3a] sm:$0xff]
        %v2152 = vld [vmem:[#allocation3 + $0x4a] sm:$0xff]
        %v2153 = vld [vmem:[#allocation3 + $0x52] sm:$0xff]
        %v2154 = vld [vmem:[#allocation3 + $0x62] sm:$0xff]
        %v2155 = vld [vmem:[#allocation3 + $0x6a] sm:$0xff]
        %v2156 = vld [vmem:[#allocation3 + $0x7a] sm:$0xff]
        %v2157 = vld [vmem:[#allocation3 + $0x82] sm:$0xff]
        %v2158 = vld [vmem:[#allocation3 + $0x92] sm:$0xff]
        %v2159 = vld [vmem:[#allocation3 + $0x9a] sm:$0xff]
        %v2160 = vld [vmem:[#allocation3 + $0xaa] sm:$0xff]
        %v2161 = vld [vmem:[#allocation3 + $0xb2] sm:$0xff]
        %v2162 = vld [vmem:[#allocation3 + $0xc2] sm:$0xff]
        %v2163 = vld [vmem:[#allocation3 + $0xca] sm:$0xff]
        %v2164 = vld [vmem:[#allocation3 + $0xda] sm:$0xff]
        %v2165 = vld [vmem:[#allocation3 + $0xe2] sm:$0xff]
        %v2166 = vld [vmem:[#allocation3 + $0xf2] sm:$0xff]
        %v2167 = vld [vmem:[#allocation3 + $0xfa] sm:$0xff]
        %v2168 = vld [vmem:[#allocation3 + $0x10a] sm:$0xff]
        %v2169 = vld [vmem:[#allocation3 + $0x112] sm:$0xff]
        %v2170 = vld [vmem:[#allocation3 + $0x122] sm:$0xff]
        %v2171 = vld [vmem:[#allocation3 + $0x12a] sm:$0xff]
        %v2172 = vld [vmem:[#allocation3 + $0x13a] sm:$0xff]
        %v2173 = vld [vmem:[#allocation3 + $0x142] sm:$0xff]
        %v2174 = vld [vmem:[#allocation3 + $0x152] sm:$0xff]
        %v2175 = vld [vmem:[#allocation3 + $0x15a] sm:$0xff]
        %v2176 = vld [vmem:[#allocation3 + $0x16a] sm:$0xff]
        %v2177 = vld [vmem:[#allocation3 + $0x172] sm:$0xff]
        %v2178 = vpack.c.bf16 %v2147, %v2146
        %v2179 = vpack.c.bf16 %v2149, %v2148
        %v2180 = vpack.c.bf16 %v2151, %v2150
        %v2181 = vpack.c.bf16 %v2153, %v2152
        %v2182 = vpack.c.bf16 %v2155, %v2154
        %v2183 = vpack.c.bf16 %v2157, %v2156
        %v2184 = vpack.c.bf16 %v2159, %v2158
        %v2185 = vpack.c.bf16 %v2161, %v2160
        %v2186 = vpack.c.bf16 %v2163, %v2162
        %v2187 = vpack.c.bf16 %v2165, %v2164
        %v2188 = vpack.c.bf16 %v2167, %v2166
        %v2189 = vpack.c.bf16 %v2169, %v2168
        %v2190 = vpack.c.bf16 %v2171, %v2170
        %v2191 = vpack.c.bf16 %v2173, %v2172
        %v2192 = vpack.c.bf16 %v2175, %v2174
        %v2193 = vpack.c.bf16 %v2177, %v2176
        %v2194 = vld [vmem:[%s2017] sm:$0xff]
        %v2195 = vld [vmem:[%s2017 + $0x8] sm:$0xff]
        %v2196 = vld [vmem:[%s2017 + $0x18] sm:$0xff]
        %v2197 = vld [vmem:[%s2017 + $0x20] sm:$0xff]
        %v2198 = vld [vmem:[%s2017 + $0x30] sm:$0xff]
        %v2199 = vld [vmem:[%s2017 + $0x38] sm:$0xff]
        %v2200 = vld [vmem:[%s2017 + $0x48] sm:$0xff]
        %v2201 = vld [vmem:[%s2017 + $0x50] sm:$0xff]
        %v2202 = vld [vmem:[%s2017 + $0x60] sm:$0xff]
        %v2203 = vld [vmem:[%s2017 + $0x68] sm:$0xff]
        %v2204 = vld [vmem:[%s2017 + $0x78] sm:$0xff]
        %v2205 = vld [vmem:[%s2017 + $0x80] sm:$0xff]
        %v2206 = vld [vmem:[%s2017 + $0x90] sm:$0xff]
        %v2207 = vld [vmem:[%s2017 + $0x98] sm:$0xff]
        %v2208 = vld [vmem:[%s2017 + $0xa8] sm:$0xff]
        %v2209 = vld [vmem:[%s2017 + $0xb0] sm:$0xff]
        %v2210 = vld [vmem:[%s2017 + $0xc0] sm:$0xff]
        %v2211 = vld [vmem:[%s2017 + $0xc8] sm:$0xff]
        %v2212 = vld [vmem:[%s2017 + $0xd8] sm:$0xff]
        %v2213 = vld [vmem:[%s2017 + $0xe0] sm:$0xff]
        %v2214 = vld [vmem:[%s2017 + $0xf0] sm:$0xff]
        %v2215 = vld [vmem:[%s2017 + $0xf8] sm:$0xff]
        %v2216 = vld [vmem:[%s2017 + $0x108] sm:$0xff]
        %v2217 = vld [vmem:[%s2017 + $0x110] sm:$0xff]
        %v2218 = vld [vmem:[%s2017 + $0x120] sm:$0xff]
        %v2219 = vld [vmem:[%s2017 + $0x128] sm:$0xff]
        %v2220 = vld [vmem:[%s2017 + $0x138] sm:$0xff]
        %v2221 = vld [vmem:[%s2017 + $0x140] sm:$0xff]
        %v2222 = vld [vmem:[%s2017 + $0x150] sm:$0xff]
        %v2223 = vld [vmem:[%s2017 + $0x158] sm:$0xff]
        %v2224 = vld [vmem:[%s2017 + $0x168] sm:$0xff]
        %v2225 = vld [vmem:[%s2017 + $0x170] sm:$0xff]
        %v2226 = vpack.c.bf16 %v2195, %v2194
        %v2227 = vpack.c.bf16 %v2197, %v2196
        %v2228 = vpack.c.bf16 %v2199, %v2198
        %v2229 = vpack.c.bf16 %v2201, %v2200
        %v2230 = vpack.c.bf16 %v2203, %v2202
        %v2231 = vpack.c.bf16 %v2205, %v2204
        %v2232 = vpack.c.bf16 %v2207, %v2206
        %v2233 = vpack.c.bf16 %v2209, %v2208
        %v2234 = vpack.c.bf16 %v2211, %v2210
        %v2235 = vpack.c.bf16 %v2213, %v2212
        %v2236 = vpack.c.bf16 %v2215, %v2214
        %v2237 = vpack.c.bf16 %v2217, %v2216
        %v2238 = vpack.c.bf16 %v2219, %v2218
        %v2239 = vpack.c.bf16 %v2221, %v2220
        %v2240 = vpack.c.bf16 %v2223, %v2222
        %v2241 = vpack.c.bf16 %v2225, %v2224
        %v2242 = vld [vmem:[%s2017 + $0x1] sm:$0xff]
        %v2243 = vld [vmem:[%s2017 + $0x9] sm:$0xff]
        %v2244 = vld [vmem:[%s2017 + $0x19] sm:$0xff]
        %v2245 = vld [vmem:[%s2017 + $0x21] sm:$0xff]
        %v2246 = vld [vmem:[%s2017 + $0x31] sm:$0xff]
        %v2247 = vld [vmem:[%s2017 + $0x39] sm:$0xff]
        %v2248 = vld [vmem:[%s2017 + $0x49] sm:$0xff]
        %v2249 = vld [vmem:[%s2017 + $0x51] sm:$0xff]
        %v2250 = vld [vmem:[%s2017 + $0x61] sm:$0xff]
        %v2251 = vld [vmem:[%s2017 + $0x69] sm:$0xff]
        %v2252 = vld [vmem:[%s2017 + $0x79] sm:$0xff]
        %v2253 = vld [vmem:[%s2017 + $0x81] sm:$0xff]
        %v2254 = vld [vmem:[%s2017 + $0x91] sm:$0xff]
        %v2255 = vld [vmem:[%s2017 + $0x99] sm:$0xff]
        %v2256 = vld [vmem:[%s2017 + $0xa9] sm:$0xff]
        %v2257 = vld [vmem:[%s2017 + $0xb1] sm:$0xff]
        %v2258 = vld [vmem:[%s2017 + $0xc1] sm:$0xff]
        %v2259 = vld [vmem:[%s2017 + $0xc9] sm:$0xff]
        %v2260 = vld [vmem:[%s2017 + $0xd9] sm:$0xff]
        %v2261 = vld [vmem:[%s2017 + $0xe1] sm:$0xff]
        %v2262 = vld [vmem:[%s2017 + $0xf1] sm:$0xff]
        %v2263 = vld [vmem:[%s2017 + $0xf9] sm:$0xff]
        %v2264 = vld [vmem:[%s2017 + $0x109] sm:$0xff]
        %v2265 = vld [vmem:[%s2017 + $0x111] sm:$0xff]
        %v2266 = vld [vmem:[%s2017 + $0x121] sm:$0xff]
        %v2267 = vld [vmem:[%s2017 + $0x129] sm:$0xff]
        %v2268 = vld [vmem:[%s2017 + $0x139] sm:$0xff]
        %v2269 = vld [vmem:[%s2017 + $0x141] sm:$0xff]
        %v2270 = vld [vmem:[%s2017 + $0x151] sm:$0xff]
        %v2271 = vld [vmem:[%s2017 + $0x159] sm:$0xff]
        %v2272 = vld [vmem:[%s2017 + $0x169] sm:$0xff]
        %v2273 = vld [vmem:[%s2017 + $0x171] sm:$0xff]
        %v2274 = vpack.c.bf16 %v2243, %v2242
        %v2275 = vpack.c.bf16 %v2245, %v2244
        %v2276 = vpack.c.bf16 %v2247, %v2246
        %v2277 = vpack.c.bf16 %v2249, %v2248
        %v2278 = vpack.c.bf16 %v2251, %v2250
        %v2279 = vpack.c.bf16 %v2253, %v2252
        %v2280 = vpack.c.bf16 %v2255, %v2254
        %v2281 = vpack.c.bf16 %v2257, %v2256
        %v2282 = vpack.c.bf16 %v2259, %v2258
        %v2283 = vpack.c.bf16 %v2261, %v2260
        %v2284 = vpack.c.bf16 %v2263, %v2262
        %v2285 = vpack.c.bf16 %v2265, %v2264
        %v2286 = vpack.c.bf16 %v2267, %v2266
        %v2287 = vpack.c.bf16 %v2269, %v2268
        %v2288 = vpack.c.bf16 %v2271, %v2270
        %v2289 = vpack.c.bf16 %v2273, %v2272
        %v2290 = vld [vmem:[%s2017 + $0x2] sm:$0xff]
        %v2291 = vld [vmem:[%s2017 + $0xa] sm:$0xff]
        %v2292 = vld [vmem:[%s2017 + $0x1a] sm:$0xff]
        %v2293 = vld [vmem:[%s2017 + $0x22] sm:$0xff]
        %v2294 = vld [vmem:[%s2017 + $0x32] sm:$0xff]
        %v2295 = vld [vmem:[%s2017 + $0x3a] sm:$0xff]
        %v2296 = vld [vmem:[%s2017 + $0x4a] sm:$0xff]
        %v2297 = vld [vmem:[%s2017 + $0x52] sm:$0xff]
        %v2298 = vld [vmem:[%s2017 + $0x62] sm:$0xff]
        %v2299 = vld [vmem:[%s2017 + $0x6a] sm:$0xff]
        %v2300 = vld [vmem:[%s2017 + $0x7a] sm:$0xff]
        %v2301 = vld [vmem:[%s2017 + $0x82] sm:$0xff]
        %v2302 = vld [vmem:[%s2017 + $0x92] sm:$0xff]
        %v2303 = vld [vmem:[%s2017 + $0x9a] sm:$0xff]
        %v2304 = vld [vmem:[%s2017 + $0xaa] sm:$0xff]
        %v2305 = vld [vmem:[%s2017 + $0xb2] sm:$0xff]
        %v2306 = vld [vmem:[%s2017 + $0xc2] sm:$0xff]
        %v2307 = vld [vmem:[%s2017 + $0xca] sm:$0xff]
        %v2308 = vld [vmem:[%s2017 + $0xda] sm:$0xff]
        %v2309 = vld [vmem:[%s2017 + $0xe2] sm:$0xff]
        %v2310 = vld [vmem:[%s2017 + $0xf2] sm:$0xff]
        %v2311 = vld [vmem:[%s2017 + $0xfa] sm:$0xff]
        %v2312 = vld [vmem:[%s2017 + $0x10a] sm:$0xff]
        %v2313 = vld [vmem:[%s2017 + $0x112] sm:$0xff]
        %v2314 = vld [vmem:[%s2017 + $0x122] sm:$0xff]
        %v2315 = vld [vmem:[%s2017 + $0x12a] sm:$0xff]
        %v2316 = vld [vmem:[%s2017 + $0x13a] sm:$0xff]
        %v2317 = vld [vmem:[%s2017 + $0x142] sm:$0xff]
        %v2318 = vld [vmem:[%s2017 + $0x152] sm:$0xff]
        %v2319 = vld [vmem:[%s2017 + $0x15a] sm:$0xff]
        %v2320 = vld [vmem:[%s2017 + $0x16a] sm:$0xff]
        %v2321 = vld [vmem:[%s2017 + $0x172] sm:$0xff]
        %v2322 = vpack.c.bf16 %v2291, %v2290
        %v2323 = vpack.c.bf16 %v2293, %v2292
        %v2324 = vpack.c.bf16 %v2295, %v2294
        %v2325 = vpack.c.bf16 %v2297, %v2296
        %v2326 = vpack.c.bf16 %v2299, %v2298
        %v2327 = vpack.c.bf16 %v2301, %v2300
        %v2328 = vpack.c.bf16 %v2303, %v2302
        %v2329 = vpack.c.bf16 %v2305, %v2304
        %v2330 = vpack.c.bf16 %v2307, %v2306
        %v2331 = vpack.c.bf16 %v2309, %v2308
        %v2332 = vpack.c.bf16 %v2311, %v2310
        %v2333 = vpack.c.bf16 %v2313, %v2312
        %v2334 = vpack.c.bf16 %v2315, %v2314
        %v2335 = vpack.c.bf16 %v2317, %v2316
        %v2336 = vpack.c.bf16 %v2319, %v2318
        %v2337 = vpack.c.bf16 %v2321, %v2320
        %s2338 = scalar_lea.vmem [#allocation3], 48
        %v2339 = vld [vmem:[%s2338] sm:$0xff]
        %v2340 = vld [vmem:[%s2338 + $0x8] sm:$0xff]
        %v2341 = vld [vmem:[%s2338 + $0x18] sm:$0xff]
        %v2342 = vld [vmem:[%s2338 + $0x20] sm:$0xff]
        %v2343 = vld [vmem:[%s2338 + $0x30] sm:$0xff]
        %v2344 = vld [vmem:[%s2338 + $0x38] sm:$0xff]
        %v2345 = vld [vmem:[%s2338 + $0x48] sm:$0xff]
        %v2346 = vld [vmem:[%s2338 + $0x50] sm:$0xff]
        %v2347 = vld [vmem:[%s2338 + $0x60] sm:$0xff]
        %v2348 = vld [vmem:[%s2338 + $0x68] sm:$0xff]
        %v2349 = vld [vmem:[%s2338 + $0x78] sm:$0xff]
        %v2350 = vld [vmem:[%s2338 + $0x80] sm:$0xff]
        %v2351 = vld [vmem:[%s2338 + $0x90] sm:$0xff]
        %v2352 = vld [vmem:[%s2338 + $0x98] sm:$0xff]
        %v2353 = vld [vmem:[%s2338 + $0xa8] sm:$0xff]
        %v2354 = vld [vmem:[%s2338 + $0xb0] sm:$0xff]
        %v2355 = vld [vmem:[%s2338 + $0xc0] sm:$0xff]
        %v2356 = vld [vmem:[%s2338 + $0xc8] sm:$0xff]
        %v2357 = vld [vmem:[%s2338 + $0xd8] sm:$0xff]
        %v2358 = vld [vmem:[%s2338 + $0xe0] sm:$0xff]
        %v2359 = vld [vmem:[%s2338 + $0xf0] sm:$0xff]
        %v2360 = vld [vmem:[%s2338 + $0xf8] sm:$0xff]
        %v2361 = vld [vmem:[%s2338 + $0x108] sm:$0xff]
        %v2362 = vld [vmem:[%s2338 + $0x110] sm:$0xff]
        %v2363 = vld [vmem:[%s2338 + $0x120] sm:$0xff]
        %v2364 = vld [vmem:[%s2338 + $0x128] sm:$0xff]
        %v2365 = vld [vmem:[%s2338 + $0x138] sm:$0xff]
        %v2366 = vld [vmem:[%s2338 + $0x140] sm:$0xff]
        %v2367 = vld [vmem:[%s2338 + $0x150] sm:$0xff]
        %v2368 = vld [vmem:[%s2338 + $0x158] sm:$0xff]
        %v2369 = vld [vmem:[%s2338 + $0x168] sm:$0xff]
        %v2370 = vld [vmem:[%s2338 + $0x170] sm:$0xff]
        %v2371 = vpack.c.bf16 %v2340, %v2339
        %v2372 = vpack.c.bf16 %v2342, %v2341
        %v2373 = vpack.c.bf16 %v2344, %v2343
        %v2374 = vpack.c.bf16 %v2346, %v2345
        %v2375 = vpack.c.bf16 %v2348, %v2347
        %v2376 = vpack.c.bf16 %v2350, %v2349
        %v2377 = vpack.c.bf16 %v2352, %v2351
        %v2378 = vpack.c.bf16 %v2354, %v2353
        %v2379 = vpack.c.bf16 %v2356, %v2355
        %v2380 = vpack.c.bf16 %v2358, %v2357
        %v2381 = vpack.c.bf16 %v2360, %v2359
        %v2382 = vpack.c.bf16 %v2362, %v2361
        %v2383 = vpack.c.bf16 %v2364, %v2363
        %v2384 = vpack.c.bf16 %v2366, %v2365
        %v2385 = vpack.c.bf16 %v2368, %v2367
        %v2386 = vpack.c.bf16 %v2370, %v2369
        %v2387 = vld [vmem:[%s2338 + $0x1] sm:$0xff]
        %v2388 = vld [vmem:[%s2338 + $0x9] sm:$0xff]
        %v2389 = vld [vmem:[%s2338 + $0x19] sm:$0xff]
        %v2390 = vld [vmem:[%s2338 + $0x21] sm:$0xff]
        %v2391 = vld [vmem:[%s2338 + $0x31] sm:$0xff]
        %v2392 = vld [vmem:[%s2338 + $0x39] sm:$0xff]
        %v2393 = vld [vmem:[%s2338 + $0x49] sm:$0xff]
        %v2394 = vld [vmem:[%s2338 + $0x51] sm:$0xff]
        %v2395 = vld [vmem:[%s2338 + $0x61] sm:$0xff]
        %v2396 = vld [vmem:[%s2338 + $0x69] sm:$0xff]
        %v2397 = vld [vmem:[%s2338 + $0x79] sm:$0xff]
        %v2398 = vld [vmem:[%s2338 + $0x81] sm:$0xff]
        %v2399 = vld [vmem:[%s2338 + $0x91] sm:$0xff]
        %v2400 = vld [vmem:[%s2338 + $0x99] sm:$0xff]
        %v2401 = vld [vmem:[%s2338 + $0xa9] sm:$0xff]
        %v2402 = vld [vmem:[%s2338 + $0xb1] sm:$0xff]
        %v2403 = vld [vmem:[%s2338 + $0xc1] sm:$0xff]
        %v2404 = vld [vmem:[%s2338 + $0xc9] sm:$0xff]
        %v2405 = vld [vmem:[%s2338 + $0xd9] sm:$0xff]
        %v2406 = vld [vmem:[%s2338 + $0xe1] sm:$0xff]
        %v2407 = vld [vmem:[%s2338 + $0xf1] sm:$0xff]
        %v2408 = vld [vmem:[%s2338 + $0xf9] sm:$0xff]
        %v2409 = vld [vmem:[%s2338 + $0x109] sm:$0xff]
        %v2410 = vld [vmem:[%s2338 + $0x111] sm:$0xff]
        %v2411 = vld [vmem:[%s2338 + $0x121] sm:$0xff]
        %v2412 = vld [vmem:[%s2338 + $0x129] sm:$0xff]
        %v2413 = vld [vmem:[%s2338 + $0x139] sm:$0xff]
        %v2414 = vld [vmem:[%s2338 + $0x141] sm:$0xff]
        %v2415 = vld [vmem:[%s2338 + $0x151] sm:$0xff]
        %v2416 = vld [vmem:[%s2338 + $0x159] sm:$0xff]
        %v2417 = vld [vmem:[%s2338 + $0x169] sm:$0xff]
        %v2418 = vld [vmem:[%s2338 + $0x171] sm:$0xff]
        %v2419 = vpack.c.bf16 %v2388, %v2387
        %v2420 = vpack.c.bf16 %v2390, %v2389
        %v2421 = vpack.c.bf16 %v2392, %v2391
        %v2422 = vpack.c.bf16 %v2394, %v2393
        %v2423 = vpack.c.bf16 %v2396, %v2395
        %v2424 = vpack.c.bf16 %v2398, %v2397
        %v2425 = vpack.c.bf16 %v2400, %v2399
        %v2426 = vpack.c.bf16 %v2402, %v2401
        %v2427 = vpack.c.bf16 %v2404, %v2403
        %v2428 = vpack.c.bf16 %v2406, %v2405
        %v2429 = vpack.c.bf16 %v2408, %v2407
        %v2430 = vpack.c.bf16 %v2410, %v2409
        %v2431 = vpack.c.bf16 %v2412, %v2411
        %v2432 = vpack.c.bf16 %v2414, %v2413
        %v2433 = vpack.c.bf16 %v2416, %v2415
        %v2434 = vpack.c.bf16 %v2418, %v2417
        %v2435 = vld [vmem:[%s2338 + $0x2] sm:$0xff]
        %v2436 = vld [vmem:[%s2338 + $0xa] sm:$0xff]
        %v2437 = vld [vmem:[%s2338 + $0x1a] sm:$0xff]
        %v2438 = vld [vmem:[%s2338 + $0x22] sm:$0xff]
        %v2439 = vld [vmem:[%s2338 + $0x32] sm:$0xff]
        %v2440 = vld [vmem:[%s2338 + $0x3a] sm:$0xff]
        %v2441 = vld [vmem:[%s2338 + $0x4a] sm:$0xff]
        %v2442 = vld [vmem:[%s2338 + $0x52] sm:$0xff]
        %v2443 = vld [vmem:[%s2338 + $0x62] sm:$0xff]
        %v2444 = vld [vmem:[%s2338 + $0x6a] sm:$0xff]
        %v2445 = vld [vmem:[%s2338 + $0x7a] sm:$0xff]
        %v2446 = vld [vmem:[%s2338 + $0x82] sm:$0xff]
        %v2447 = vld [vmem:[%s2338 + $0x92] sm:$0xff]
        %v2448 = vld [vmem:[%s2338 + $0x9a] sm:$0xff]
        %v2449 = vld [vmem:[%s2338 + $0xaa] sm:$0xff]
        %v2450 = vld [vmem:[%s2338 + $0xb2] sm:$0xff]
        %v2451 = vld [vmem:[%s2338 + $0xc2] sm:$0xff]
        %v2452 = vld [vmem:[%s2338 + $0xca] sm:$0xff]
        %v2453 = vld [vmem:[%s2338 + $0xda] sm:$0xff]
        %v2454 = vld [vmem:[%s2338 + $0xe2] sm:$0xff]
        %v2455 = vld [vmem:[%s2338 + $0xf2] sm:$0xff]
        %v2456 = vld [vmem:[%s2338 + $0xfa] sm:$0xff]
        %v2457 = vld [vmem:[%s2338 + $0x10a] sm:$0xff]
        %v2458 = vld [vmem:[%s2338 + $0x112] sm:$0xff]
        %v2459 = vld [vmem:[%s2338 + $0x122] sm:$0xff]
        %v2460 = vld [vmem:[%s2338 + $0x12a] sm:$0xff]
        %v2461 = vld [vmem:[%s2338 + $0x13a] sm:$0xff]
        %v2462 = vld [vmem:[%s2338 + $0x142] sm:$0xff]
        %v2463 = vld [vmem:[%s2338 + $0x152] sm:$0xff]
        %v2464 = vld [vmem:[%s2338 + $0x15a] sm:$0xff]
        %v2465 = vld [vmem:[%s2338 + $0x16a] sm:$0xff]
        %v2466 = vld [vmem:[%s2338 + $0x172] sm:$0xff]
        %v2467 = vpack.c.bf16 %v2436, %v2435
        %v2468 = vpack.c.bf16 %v2438, %v2437
        %v2469 = vpack.c.bf16 %v2440, %v2439
        %v2470 = vpack.c.bf16 %v2442, %v2441
        %v2471 = vpack.c.bf16 %v2444, %v2443
        %v2472 = vpack.c.bf16 %v2446, %v2445
        %v2473 = vpack.c.bf16 %v2448, %v2447
        %v2474 = vpack.c.bf16 %v2450, %v2449
        %v2475 = vpack.c.bf16 %v2452, %v2451
        %v2476 = vpack.c.bf16 %v2454, %v2453
        %v2477 = vpack.c.bf16 %v2456, %v2455
        %v2478 = vpack.c.bf16 %v2458, %v2457
        %v2479 = vpack.c.bf16 %v2460, %v2459
        %v2480 = vpack.c.bf16 %v2462, %v2461
        %v2481 = vpack.c.bf16 %v2464, %v2463
        %v2482 = vpack.c.bf16 %v2466, %v2465
        %2499 = vrot.lane.b32.xlu0 %v2130, 32
        %v2500 = vpop.permute.xlu0 %2499
        %2501 = vrot.lane.b32.xlu0 %v2131, 32
        %v2502 = vpop.permute.xlu0 %2501
        %2503 = vrot.lane.b32.xlu0 %v2132, 32
        %v2504 = vpop.permute.xlu0 %2503
        %2505 = vrot.lane.b32.xlu0 %v2133, 32
        %v2506 = vpop.permute.xlu0 %2505
        %2507 = vrot.lane.b32.xlu0 %v2134, 32
        %v2508 = vpop.permute.xlu0 %2507
        %2509 = vrot.lane.b32.xlu0 %v2135, 32
        %v2510 = vpop.permute.xlu0 %2509
        %2511 = vrot.lane.b32.xlu0 %v2136, 32
        %v2512 = vpop.permute.xlu0 %2511
        %2513 = vrot.lane.b32.xlu0 %v2137, 32
        %v2514 = vpop.permute.xlu0 %2513
        %2515 = vrot.lane.b32.xlu0 %v2138, 32
        %v2516 = vpop.permute.xlu0 %2515
        %2517 = vrot.lane.b32.xlu0 %v2139, 32
        %v2518 = vpop.permute.xlu0 %2517
        %2519 = vrot.lane.b32.xlu0 %v2140, 32
        %v2520 = vpop.permute.xlu0 %2519
        %2521 = vrot.lane.b32.xlu0 %v2141, 32
        %v2522 = vpop.permute.xlu0 %2521
        %2523 = vrot.lane.b32.xlu0 %v2142, 32
        %v2524 = vpop.permute.xlu0 %2523
        %2525 = vrot.lane.b32.xlu0 %v2143, 32
        %v2526 = vpop.permute.xlu0 %2525
        %2527 = vrot.lane.b32.xlu0 %v2144, 32
        %v2528 = vpop.permute.xlu0 %2527
        %2529 = vrot.lane.b32.xlu0 %v2145, 32
        %v2530 = vpop.permute.xlu0 %2529
        %2547 = vrot.lane.b32.xlu0 %v2178, 64
        %v2548 = vpop.permute.xlu0 %2547
        %2549 = vrot.lane.b32.xlu0 %v2179, 64
        %v2550 = vpop.permute.xlu0 %2549
        %2551 = vrot.lane.b32.xlu0 %v2180, 64
        %v2552 = vpop.permute.xlu0 %2551
        %2553 = vrot.lane.b32.xlu0 %v2181, 64
        %v2554 = vpop.permute.xlu0 %2553
        %2555 = vrot.lane.b32.xlu0 %v2182, 64
        %v2556 = vpop.permute.xlu0 %2555
        %2557 = vrot.lane.b32.xlu0 %v2183, 64
        %v2558 = vpop.permute.xlu0 %2557
        %2559 = vrot.lane.b32.xlu0 %v2184, 64
        %v2560 = vpop.permute.xlu0 %2559
        %2561 = vrot.lane.b32.xlu0 %v2185, 64
        %v2562 = vpop.permute.xlu0 %2561
        %2563 = vrot.lane.b32.xlu0 %v2186, 64
        %v2564 = vpop.permute.xlu0 %2563
        %2565 = vrot.lane.b32.xlu0 %v2187, 64
        %v2566 = vpop.permute.xlu0 %2565
        %2567 = vrot.lane.b32.xlu0 %v2188, 64
        %v2568 = vpop.permute.xlu0 %2567
        %2569 = vrot.lane.b32.xlu0 %v2189, 64
        %v2570 = vpop.permute.xlu0 %2569
        %2571 = vrot.lane.b32.xlu0 %v2190, 64
        %v2572 = vpop.permute.xlu0 %2571
        %2573 = vrot.lane.b32.xlu0 %v2191, 64
        %v2574 = vpop.permute.xlu0 %2573
        %2575 = vrot.lane.b32.xlu0 %v2192, 64
        %v2576 = vpop.permute.xlu0 %2575
        %2577 = vrot.lane.b32.xlu0 %v2193, 64
        %v2578 = vpop.permute.xlu0 %2577
        %2595 = vrot.lane.b32.xlu0 %v2226, 96
        %v2596 = vpop.permute.xlu0 %2595
        %2597 = vrot.lane.b32.xlu0 %v2227, 96
        %v2598 = vpop.permute.xlu0 %2597
        %2599 = vrot.lane.b32.xlu0 %v2228, 96
        %v2600 = vpop.permute.xlu0 %2599
        %2601 = vrot.lane.b32.xlu0 %v2229, 96
        %v2602 = vpop.permute.xlu0 %2601
        %2603 = vrot.lane.b32.xlu0 %v2230, 96
        %v2604 = vpop.permute.xlu0 %2603
        %2605 = vrot.lane.b32.xlu0 %v2231, 96
        %v2606 = vpop.permute.xlu0 %2605
        %2607 = vrot.lane.b32.xlu0 %v2232, 96
        %v2608 = vpop.permute.xlu0 %2607
        %2609 = vrot.lane.b32.xlu0 %v2233, 96
        %v2610 = vpop.permute.xlu0 %2609
        %2611 = vrot.lane.b32.xlu0 %v2234, 96
        %v2612 = vpop.permute.xlu0 %2611
        %2613 = vrot.lane.b32.xlu0 %v2235, 96
        %v2614 = vpop.permute.xlu0 %2613
        %2615 = vrot.lane.b32.xlu0 %v2236, 96
        %v2616 = vpop.permute.xlu0 %2615
        %2617 = vrot.lane.b32.xlu0 %v2237, 96
        %v2618 = vpop.permute.xlu0 %2617
        %2619 = vrot.lane.b32.xlu0 %v2238, 96
        %v2620 = vpop.permute.xlu0 %2619
        %2621 = vrot.lane.b32.xlu0 %v2239, 96
        %v2622 = vpop.permute.xlu0 %2621
        %2623 = vrot.lane.b32.xlu0 %v2240, 96
        %v2624 = vpop.permute.xlu0 %2623
        %2625 = vrot.lane.b32.xlu0 %v2241, 96
        %v2626 = vpop.permute.xlu0 %2625
        %2643 = vrot.lane.b32.xlu0 %v2322, 32
        %v2644 = vpop.permute.xlu0 %2643
        %2645 = vrot.lane.b32.xlu0 %v2323, 32
        %v2646 = vpop.permute.xlu0 %2645
        %2647 = vrot.lane.b32.xlu0 %v2324, 32
        %v2648 = vpop.permute.xlu0 %2647
        %2649 = vrot.lane.b32.xlu0 %v2325, 32
        %v2650 = vpop.permute.xlu0 %2649
        %2651 = vrot.lane.b32.xlu0 %v2326, 32
        %v2652 = vpop.permute.xlu0 %2651
        %2653 = vrot.lane.b32.xlu0 %v2327, 32
        %v2654 = vpop.permute.xlu0 %2653
        %2655 = vrot.lane.b32.xlu0 %v2328, 32
        %v2656 = vpop.permute.xlu0 %2655
        %2657 = vrot.lane.b32.xlu0 %v2329, 32
        %v2658 = vpop.permute.xlu0 %2657
        %2659 = vrot.lane.b32.xlu0 %v2330, 32
        %v2660 = vpop.permute.xlu0 %2659
        %2661 = vrot.lane.b32.xlu0 %v2331, 32
        %v2662 = vpop.permute.xlu0 %2661
        %2663 = vrot.lane.b32.xlu0 %v2332, 32
        %v2664 = vpop.permute.xlu0 %2663
        %2665 = vrot.lane.b32.xlu0 %v2333, 32
        %v2666 = vpop.permute.xlu0 %2665
        %2667 = vrot.lane.b32.xlu0 %v2334, 32
        %v2668 = vpop.permute.xlu0 %2667
        %2669 = vrot.lane.b32.xlu0 %v2335, 32
        %v2670 = vpop.permute.xlu0 %2669
        %2671 = vrot.lane.b32.xlu0 %v2336, 32
        %v2672 = vpop.permute.xlu0 %2671
        %2673 = vrot.lane.b32.xlu0 %v2337, 32
        %v2674 = vpop.permute.xlu0 %2673
        %2691 = vrot.lane.b32.xlu0 %v2371, 64
        %v2692 = vpop.permute.xlu0 %2691
        %2693 = vrot.lane.b32.xlu0 %v2372, 64
        %v2694 = vpop.permute.xlu0 %2693
        %2695 = vrot.lane.b32.xlu0 %v2373, 64
        %v2696 = vpop.permute.xlu0 %2695
        %2697 = vrot.lane.b32.xlu0 %v2374, 64
        %v2698 = vpop.permute.xlu0 %2697
        %2699 = vrot.lane.b32.xlu0 %v2375, 64
        %v2700 = vpop.permute.xlu0 %2699
        %2701 = vrot.lane.b32.xlu0 %v2376, 64
        %v2702 = vpop.permute.xlu0 %2701
        %2703 = vrot.lane.b32.xlu0 %v2377, 64
        %v2704 = vpop.permute.xlu0 %2703
        %2705 = vrot.lane.b32.xlu0 %v2378, 64
        %v2706 = vpop.permute.xlu0 %2705
        %2707 = vrot.lane.b32.xlu0 %v2379, 64
        %v2708 = vpop.permute.xlu0 %2707
        %2709 = vrot.lane.b32.xlu0 %v2380, 64
        %v2710 = vpop.permute.xlu0 %2709
        %2711 = vrot.lane.b32.xlu0 %v2381, 64
        %v2712 = vpop.permute.xlu0 %2711
        %2713 = vrot.lane.b32.xlu0 %v2382, 64
        %v2714 = vpop.permute.xlu0 %2713
        %2715 = vrot.lane.b32.xlu0 %v2383, 64
        %v2716 = vpop.permute.xlu0 %2715
        %2717 = vrot.lane.b32.xlu0 %v2384, 64
        %v2718 = vpop.permute.xlu0 %2717
        %2719 = vrot.lane.b32.xlu0 %v2385, 64
        %v2720 = vpop.permute.xlu0 %2719
        %2721 = vrot.lane.b32.xlu0 %v2386, 64
        %v2722 = vpop.permute.xlu0 %2721
        %2739 = vrot.lane.b32.xlu0 %v2419, 96
        %v2740 = vpop.permute.xlu0 %2739
        %2741 = vrot.lane.b32.xlu0 %v2420, 96
        %v2742 = vpop.permute.xlu0 %2741
        %2743 = vrot.lane.b32.xlu0 %v2421, 96
        %v2744 = vpop.permute.xlu0 %2743
        %2745 = vrot.lane.b32.xlu0 %v2422, 96
        %v2746 = vpop.permute.xlu0 %2745
        %2747 = vrot.lane.b32.xlu0 %v2423, 96
        %v2748 = vpop.permute.xlu0 %2747
        %2749 = vrot.lane.b32.xlu0 %v2424, 96
        %v2750 = vpop.permute.xlu0 %2749
        %2751 = vrot.lane.b32.xlu0 %v2425, 96
        %v2752 = vpop.permute.xlu0 %2751
        %2753 = vrot.lane.b32.xlu0 %v2426, 96
        %v2754 = vpop.permute.xlu0 %2753
        %2755 = vrot.lane.b32.xlu0 %v2427, 96
        %v2756 = vpop.permute.xlu0 %2755
        %2757 = vrot.lane.b32.xlu0 %v2428, 96
        %v2758 = vpop.permute.xlu0 %2757
        %2759 = vrot.lane.b32.xlu0 %v2429, 96
        %v2760 = vpop.permute.xlu0 %2759
        %2761 = vrot.lane.b32.xlu0 %v2430, 96
        %v2762 = vpop.permute.xlu0 %2761
        %2763 = vrot.lane.b32.xlu0 %v2431, 96
        %v2764 = vpop.permute.xlu0 %2763
        %2765 = vrot.lane.b32.xlu0 %v2432, 96
        %v2766 = vpop.permute.xlu0 %2765
        %2767 = vrot.lane.b32.xlu0 %v2433, 96
        %v2768 = vpop.permute.xlu0 %2767
        %2769 = vrot.lane.b32.xlu0 %v2434, 96
        %v2770 = vpop.permute.xlu0 %2769
        %v2773 = vsel %vm1205, %v2082, %v2500
        %v2776 = vsel %vm1205, %v2083, %v2502
        %v2779 = vsel %vm1205, %v2084, %v2504
        %v2782 = vsel %vm1205, %v2085, %v2506
        %v2785 = vsel %vm1205, %v2086, %v2508
        %v2788 = vsel %vm1205, %v2087, %v2510
        %v2791 = vsel %vm1205, %v2088, %v2512
        %v2794 = vsel %vm1205, %v2089, %v2514
        %v2797 = vsel %vm1205, %v2090, %v2516
        %v2800 = vsel %vm1205, %v2091, %v2518
        %v2803 = vsel %vm1205, %v2092, %v2520
        %v2806 = vsel %vm1205, %v2093, %v2522
        %v2809 = vsel %vm1205, %v2094, %v2524
        %v2812 = vsel %vm1205, %v2095, %v2526
        %v2815 = vsel %vm1205, %v2096, %v2528
        %v2818 = vsel %vm1205, %v2097, %v2530
        %v2820 = vsel %vm1254, %v2773, %v2548
        %v2822 = vsel %vm1254, %v2776, %v2550
        %v2824 = vsel %vm1254, %v2779, %v2552
        %v2826 = vsel %vm1254, %v2782, %v2554
        %v2828 = vsel %vm1254, %v2785, %v2556
        %v2830 = vsel %vm1254, %v2788, %v2558
        %v2832 = vsel %vm1254, %v2791, %v2560
        %v2834 = vsel %vm1254, %v2794, %v2562
        %v2836 = vsel %vm1254, %v2797, %v2564
        %v2838 = vsel %vm1254, %v2800, %v2566
        %v2840 = vsel %vm1254, %v2803, %v2568
        %v2842 = vsel %vm1254, %v2806, %v2570
        %v2844 = vsel %vm1254, %v2809, %v2572
        %v2846 = vsel %vm1254, %v2812, %v2574
        %v2848 = vsel %vm1254, %v2815, %v2576
        %v2850 = vsel %vm1254, %v2818, %v2578
        %v2852 = vsel %vm1287, %v2820, %v2596
        %v2855 = vsel %vm1287, %v2822, %v2598
        %v2858 = vsel %vm1287, %v2824, %v2600
        %v2861 = vsel %vm1287, %v2826, %v2602
        %v2864 = vsel %vm1287, %v2828, %v2604
        %v2867 = vsel %vm1287, %v2830, %v2606
        %v2870 = vsel %vm1287, %v2832, %v2608
        %v2873 = vsel %vm1287, %v2834, %v2610
        %v2876 = vsel %vm1287, %v2836, %v2612
        %v2879 = vsel %vm1287, %v2838, %v2614
        %v2882 = vsel %vm1287, %v2840, %v2616
        %v2885 = vsel %vm1287, %v2842, %v2618
        %v2888 = vsel %vm1287, %v2844, %v2620
        %v2891 = vsel %vm1287, %v2846, %v2622
        %v2894 = vsel %vm1287, %v2848, %v2624
        %v2897 = vsel %vm1287, %v2850, %v2626
        %v2901 = vsel %vm1205, %v2274, %v2644
        %v2904 = vsel %vm1205, %v2275, %v2646
        %v2907 = vsel %vm1205, %v2276, %v2648
        %v2910 = vsel %vm1205, %v2277, %v2650
        %v2913 = vsel %vm1205, %v2278, %v2652
        %v2916 = vsel %vm1205, %v2279, %v2654
        %v2919 = vsel %vm1205, %v2280, %v2656
        %v2922 = vsel %vm1205, %v2281, %v2658
        %v2925 = vsel %vm1205, %v2282, %v2660
        %v2928 = vsel %vm1205, %v2283, %v2662
        %v2931 = vsel %vm1205, %v2284, %v2664
        %v2934 = vsel %vm1205, %v2285, %v2666
        %v2937 = vsel %vm1205, %v2286, %v2668
        %v2940 = vsel %vm1205, %v2287, %v2670
        %v2943 = vsel %vm1205, %v2288, %v2672
        %v2946 = vsel %vm1205, %v2289, %v2674
        %v2948 = vsel %vm1254, %v2901, %v2692
        %v2950 = vsel %vm1254, %v2904, %v2694
        %v2952 = vsel %vm1254, %v2907, %v2696
        %v2954 = vsel %vm1254, %v2910, %v2698
        %v2956 = vsel %vm1254, %v2913, %v2700
        %v2958 = vsel %vm1254, %v2916, %v2702
        %v2960 = vsel %vm1254, %v2919, %v2704
        %v2962 = vsel %vm1254, %v2922, %v2706
        %v2964 = vsel %vm1254, %v2925, %v2708
        %v2966 = vsel %vm1254, %v2928, %v2710
        %v2968 = vsel %vm1254, %v2931, %v2712
        %v2970 = vsel %vm1254, %v2934, %v2714
        %v2972 = vsel %vm1254, %v2937, %v2716
        %v2974 = vsel %vm1254, %v2940, %v2718
        %v2976 = vsel %vm1254, %v2943, %v2720
        %v2978 = vsel %vm1254, %v2946, %v2722
        %v2980 = vsel %vm1287, %v2948, %v2740
        %v2983 = vsel %vm1287, %v2950, %v2742
        %v2986 = vsel %vm1287, %v2952, %v2744
        %v2989 = vsel %vm1287, %v2954, %v2746
        %v2992 = vsel %vm1287, %v2956, %v2748
        %v2995 = vsel %vm1287, %v2958, %v2750
        %v2998 = vsel %vm1287, %v2960, %v2752
        %v3001 = vsel %vm1287, %v2962, %v2754
        %v3004 = vsel %vm1287, %v2964, %v2756
        %v3007 = vsel %vm1287, %v2966, %v2758
        %v3010 = vsel %vm1287, %v2968, %v2760
        %v3013 = vsel %vm1287, %v2970, %v2762
        %v3016 = vsel %vm1287, %v2972, %v2764
        %v3019 = vsel %vm1287, %v2974, %v2766
        %v3022 = vsel %vm1287, %v2976, %v2768
        %v3025 = vsel %vm1287, %v2978, %v2770
        %v3027 = vld [vmem:[%s299] sm:$0xf]
        %v3028 = vld [vmem:[%s299 + $0x4] sm:$0xf]
        %v3029 = vld [vmem:[%s299 + $0x8] sm:$0xf]
        %v3030 = vld [vmem:[%s299 + $0xc] sm:$0xf]
        %v3031 = vld [vmem:[%s299 + $0x10] sm:$0xf]
        %v3032 = vld [vmem:[%s299 + $0x14] sm:$0xf]
        %v3033 = vld [vmem:[%s299 + $0x18] sm:$0xf]
        %v3034 = vld [vmem:[%s299 + $0x1c] sm:$0xf]
        %v3035 = vld [vmem:[%s299 + $0x20] sm:$0xf]
        %v3036 = vld [vmem:[%s299 + $0x24] sm:$0xf]
        %v3037 = vld [vmem:[%s299 + $0x28] sm:$0xf]
        %v3038 = vld [vmem:[%s299 + $0x2c] sm:$0xf]
        %v3039 = vld [vmem:[%s299 + $0x30] sm:$0xf]
        %v3040 = vld [vmem:[%s299 + $0x34] sm:$0xf]
        %v3041 = vld [vmem:[%s299 + $0x38] sm:$0xf]
        %v3042 = vld [vmem:[%s299 + $0x3c] sm:$0xf]
        %v3043 = vld [vmem:[%s299 + $0x40] sm:$0xf]
        %v3044 = vld [vmem:[%s299 + $0x44] sm:$0xf]
        %v3045 = vld [vmem:[%s299 + $0x48] sm:$0xf]
        %v3046 = vld [vmem:[%s299 + $0x4c] sm:$0xf]
        %v3047 = vld [vmem:[%s299 + $0x50] sm:$0xf]
        %v3048 = vld [vmem:[%s299 + $0x54] sm:$0xf]
        %v3049 = vld [vmem:[%s299 + $0x58] sm:$0xf]
        %v3050 = vld [vmem:[%s299 + $0x5c] sm:$0xf]
        %v3051 = vld [vmem:[%s299 + $0x60] sm:$0xf]
        %v3052 = vld [vmem:[%s299 + $0x64] sm:$0xf]
        %v3053 = vld [vmem:[%s299 + $0x68] sm:$0xf]
        %v3054 = vld [vmem:[%s299 + $0x6c] sm:$0xf]
        %v3055 = vld [vmem:[%s299 + $0x70] sm:$0xf]
        %v3056 = vld [vmem:[%s299 + $0x74] sm:$0xf]
        %v3057 = vld [vmem:[%s299 + $0x78] sm:$0xf]
        %v3058 = vld [vmem:[%s299 + $0x7c] sm:$0xf]
        %v3059 = vld [vmem:[%s299 + $0x80] sm:$0xf]
        %v3060 = vld [vmem:[%s299 + $0x84] sm:$0xf]
        %v3061 = vld [vmem:[%s299 + $0x88] sm:$0xf]
        %v3062 = vld [vmem:[%s299 + $0x8c] sm:$0xf]
        %v3063 = vld [vmem:[%s302] sm:$0x1]
        %v3065 = vlaneseq
        %v3066 = vshrl.u32 %v3065, 7
        %v3067 = vsub.s32 0, %v3066
        %v3068 = vrot.slane %v3063, %v3067
        %v3106 = vunpack.c.l.b16 %v3027
        %v3107 = vunpack.c.l.b16 %v3028
        %v3108 = vunpack.c.l.b16 %v3029
        %v3109 = vunpack.c.l.b16 %v3030
        %v3110 = vunpack.c.l.b16 %v3031
        %v3111 = vunpack.c.l.b16 %v3032
        %v3112 = vunpack.c.l.b16 %v3033
        %v3113 = vunpack.c.l.b16 %v3034
        %v3114 = vunpack.c.l.b16 %v3035
        %v3115 = vunpack.c.l.b16 %v3036
        %v3116 = vunpack.c.l.b16 %v3037
        %v3117 = vunpack.c.l.b16 %v3038
        %v3118 = vunpack.c.l.b16 %v3039
        %v3119 = vunpack.c.l.b16 %v3040
        %v3120 = vunpack.c.l.b16 %v3041
        %v3121 = vunpack.c.l.b16 %v3042
        %v3122 = vunpack.c.l.b16 %v3043
        %v3123 = vunpack.c.l.b16 %v3044
        %v3124 = vunpack.c.l.b16 %v3045
        %v3125 = vunpack.c.l.b16 %v3046
        %v3126 = vunpack.c.l.b16 %v3047
        %v3127 = vunpack.c.l.b16 %v3048
        %v3128 = vunpack.c.l.b16 %v3049
        %v3129 = vunpack.c.l.b16 %v3050
        %v3130 = vunpack.c.l.b16 %v3051
        %v3131 = vunpack.c.l.b16 %v3052
        %v3132 = vunpack.c.l.b16 %v3053
        %v3133 = vunpack.c.l.b16 %v3054
        %v3134 = vunpack.c.l.b16 %v3055
        %v3135 = vunpack.c.l.b16 %v3056
        %v3136 = vunpack.c.l.b16 %v3057
        %v3137 = vunpack.c.l.b16 %v3058
        %v3138 = vunpack.c.l.b16 %v3059
        %v3139 = vunpack.c.l.b16 %v3060
        %v3140 = vunpack.c.l.b16 %v3061
        %v3141 = vunpack.c.l.b16 %v3062
        %v3142 = vpack.c.b16 %v3107, %v3106
        %v3143 = vpack.c.b16 %v3109, %v3108
        %v3144 = vpack.c.b16 %v3111, %v3110
        %v3145 = vpack.c.b16 %v3113, %v3112
        %v3146 = vpack.c.b16 %v3115, %v3114
        %v3147 = vpack.c.b16 %v3117, %v3116
        %v3148 = vpack.c.b16 %v3119, %v3118
        %v3149 = vpack.c.b16 %v3121, %v3120
        %v3150 = vpack.c.b16 %v3123, %v3122
        %v3151 = vpack.c.b16 %v3125, %v3124
        %v3152 = vpack.c.b16 %v3127, %v3126
        %v3153 = vpack.c.b16 %v3129, %v3128
        %v3154 = vpack.c.b16 %v3131, %v3130
        %v3155 = vpack.c.b16 %v3133, %v3132
        %v3156 = vpack.c.b16 %v3135, %v3134
        %v3157 = vpack.c.b16 %v3137, %v3136
        %v3158 = vpack.c.b16 %v3139, %v3138
        %v3159 = vpack.c.b16 %v3141, %v3140
        %v3179 = vsel %vm1205, %v2467, 0
        %v3182 = vsel %vm1205, %v2468, 0
        %v3185 = vsel %vm1205, %v2469, 0
        %v3188 = vsel %vm1205, %v2470, 0
        %v3191 = vsel %vm1205, %v2471, 0
        %v3194 = vsel %vm1205, %v2472, 0
        %v3197 = vsel %vm1205, %v2473, 0
        %v3200 = vsel %vm1205, %v2474, 0
        %v3203 = vsel %vm1205, %v2475, 0
        %v3206 = vsel %vm1205, %v2476, 0
        %v3209 = vsel %vm1205, %v2477, 0
        %v3212 = vsel %vm1205, %v2478, 0
        %v3215 = vsel %vm1205, %v2479, 0
        %v3218 = vsel %vm1205, %v2480, 0
        %v3221 = vsel %vm1205, %v2481, 0
        %v3224 = vsel %vm1205, %v2482, 0
        %3226 = vmatprep.subr.bf16.mxu0 0
        %3227 = vmatpush1.bf16.msra.mxu0 %v3149
        %3228 = vmatprep.subr.bf16.mxu0 0
        %3229 = vmatpush1.bf16.msra.mxu0 %v3148
        %3230 = vmatprep.subr.bf16.mxu0 0
        %3231 = vmatpush1.bf16.msra.mxu0 %v3147
        %3232 = vmatprep.subr.bf16.mxu0 0
        %3233 = vmatpush1.bf16.msra.mxu0 %v3146
        %3234 = vmatprep.subr.bf16.mxu0 0
        %3235 = vmatpush1.bf16.msra.mxu0 %v3145
        %3236 = vmatprep.subr.bf16.mxu0 0
        %3237 = vmatpush1.bf16.msra.mxu0 %v3144
        %3238 = vmatprep.subr.bf16.mxu0 0
        %3239 = vmatpush1.bf16.msra.mxu0 %v3143
        %3240 = vmatprep.subr.bf16.mxu0 0
        %3241 = vmatpush1.bf16.msra.mxu0 %v3142
        %3242 = vmatprep.subr.bf16.mxu0 0
        %3243 = vmatpush2.bf16.msra.mxu0 %v3157
        %3244 = vmatprep.subr.bf16.mxu0 0
        %3245 = vmatpush2.bf16.msra.mxu0 %v3156
        %3246 = vmatprep.subr.bf16.mxu0 0
        %3247 = vmatpush2.bf16.msra.mxu0 %v3155
        %3248 = vmatprep.subr.bf16.mxu0 0
        %3249 = vmatpush2.bf16.msra.mxu0 %v3154
        %3250 = vmatprep.subr.bf16.mxu0 0
        %3251 = vmatpush2.bf16.msra.mxu0 %v3153
        %3252 = vmatprep.subr.bf16.mxu0 0
        %3253 = vmatpush2.bf16.msra.mxu0 %v3152
        %3254 = vmatprep.subr.bf16.mxu0 0
        %3255 = vmatpush2.bf16.msra.mxu0 %v3151
        %3256 = vmatprep.subr.bf16.mxu0 0
        %3257 = vmatpush2.bf16.msra.mxu0 %v3150
        %3258 = vmatprep.mubr.bf16.mxu0 %v2980
        %3259 = vmatmul.mubr.bf16.gmra.mxu0 %v2852
        %v3260 = vpop.f32.mrf.mxu0
        %v3261 = vadd.f32 %v3068, %v3260
        %v3262 = vpop.f32.mrf.mxu0
        %v3263 = vpop.f32.mrf.mxu0
        %v3264 = vadd.f32 %v3068, %v3263
        %v3265 = vpop.f32.mrf.mxu0
        %3266 = vmatprep.mubr.bf16.mxu0 %v2983
        %3267 = vmatmul.mubr.bf16.gmra.mxu0 %v2855
        %v3268 = vpop.f32.mrf.mxu0
        %v3269 = vadd.f32 %v3068, %v3268
        %v3270 = vpop.f32.mrf.mxu0
        %v3271 = vpop.f32.mrf.mxu0
        %v3272 = vadd.f32 %v3068, %v3271
        %v3273 = vpop.f32.mrf.mxu0
        %3274 = vmatprep.mubr.bf16.mxu0 %v2986
        %3275 = vmatmul.mubr.bf16.gmra.mxu0 %v2858
        %v3276 = vpop.f32.mrf.mxu0
        %v3277 = vadd.f32 %v3068, %v3276
        %v3278 = vpop.f32.mrf.mxu0
        %v3279 = vpop.f32.mrf.mxu0
        %v3280 = vadd.f32 %v3068, %v3279
        %v3281 = vpop.f32.mrf.mxu0
        %3282 = vmatprep.mubr.bf16.mxu0 %v2989
        %3283 = vmatmul.mubr.bf16.gmra.mxu0 %v2861
        %v3284 = vpop.f32.mrf.mxu0
        %v3285 = vadd.f32 %v3068, %v3284
        %v3286 = vpop.f32.mrf.mxu0
        %v3287 = vpop.f32.mrf.mxu0
        %v3288 = vadd.f32 %v3068, %v3287
        %v3289 = vpop.f32.mrf.mxu0
        %3290 = vmatprep.mubr.bf16.mxu0 %v2992
        %3291 = vmatmul.mubr.bf16.gmra.mxu0 %v2864
        %v3292 = vpop.f32.mrf.mxu0
        %v3293 = vadd.f32 %v3068, %v3292
        %v3294 = vpop.f32.mrf.mxu0
        %v3295 = vpop.f32.mrf.mxu0
        %v3296 = vadd.f32 %v3068, %v3295
        %v3297 = vpop.f32.mrf.mxu0
        %3298 = vmatprep.mubr.bf16.mxu0 %v2995
        %3299 = vmatmul.mubr.bf16.gmra.mxu0 %v2867
        %v3300 = vpop.f32.mrf.mxu0
        %v3301 = vadd.f32 %v3068, %v3300
        %v3302 = vpop.f32.mrf.mxu0
        %v3303 = vpop.f32.mrf.mxu0
        %v3304 = vadd.f32 %v3068, %v3303
        %v3305 = vpop.f32.mrf.mxu0
        %3306 = vmatprep.mubr.bf16.mxu0 %v2998
        %3307 = vmatmul.mubr.bf16.gmra.mxu0 %v2870
        %v3308 = vpop.f32.mrf.mxu0
        %v3309 = vadd.f32 %v3068, %v3308
        %v3310 = vpop.f32.mrf.mxu0
        %v3311 = vpop.f32.mrf.mxu0
        %v3312 = vadd.f32 %v3068, %v3311
        %v3313 = vpop.f32.mrf.mxu0
        %3314 = vmatprep.mubr.bf16.mxu0 %v3001
        %3315 = vmatmul.mubr.bf16.gmra.mxu0 %v2873
        %v3316 = vpop.f32.mrf.mxu0
        %v3317 = vadd.f32 %v3068, %v3316
        %v3318 = vpop.f32.mrf.mxu0
        %v3319 = vpop.f32.mrf.mxu0
        %v3320 = vadd.f32 %v3068, %v3319
        %v3321 = vpop.f32.mrf.mxu0
        %3322 = vmatprep.mubr.bf16.mxu0 %v3004
        %3323 = vmatmul.mubr.bf16.gmra.mxu0 %v2876
        %v3324 = vpop.f32.mrf.mxu0
        %v3325 = vadd.f32 %v3068, %v3324
        %v3326 = vpop.f32.mrf.mxu0
        %v3327 = vpop.f32.mrf.mxu0
        %v3328 = vadd.f32 %v3068, %v3327
        %v3329 = vpop.f32.mrf.mxu0
        %3330 = vmatprep.mubr.bf16.mxu0 %v3007
        %3331 = vmatmul.mubr.bf16.gmra.mxu0 %v2879
        %v3332 = vpop.f32.mrf.mxu0
        %v3333 = vadd.f32 %v3068, %v3332
        %v3334 = vpop.f32.mrf.mxu0
        %v3335 = vpop.f32.mrf.mxu0
        %v3336 = vadd.f32 %v3068, %v3335
        %v3337 = vpop.f32.mrf.mxu0
        %3338 = vmatprep.mubr.bf16.mxu0 %v3010
        %3339 = vmatmul.mubr.bf16.gmra.mxu0 %v2882
        %v3340 = vpop.f32.mrf.mxu0
        %v3341 = vadd.f32 %v3068, %v3340
        %v3342 = vpop.f32.mrf.mxu0
        %v3343 = vpop.f32.mrf.mxu0
        %v3344 = vadd.f32 %v3068, %v3343
        %v3345 = vpop.f32.mrf.mxu0
        %3346 = vmatprep.mubr.bf16.mxu0 %v3013
        %3347 = vmatmul.mubr.bf16.gmra.mxu0 %v2885
        %v3348 = vpop.f32.mrf.mxu0
        %v3349 = vadd.f32 %v3068, %v3348
        %v3350 = vpop.f32.mrf.mxu0
        %v3351 = vpop.f32.mrf.mxu0
        %v3352 = vadd.f32 %v3068, %v3351
        %v3353 = vpop.f32.mrf.mxu0
        %3354 = vmatprep.mubr.bf16.mxu0 %v3016
        %3355 = vmatmul.mubr.bf16.gmra.mxu0 %v2888
        %v3356 = vpop.f32.mrf.mxu0
        %v3357 = vadd.f32 %v3068, %v3356
        %v3358 = vpop.f32.mrf.mxu0
        %v3359 = vpop.f32.mrf.mxu0
        %v3360 = vadd.f32 %v3068, %v3359
        %v3361 = vpop.f32.mrf.mxu0
        %3362 = vmatprep.mubr.bf16.mxu0 %v3019
        %3363 = vmatmul.mubr.bf16.gmra.mxu0 %v2891
        %v3364 = vpop.f32.mrf.mxu0
        %v3365 = vadd.f32 %v3068, %v3364
        %v3366 = vpop.f32.mrf.mxu0
        %v3367 = vpop.f32.mrf.mxu0
        %v3368 = vadd.f32 %v3068, %v3367
        %v3369 = vpop.f32.mrf.mxu0
        %3370 = vmatprep.mubr.bf16.mxu0 %v3022
        %3371 = vmatmul.mubr.bf16.gmra.mxu0 %v2894
        %v3372 = vpop.f32.mrf.mxu0
        %v3373 = vadd.f32 %v3068, %v3372
        %v3374 = vpop.f32.mrf.mxu0
        %v3375 = vpop.f32.mrf.mxu0
        %v3376 = vadd.f32 %v3068, %v3375
        %v3377 = vpop.f32.mrf.mxu0
        %3378 = vmatprep.mubr.bf16.mxu0 %v3025
        %3379 = vmatmul.mubr.bf16.gmra.mxu0 %v2897
        %v3380 = vpop.f32.mrf.mxu0
        %v3381 = vadd.f32 %v3068, %v3380
        %v3382 = vpop.f32.mrf.mxu0
        %v3383 = vpop.f32.mrf.mxu0
        %v3384 = vadd.f32 %v3068, %v3383
        %v3385 = vpop.f32.mrf.mxu0
        %3386 = vdwg.mxu0
        %3387 = vmatprep.subr.bf16.mxu0 0
        %3388 = vmatpush1.bf16.msra.mxu0 0
        %3389 = vmatprep.subr.bf16.mxu0 0
        %3390 = vmatpush1.bf16.msra.mxu0 0
        %3391 = vmatprep.subr.bf16.mxu0 0
        %3392 = vmatpush1.bf16.msra.mxu0 0
        %3393 = vmatprep.subr.bf16.mxu0 0
        %3394 = vmatpush1.bf16.msra.mxu0 0
        %3395 = vmatprep.subr.bf16.mxu0 0
        %3396 = vmatpush1.bf16.msra.mxu0 0
        %3397 = vmatprep.subr.bf16.mxu0 0
        %3398 = vmatpush1.bf16.msra.mxu0 0
        %3399 = vmatprep.subr.bf16.mxu0 0
        %3400 = vmatpush1.bf16.msra.mxu0 %v3159
        %3401 = vmatprep.subr.bf16.mxu0 0
        %3402 = vmatpush1.bf16.msra.mxu0 %v3158
        %3403 = vmatprep.subr.bf16.mxu0 0
        %3404 = vmatpush2.bf16.msra.mxu0 0
        %3405 = vmatprep.subr.bf16.mxu0 0
        %3406 = vmatpush2.bf16.msra.mxu0 0
        %3407 = vmatprep.subr.bf16.mxu0 0
        %3408 = vmatpush2.bf16.msra.mxu0 0
        %3409 = vmatprep.subr.bf16.mxu0 0
        %3410 = vmatpush2.bf16.msra.mxu0 0
        %3411 = vmatprep.subr.bf16.mxu0 0
        %3412 = vmatpush2.bf16.msra.mxu0 0
        %3413 = vmatprep.subr.bf16.mxu0 0
        %3414 = vmatpush2.bf16.msra.mxu0 0
        %3415 = vmatprep.subr.bf16.mxu0 0
        %3416 = vmatpush2.bf16.msra.mxu0 0
        %3417 = vmatprep.subr.bf16.mxu0 0
        %3418 = vmatpush2.bf16.msra.mxu0 0
        %3419 = vmatprep.mubr.bf16.mxu0 0
        %3420 = vmatmul.mubr.bf16.gmra.mxu0 %v3179
        %v3421 = vpop.f32.mrf.mxu0
        %v3422 = vadd.f32 %v3261, %v3421
        %v3423 = vpop.f32.mrf.mxu0
        %v3424 = vpop.f32.mrf.mxu0
        %v3425 = vadd.f32 %v3264, %v3424
        %v3426 = vpop.f32.mrf.mxu0
        %3427 = vmatprep.mubr.bf16.mxu0 0
        %3428 = vmatmul.mubr.bf16.gmra.mxu0 %v3182
        %v3429 = vpop.f32.mrf.mxu0
        %v3430 = vadd.f32 %v3269, %v3429
        %v3431 = vpop.f32.mrf.mxu0
        %v3432 = vpop.f32.mrf.mxu0
        %v3433 = vadd.f32 %v3272, %v3432
        %v3434 = vpop.f32.mrf.mxu0
        %3435 = vmatprep.mubr.bf16.mxu0 0
        %3436 = vmatmul.mubr.bf16.gmra.mxu0 %v3185
        %v3437 = vpop.f32.mrf.mxu0
        %v3438 = vadd.f32 %v3277, %v3437
        %v3439 = vpop.f32.mrf.mxu0
        %v3440 = vpop.f32.mrf.mxu0
        %v3441 = vadd.f32 %v3280, %v3440
        %v3442 = vpop.f32.mrf.mxu0
        %3443 = vmatprep.mubr.bf16.mxu0 0
        %3444 = vmatmul.mubr.bf16.gmra.mxu0 %v3188
        %v3445 = vpop.f32.mrf.mxu0
        %v3446 = vadd.f32 %v3285, %v3445
        %v3447 = vpop.f32.mrf.mxu0
        %v3448 = vpop.f32.mrf.mxu0
        %v3449 = vadd.f32 %v3288, %v3448
        %v3450 = vpop.f32.mrf.mxu0
        %3451 = vmatprep.mubr.bf16.mxu0 0
        %3452 = vmatmul.mubr.bf16.gmra.mxu0 %v3191
        %v3453 = vpop.f32.mrf.mxu0
        %v3454 = vadd.f32 %v3293, %v3453
        %v3455 = vpop.f32.mrf.mxu0
        %v3456 = vpop.f32.mrf.mxu0
        %v3457 = vadd.f32 %v3296, %v3456
        %v3458 = vpop.f32.mrf.mxu0
        %3459 = vmatprep.mubr.bf16.mxu0 0
        %3460 = vmatmul.mubr.bf16.gmra.mxu0 %v3194
        %v3461 = vpop.f32.mrf.mxu0
        %v3462 = vadd.f32 %v3301, %v3461
        %v3463 = vpop.f32.mrf.mxu0
        %v3464 = vpop.f32.mrf.mxu0
        %v3465 = vadd.f32 %v3304, %v3464
        %v3466 = vpop.f32.mrf.mxu0
        %3467 = vmatprep.mubr.bf16.mxu0 0
        %3468 = vmatmul.mubr.bf16.gmra.mxu0 %v3197
        %v3469 = vpop.f32.mrf.mxu0
        %v3470 = vadd.f32 %v3309, %v3469
        %v3471 = vpop.f32.mrf.mxu0
        %v3472 = vpop.f32.mrf.mxu0
        %v3473 = vadd.f32 %v3312, %v3472
        %v3474 = vpop.f32.mrf.mxu0
        %3475 = vmatprep.mubr.bf16.mxu0 0
        %3476 = vmatmul.mubr.bf16.gmra.mxu0 %v3200
        %v3477 = vpop.f32.mrf.mxu0
        %v3478 = vadd.f32 %v3317, %v3477
        %v3479 = vpop.f32.mrf.mxu0
        %v3480 = vpop.f32.mrf.mxu0
        %v3481 = vadd.f32 %v3320, %v3480
        %v3482 = vpop.f32.mrf.mxu0
        %3483 = vmatprep.mubr.bf16.mxu0 0
        %3484 = vmatmul.mubr.bf16.gmra.mxu0 %v3203
        %v3485 = vpop.f32.mrf.mxu0
        %v3486 = vadd.f32 %v3325, %v3485
        %v3487 = vpop.f32.mrf.mxu0
        %v3488 = vpop.f32.mrf.mxu0
        %v3489 = vadd.f32 %v3328, %v3488
        %v3490 = vpop.f32.mrf.mxu0
        %3491 = vmatprep.mubr.bf16.mxu0 0
        %3492 = vmatmul.mubr.bf16.gmra.mxu0 %v3206
        %v3493 = vpop.f32.mrf.mxu0
        %v3494 = vadd.f32 %v3333, %v3493
        %v3495 = vpop.f32.mrf.mxu0
        %v3496 = vpop.f32.mrf.mxu0
        %v3497 = vadd.f32 %v3336, %v3496
        %v3498 = vpop.f32.mrf.mxu0
        %3499 = vmatprep.mubr.bf16.mxu0 0
        %3500 = vmatmul.mubr.bf16.gmra.mxu0 %v3209
        %v3501 = vpop.f32.mrf.mxu0
        %v3502 = vadd.f32 %v3341, %v3501
        %v3503 = vpop.f32.mrf.mxu0
        %v3504 = vpop.f32.mrf.mxu0
        %v3505 = vadd.f32 %v3344, %v3504
        %v3506 = vpop.f32.mrf.mxu0
        %3507 = vmatprep.mubr.bf16.mxu0 0
        %3508 = vmatmul.mubr.bf16.gmra.mxu0 %v3212
        %v3509 = vpop.f32.mrf.mxu0
        %v3510 = vadd.f32 %v3349, %v3509
        %v3511 = vpop.f32.mrf.mxu0
        %v3512 = vpop.f32.mrf.mxu0
        %v3513 = vadd.f32 %v3352, %v3512
        %v3514 = vpop.f32.mrf.mxu0
        %3515 = vmatprep.mubr.bf16.mxu0 0
        %3516 = vmatmul.mubr.bf16.gmra.mxu0 %v3215
        %v3517 = vpop.f32.mrf.mxu0
        %v3518 = vadd.f32 %v3357, %v3517
        %v3519 = vpop.f32.mrf.mxu0
        %v3520 = vpop.f32.mrf.mxu0
        %v3521 = vadd.f32 %v3360, %v3520
        %v3522 = vpop.f32.mrf.mxu0
        %3523 = vmatprep.mubr.bf16.mxu0 0
        %3524 = vmatmul.mubr.bf16.gmra.mxu0 %v3218
        %v3525 = vpop.f32.mrf.mxu0
        %v3526 = vadd.f32 %v3365, %v3525
        %v3527 = vpop.f32.mrf.mxu0
        %v3528 = vpop.f32.mrf.mxu0
        %v3529 = vadd.f32 %v3368, %v3528
        %v3530 = vpop.f32.mrf.mxu0
        %3531 = vmatprep.mubr.bf16.mxu0 0
        %3532 = vmatmul.mubr.bf16.gmra.mxu0 %v3221
        %v3533 = vpop.f32.mrf.mxu0
        %v3534 = vadd.f32 %v3373, %v3533
        %v3535 = vpop.f32.mrf.mxu0
        %v3536 = vpop.f32.mrf.mxu0
        %v3537 = vadd.f32 %v3376, %v3536
        %v3538 = vpop.f32.mrf.mxu0
        %3539 = vmatprep.mubr.bf16.mxu0 0
        %3540 = vmatmul.mubr.bf16.gmra.mxu0 %v3224
        %v3541 = vpop.f32.mrf.mxu0
        %v3542 = vadd.f32 %v3381, %v3541
        %v3543 = vpop.f32.mrf.mxu0
        %v3544 = vpop.f32.mrf.mxu0
        %v3545 = vadd.f32 %v3384, %v3544
        %v3546 = vpop.f32.mrf.mxu0
        %3547 = vdwg.mxu0
        %v3548 = vld [vmem:[%s627 + $0x1] sm:$0xff]
        %v3549 = vld [vmem:[%s627 + $0x9] sm:$0xff]
        %v3550 = vld [vmem:[%s627 + $0x19] sm:$0xff]
        %v3551 = vld [vmem:[%s627 + $0x21] sm:$0xff]
        %v3552 = vld [vmem:[%s627 + $0x31] sm:$0xff]
        %v3553 = vld [vmem:[%s627 + $0x39] sm:$0xff]
        %v3554 = vld [vmem:[%s627 + $0x49] sm:$0xff]
        %v3555 = vld [vmem:[%s627 + $0x51] sm:$0xff]
        %v3556 = vld [vmem:[%s627 + $0x61] sm:$0xff]
        %v3557 = vld [vmem:[%s627 + $0x69] sm:$0xff]
        %v3558 = vld [vmem:[%s627 + $0x79] sm:$0xff]
        %v3559 = vld [vmem:[%s627 + $0x81] sm:$0xff]
        %v3560 = vld [vmem:[%s627 + $0x91] sm:$0xff]
        %v3561 = vld [vmem:[%s627 + $0x99] sm:$0xff]
        %v3562 = vld [vmem:[%s627 + $0xa9] sm:$0xff]
        %v3563 = vld [vmem:[%s627 + $0xb1] sm:$0xff]
        %v3564 = vld [vmem:[%s627 + $0xc1] sm:$0xff]
        %v3565 = vld [vmem:[%s627 + $0xc9] sm:$0xff]
        %v3566 = vld [vmem:[%s627 + $0xd9] sm:$0xff]
        %v3567 = vld [vmem:[%s627 + $0xe1] sm:$0xff]
        %v3568 = vld [vmem:[%s627 + $0xf1] sm:$0xff]
        %v3569 = vld [vmem:[%s627 + $0xf9] sm:$0xff]
        %v3570 = vld [vmem:[%s627 + $0x109] sm:$0xff]
        %v3571 = vld [vmem:[%s627 + $0x111] sm:$0xff]
        %v3572 = vld [vmem:[%s627 + $0x121] sm:$0xff]
        %v3573 = vld [vmem:[%s627 + $0x129] sm:$0xff]
        %v3574 = vld [vmem:[%s627 + $0x139] sm:$0xff]
        %v3575 = vld [vmem:[%s627 + $0x141] sm:$0xff]
        %v3576 = vld [vmem:[%s627 + $0x151] sm:$0xff]
        %v3577 = vld [vmem:[%s627 + $0x159] sm:$0xff]
        %v3578 = vld [vmem:[%s627 + $0x169] sm:$0xff]
        %v3579 = vld [vmem:[%s627 + $0x171] sm:$0xff]
        %v3580 = vadd.f32 %v3422, %v3548
        %v3581 = vadd.f32 %v3425, %v3549
        %v3582 = vadd.f32 %v3430, %v3550
        %v3583 = vadd.f32 %v3433, %v3551
        %v3584 = vadd.f32 %v3438, %v3552
        %v3585 = vadd.f32 %v3441, %v3553
        %v3586 = vadd.f32 %v3446, %v3554
        %v3587 = vadd.f32 %v3449, %v3555
        %v3588 = vadd.f32 %v3454, %v3556
        %v3589 = vadd.f32 %v3457, %v3557
        %v3590 = vadd.f32 %v3462, %v3558
        %v3591 = vadd.f32 %v3465, %v3559
        %v3592 = vadd.f32 %v3470, %v3560
        %v3593 = vadd.f32 %v3473, %v3561
        %v3594 = vadd.f32 %v3478, %v3562
        %v3595 = vadd.f32 %v3481, %v3563
        %v3596 = vadd.f32 %v3486, %v3564
        %v3597 = vadd.f32 %v3489, %v3565
        %v3598 = vadd.f32 %v3494, %v3566
        %v3599 = vadd.f32 %v3497, %v3567
        %v3600 = vadd.f32 %v3502, %v3568
        %v3601 = vadd.f32 %v3505, %v3569
        %v3602 = vadd.f32 %v3510, %v3570
        %v3603 = vadd.f32 %v3513, %v3571
        %v3604 = vadd.f32 %v3518, %v3572
        %v3605 = vadd.f32 %v3521, %v3573
        %v3606 = vadd.f32 %v3526, %v3574
        %v3607 = vadd.f32 %v3529, %v3575
        %v3608 = vadd.f32 %v3534, %v3576
        %v3609 = vadd.f32 %v3537, %v3577
        %v3610 = vadd.f32 %v3542, %v3578
        %v3611 = vadd.f32 %v3545, %v3579
        %3612 = vst.msk [vmem:[%s627 + $0x1] sm:$0xff] %vm1205, %v3580
        %3613 = vst.msk [vmem:[%s627 + $0x9] sm:$0xff] %vm1205, %v3581
        %3614 = vst.msk [vmem:[%s627 + $0x19] sm:$0xff] %vm1205, %v3582
        %3615 = vst.msk [vmem:[%s627 + $0x21] sm:$0xff] %vm1205, %v3583
        %3616 = vst.msk [vmem:[%s627 + $0x31] sm:$0xff] %vm1205, %v3584
        %3617 = vst.msk [vmem:[%s627 + $0x39] sm:$0xff] %vm1205, %v3585
        %3618 = vst.msk [vmem:[%s627 + $0x49] sm:$0xff] %vm1205, %v3586
        %3619 = vst.msk [vmem:[%s627 + $0x51] sm:$0xff] %vm1205, %v3587
        %3620 = vst.msk [vmem:[%s627 + $0x61] sm:$0xff] %vm1205, %v3588
        %3621 = vst.msk [vmem:[%s627 + $0x69] sm:$0xff] %vm1205, %v3589
        %3622 = vst.msk [vmem:[%s627 + $0x79] sm:$0xff] %vm1205, %v3590
        %3623 = vst.msk [vmem:[%s627 + $0x81] sm:$0xff] %vm1205, %v3591
        %3624 = vst.msk [vmem:[%s627 + $0x91] sm:$0xff] %vm1205, %v3592
        %3625 = vst.msk [vmem:[%s627 + $0x99] sm:$0xff] %vm1205, %v3593
        %3626 = vst.msk [vmem:[%s627 + $0xa9] sm:$0xff] %vm1205, %v3594
        %3627 = vst.msk [vmem:[%s627 + $0xb1] sm:$0xff] %vm1205, %v3595
        %3628 = vst.msk [vmem:[%s627 + $0xc1] sm:$0xff] %vm1205, %v3596
        %3629 = vst.msk [vmem:[%s627 + $0xc9] sm:$0xff] %vm1205, %v3597
        %3630 = vst.msk [vmem:[%s627 + $0xd9] sm:$0xff] %vm1205, %v3598
        %3631 = vst.msk [vmem:[%s627 + $0xe1] sm:$0xff] %vm1205, %v3599
        %3632 = vst.msk [vmem:[%s627 + $0xf1] sm:$0xff] %vm1205, %v3600
        %3633 = vst.msk [vmem:[%s627 + $0xf9] sm:$0xff] %vm1205, %v3601
        %3634 = vst.msk [vmem:[%s627 + $0x109] sm:$0xff] %vm1205, %v3602
        %3635 = vst.msk [vmem:[%s627 + $0x111] sm:$0xff] %vm1205, %v3603
        %3636 = vst.msk [vmem:[%s627 + $0x121] sm:$0xff] %vm1205, %v3604
        %3637 = vst.msk [vmem:[%s627 + $0x129] sm:$0xff] %vm1205, %v3605
        %3638 = vst.msk [vmem:[%s627 + $0x139] sm:$0xff] %vm1205, %v3606
        %3639 = vst.msk [vmem:[%s627 + $0x141] sm:$0xff] %vm1205, %v3607
        %3640 = vst.msk [vmem:[%s627 + $0x151] sm:$0xff] %vm1205, %v3608
        %3641 = vst.msk [vmem:[%s627 + $0x159] sm:$0xff] %vm1205, %v3609
        %3642 = vst.msk [vmem:[%s627 + $0x169] sm:$0xff] %vm1205, %v3610
        %3643 = vst.msk [vmem:[%s627 + $0x171] sm:$0xff] %vm1205, %v3611
        %p3644 = scmp.eq.s32.totalorder %s24, 1
        // Predicated region
        $region45: #{tpu_custom_call.1} parent=39 // pred_check
          %p3645 = pneg %p3644
        $region46: #{tpu_custom_call.1} parent=39 // pred_check_branch
          %3647 = sbr.rel (%p3645) target = $region48
        $region47: #{tpu_custom_call.1} parent=39 // pred_region
          %3648 = vst.msk [vmem:[%s281] sm:$0xff] %vm1205, %v3580
          %3649 = vst.msk [vmem:[%s281 + $0x8] sm:$0xff] %vm1205, %v3581
          %3650 = vst.msk [vmem:[%s281 + $0x10] sm:$0xff] %vm1205, %v3582
          %3651 = vst.msk [vmem:[%s281 + $0x18] sm:$0xff] %vm1205, %v3583
          %3652 = vst.msk [vmem:[%s281 + $0x20] sm:$0xff] %vm1205, %v3584
          %3653 = vst.msk [vmem:[%s281 + $0x28] sm:$0xff] %vm1205, %v3585
          %3654 = vst.msk [vmem:[%s281 + $0x30] sm:$0xff] %vm1205, %v3586
          %3655 = vst.msk [vmem:[%s281 + $0x38] sm:$0xff] %vm1205, %v3587
          %3656 = vst.msk [vmem:[%s281 + $0x40] sm:$0xff] %vm1205, %v3588
          %3657 = vst.msk [vmem:[%s281 + $0x48] sm:$0xff] %vm1205, %v3589
          %3658 = vst.msk [vmem:[%s281 + $0x50] sm:$0xff] %vm1205, %v3590
          %3659 = vst.msk [vmem:[%s281 + $0x58] sm:$0xff] %vm1205, %v3591
          %3660 = vst.msk [vmem:[%s281 + $0x60] sm:$0xff] %vm1205, %v3592
          %3661 = vst.msk [vmem:[%s281 + $0x68] sm:$0xff] %vm1205, %v3593
          %3662 = vst.msk [vmem:[%s281 + $0x70] sm:$0xff] %vm1205, %v3594
          %3663 = vst.msk [vmem:[%s281 + $0x78] sm:$0xff] %vm1205, %v3595
          %3664 = vst.msk [vmem:[%s281 + $0x80] sm:$0xff] %vm1205, %v3596
          %3665 = vst.msk [vmem:[%s281 + $0x88] sm:$0xff] %vm1205, %v3597
          %3666 = vst.msk [vmem:[%s281 + $0x90] sm:$0xff] %vm1205, %v3598
          %3667 = vst.msk [vmem:[%s281 + $0x98] sm:$0xff] %vm1205, %v3599
          %3668 = vst.msk [vmem:[%s281 + $0xa0] sm:$0xff] %vm1205, %v3600
          %3669 = vst.msk [vmem:[%s281 + $0xa8] sm:$0xff] %vm1205, %v3601
          %3670 = vst.msk [vmem:[%s281 + $0xb0] sm:$0xff] %vm1205, %v3602
          %3671 = vst.msk [vmem:[%s281 + $0xb8] sm:$0xff] %vm1205, %v3603
          %3672 = vst.msk [vmem:[%s281 + $0xc0] sm:$0xff] %vm1205, %v3604
          %3673 = vst.msk [vmem:[%s281 + $0xc8] sm:$0xff] %vm1205, %v3605
          %3674 = vst.msk [vmem:[%s281 + $0xd0] sm:$0xff] %vm1205, %v3606
          %3675 = vst.msk [vmem:[%s281 + $0xd8] sm:$0xff] %vm1205, %v3607
          %3676 = vst.msk [vmem:[%s281 + $0xe0] sm:$0xff] %vm1205, %v3608
          %3677 = vst.msk [vmem:[%s281 + $0xe8] sm:$0xff] %vm1205, %v3609
          %3678 = vst.msk [vmem:[%s281 + $0xf0] sm:$0xff] %vm1205, %v3610
          %3679 = vst.msk [vmem:[%s281 + $0xf8] sm:$0xff] %vm1205, %v3611
        $region48: #{tpu_custom_call.1} parent=39 // pred_fallthru
          _
        %s3680 = sand.u32 %s169, 1
        %s3681 = scalar_lea.sflag [#allocation5], %s3680
        %s3682 = sand.u32 %s169, 1
        %s3683 = smul.addr %s3682, 256
        %s3684 = scalar_lea.vmem [#allocation4], %s3683
        // Predicated region
        $region49: #{tpu_custom_call.1} parent=39 // pred_check
          %p3685 = pneg %p179
        $region50: #{tpu_custom_call.1} parent=39 // pred_check_branch
          %3687 = sbr.rel (%p3685) target = $region52
        $region51: #{tpu_custom_call.1} parent=39 // pred_region
          %s3689 = ssub.s32 4096, 4096
          %3690 = vsyncadd %s3681, %s3689
          %s3691 = smul.addr %s23, 32
          %s3692 = smul.addr %s3691, 128
          %s3693 = scalar_lea.hbm %s5, %s3692
          %s3694 = sshll.u32 %s3684, 4
          %s3695 = int_to_ptr.vmem [resolvable:$true] %s3694
          %3700 = dma.vmem_to_hbm [thread:$0]  %s3695, 4096, %s3693, %s3681, 128, 128, 8
        $region52: #{tpu_custom_call.1} parent=39 // pred_fallthru
          _
      $region40: #{tpu_custom_call.1} parent=5 // pred_fallthru
        _
      %p3701 = scmp.le.s32.totalorder 2, %s14
      // Predicated region
      $region53: #{tpu_custom_call.1} parent=5 // pred_check
        %p3702 = pneg %p3701
      $region54: #{tpu_custom_call.1} parent=5 // pred_check_branch
        %3704 = sbr.rel (%p3702) target = $region56
      $region55: #{tpu_custom_call.1} parent=5 // pred_region
        %s3705 = ssub.s32 %s14, 2
        // Predicated region
        $region57: #{tpu_custom_call.1} parent=55 // pred_check
          %p3706 = pneg %p185
        $region58: #{tpu_custom_call.1} parent=55 // pred_check_branch
          %3708 = sbr.rel (%p3706) target = $region60
        $region59: #{tpu_custom_call.1} parent=55 // pred_region
          %s3709 = sand.u32 %s170, 1
          %s3710 = scalar_lea.sflag [#allocation5], %s3709
          %s3711 = sand.u32 %s170, 1
          %s3712 = smul.addr %s3711, 256
          %s3713 = scalar_lea.vmem [#allocation4], %s3712
          %3714 = dma.done %s3710, 4096
        $region60: #{tpu_custom_call.1} parent=55 // pred_fallthru
          _
      $region56: #{tpu_custom_call.1} parent=5 // pred_fallthru
        _
    $region6: #{tpu_custom_call.1} parent=1 // loop_footer
      %s18 = sadd.s32 1, %s14
    $region7: #{tpu_custom_call.1} parent=1 // loop_footer_branch
      %13 = sbr.rel target = $region3
    $region8: #{tpu_custom_call.1} parent=1 // loop_exit
      _
    %3715 = vsyncpa [#allocation5], 1
    %s3716 = scalar_lea.sflag [#allocation5], 1
    %3717 = vsyncpa %s3716, 1

</llo_original>
